<compile_context>
chip_gen: v6e
topology: v6e:2x2x1
jax: 0.10.0
libtpu: 0.0.40
codegen_flags: <defaults>
</compile_context>

<pallas_src>
import math

import numpy as np
import jax
import jax.numpy as jnp
from jax.experimental import pallas as pl
from jax.experimental.pallas import tpu as pltpu

# ----------------------------- fixed deterministic config -----------------------------
N_HEADS = 8
DIM = 64
DPH = DIM // N_HEADS               # dim_per_head = 8
GROUP_SIZE = 1
LAYER = 1
TLAYERS = (1,)
PERMUTE_TYPE = (2,)                # roll-by-1 permutation grouping
PERMUTE_BACK = 0
ABSOLUTE_FLAG = 1
RANDOM_FLAG = 0
CROSS_TYPE = 0
KEY2_FLAG = 1
HEAD_CHOICE = 7
ATTN_DROPOUT_P = 0.0               # eval / p=0 -> dropout is identity

assert (GROUP_SIZE == 1 and CROSS_TYPE == 0 and KEY2_FLAG == 1 and RANDOM_FLAG == 0
        and PERMUTE_BACK == 0 and HEAD_CHOICE != 0 and LAYER in TLAYERS
        and len(PERMUTE_TYPE) == 1)
# TODO(synk): config branches not exercised by this fixed config (cross_type==1
# aggregations, key2_flag==0 extra key2 Linear, random_flag==1 per-head shuffles,
# permute_back==1, head_choice==0, group_size>1, multiple permute groups),
# training-mode dropout, and the enclosing TransformerBlock residual+LayerNorm+FFN /
# n_layers stacking are not implemented by this attention kernel.

np.random.seed(HEAD_CHOICE)
HEADS_TRIPLET = np.random.choice(np.arange(0, N_HEADS), GROUP_SIZE * 3, replace=False)
HEADS_TRIPLET.sort()
HEADS_NORMAL = np.setdiff1d(np.arange(0, N_HEADS), HEADS_TRIPLET)
N_NORMAL = len(HEADS_NORMAL)       # 5
DG = DPH * GROUP_SIZE              # 8 triplet groups of 3 components each
N_SEG = N_NORMAL + DG              # 13 packed "heads" (5 normal + 8 triplet groups)
SCALE = 1.0 / math.sqrt(DPH)
NEG_FILL = -1e30                   # finite mask fill (torch uses -inf -> NaN risk)
_HI = jax.lax.Precision.HIGHEST


# --------------------- permutation helper (host-side, static) ---------------------
def _perm_indices(L, pt, seed):
    """Replicates `permutation(..., rt=1)` from the PyTorch reference."""
    idx = np.arange(0, L)
    if pt == 1:
        np.random.seed(seed)
        np.random.shuffle(idx)
    elif pt == 2:
        idx = np.roll(idx, 1)
    elif pt == 3:
        idx = np.roll(idx, 2)
    elif pt == 4:
        idx = idx[::-1].copy()
    elif pt == 5:
        idx1 = idx[::2]
        idx2 = idx[1::2]
        idx = np.array(list([*zip(idx2, idx1)])).flatten()
        if len(idx2) != len(idx1):
            ii = idx2[-1] if len(idx2) > len(idx1) else idx1[-1]
            idx = np.append(idx, ii)
    else:
        np.random.seed(seed)
        np.random.shuffle(idx)
    return idx


# ----------------------------- fused Pallas kernel -----------------------------
def _fused_mhsa_kernel(x_ref, mask_ref, kinv_ref, wqkv_ref, bqkv_ref,
                       wo_ref, bo_ref, spread_ref, onesblk_ref,
                       o_ref, sc_ref, vblk_ref):
    """Entire (triplet-augmented) MHSA forward for ONE batch element, in VMEM/vregs."""
    f32 = jnp.float32
    L = x_ref.shape[0]
    t0 = N_NORMAL * DPH                          # first triplet column (40)

    x = x_ref[...]
    # Fused self-attention QKV projection; weights stacked on the leading axis so the
    # per-projection slice is a free leading-axis index.  1/sqrt(dph) folded into Q.
    q = jnp.dot(x, wqkv_ref[0], preferred_element_type=f32) + bqkv_ref[0]
    k = jnp.dot(x, wqkv_ref[1], preferred_element_type=f32) + bqkv_ref[1]
    v = jnp.dot(x, wqkv_ref[2], preferred_element_type=f32) + bqkv_ref[2]

    # additive key-padding bias, computed once (normal heads only, per torch reference)
    bias = jnp.where(mask_ref[...] > 0, 0.0, NEG_FILL).astype(f32)        # (1, L)

    # -------- normal heads: raw scores written into the lane-packed scratch --------
    for n in range(N_NORMAL):
        cols = slice(n * DPH, (n + 1) * DPH)
        s = jax.lax.dot_general(q[:, cols], k[:, cols], (((1,), (1,)), ((), ())),
                                preferred_element_type=f32)               # (L, L)
        sc_ref[:, n * L:(n + 1) * L] = s + bias

    # -------- triplet groups --------
    kt = k[:, t0:t0 + 3 * DG]                    # (L, 24) component-major: col = 8c + g
    # permutation_inverse folded onto the key side: kt_inv[m] = kt[inv[m]] via one tiny
    # MXU matmul with a constant (L, L) 0/1 permutation matrix (no row slices/concat).
    kt_inv = jnp.dot(kinv_ref[...], kt, preferred_element_type=f32)
    k0, k1, k2 = kt[:, :DG], kt[:, DG:2 * DG], kt[:, 2 * DG:3 * DG]
    i0, i1, i2 = kt_inv[:, :DG], kt_inv[:, DG:2 * DG], kt_inv[:, 2 * DG:3 * DG]
    # full-width 3-component cross product: kc[m] = kt[inv[m]] x kt[m]
    kc0 = i1 * k2 - i2 * k1
    kc1 = i2 * k0 - i0 * k2
    kc2 = i0 * k1 - i1 * k0
    # component-major -> group-major relayout via constant 0/1 spread matmuls (MXU idle)
    kc = (jnp.dot(kc0, spread_ref[0], preferred_element_type=f32)
          + jnp.dot(kc1, spread_ref[1], preferred_element_type=f32)
          + jnp.dot(kc2, spread_ref[2], preferred_element_type=f32))      # (L, 24) col=3g+c

    for g in range(DG):
        qg = q[:, t0 + 3 * g:t0 + 3 * g + 3]                              # (L, 3)
        kg = kc[:, 3 * g:3 * g + 3]                                       # (L, 3)
        s = jax.lax.dot_general(qg, kg, (((1,), (1,)), ((), ())),
                                preferred_element_type=f32)               # (L, L)
        sc_ref[:, (N_NORMAL + g) * L:(N_NORMAL + g + 1) * L] = jnp.abs(s)  # absolute_flag

    # -------- packed softmax over all 13 heads at once --------
    scores = sc_ref[...]                                                  # (L, 13*L)
    # per-row max is constant across each head's key segment -> softmax-invariant shift
    e = jnp.exp(scores - jnp.max(scores, axis=-1, keepdims=True))
    denom = jnp.dot(e, onesblk_ref[...], preferred_element_type=f32)      # segment sums (MXU)
    p = e * pl.reciprocal(denom, approx=True)

    # -------- block-structured V: one MXU push replaces 13 PV matmuls + lane concat --------
    vblk_ref[...] = jnp.zeros_like(vblk_ref)
    for n in range(N_NORMAL):
        vblk_ref[n * L:(n + 1) * L, n * DPH:(n + 1) * DPH] = v[:, n * DPH:(n + 1) * DPH]
    for g in range(DG):
        r = (N_NORMAL + g) * L
        c = t0 + 3 * g
        vblk_ref[r:r + L, c:c + 3] = v[:, c:c + 3]
    context = jnp.dot(p, vblk_ref[...], preferred_element_type=f32)       # (L, 64) lane-dense

    out = jnp.dot(context, wo_ref[...], preferred_element_type=f32) + bo_ref[...]
    o_ref[...] = out.astype(o_ref.dtype)


# ----------------------------- host-side weight folding -----------------------------
def prepare_pallas_params(params):
    """Done once on the host: fold all static permutations / scaling into the weights.

    * Q/K/V weights stacked into one (3, DIM, DIM) tensor whose output columns are
      head-permuted to [HEADS_NORMAL..., triplet block...]; Q/V use the group-major
      triplet layout (col = 3g+c), K uses component-major (col = 8c+g) so the cross
      product runs full-width.  1/sqrt(dim_per_head) is folded into the Q weights.
    * The triplet-head re-insertion (chain of torch.cat) becomes a static permutation
      of out_lin's input rows.
    """
    norm_cols = np.concatenate([np.arange(DPH * h, DPH * (h + 1)) for h in HEADS_NORMAL])
    # flat triplet order == torch "regroup" group-major layout (position 3g+c)
    trip_gm = np.concatenate([np.arange(DPH * h, DPH * (h + 1)) for h in HEADS_TRIPLET])
    # component-major layout (position 8c+g) used for K
    trip_cm = trip_gm.reshape(DG, 3).T.reshape(-1)

    q_perm = np.concatenate([norm_cols, trip_gm])
    k_perm = np.concatenate([norm_cols, trip_cm])
    v_perm = np.concatenate([norm_cols, trip_gm])

    w_q = params["q_w"][:, q_perm] * SCALE            # fold 1/sqrt(dph) into Q
    b_q = params["q_b"][q_perm] * SCALE
    w_k = params["k_w"][:, k_perm]
    b_k = params["k_b"][k_perm]
    w_v = params["v_w"][:, v_perm]
    b_v = params["v_b"][v_perm]

    w_qkv = jnp.stack([w_q, w_k, w_v], axis=0)                      # (3, DIM, DIM)
    b_qkv = jnp.stack([b_q, b_k, b_v], axis=0).reshape(3, 1, DIM)   # (3, 1, DIM)

    # kernel context layout: [normal heads | triplet groups, col = 3g+c]; mapping back
    # to the torch context column order is a static row permutation of out_lin.
    ctx_perm = np.zeros(DIM, dtype=np.int32)
    for n, h in enumerate(HEADS_NORMAL):
        ctx_perm[DPH * n:DPH * (n + 1)] = np.arange(DPH * h, DPH * (h + 1))
    base = N_NORMAL * DPH
    for g in range(DG):
        for c in range(3 * GROUP_SIZE):
            ctx_perm[base + 3 * g + c] = DPH * int(HEADS_TRIPLET[c]) + g
    w_out = params["o_w"][ctx_perm, :]                # (DIM, DIM), row-permuted
    b_out = params["o_b"].reshape(1, DIM)

    # 0/1 spread matrices: (kc_c @ spread[c])[m, 3g+c] = kc_c[m, g]
    spread = np.zeros((3, DG, 3 * DG), np.float32)
    for c in range(3):
        for g in range(DG):
            spread[c, g, 3 * g + c] = 1.0

    return {"w_qkv": w_qkv, "b_qkv": b_qkv, "w_out": w_out, "b_out": b_out,
            "spread": jnp.asarray(spread)}


# ----------------------------- Pallas forward wrapper -----------------------------
def mhsa_forward_pallas(pparams, x, mask):
    """One fused pallas_call (self-attention: query is key is value is x).

    grid=(B,) marked parallel: 2 steps -> both TensorCores on v7x; output (B, L, DIM).
    """
    B, L, dim = x.shape
    assert dim == DIM

    # boolean/int mask (robust to non-exact float masks), shaped (B, 1, L)
    mask_i = (mask != 0).astype(jnp.int32).reshape(B, 1, L)

    # ---- L-dependent host constants (trace-time, static) ----
    idx = _perm_indices(L, PERMUTE_TYPE[0], LAYER)
    inv = np.zeros(L, dtype=np.int64)
    inv[idx] = np.arange(L)
    kinv_mat = np.zeros((L, L), np.float32)
    kinv_mat[np.arange(L), inv] = 1.0                 # (kinv_mat @ kt)[m] = kt[inv[m]]

    ones_blk = np.kron(np.eye(N_SEG, dtype=np.float32),
                       np.ones((L, L), np.float32))   # (13L, 13L) segmented row-sum

    return pl.pallas_call(
        _fused_mhsa_kernel,
        out_shape=jax.ShapeDtypeStruct((B, L, DIM), x.dtype),
        grid_spec=pltpu.PrefetchScalarGridSpec(
            num_scalar_prefetch=0,
            grid=(B,),
            in_specs=[
                pl.BlockSpec((None, L, DIM), lambda b: (b, 0, 0)),        # x
                pl.BlockSpec((None, 1, L), lambda b: (b, 0, 0)),          # int mask
                pl.BlockSpec((L, L), lambda b: (0, 0)),                   # inverse-perm matrix
                pl.BlockSpec((3, DIM, DIM), lambda b: (0, 0, 0)),         # stacked QKV weights
                pl.BlockSpec((3, 1, DIM), lambda b: (0, 0, 0)),           # stacked QKV biases
                pl.BlockSpec((DIM, DIM), lambda b: (0, 0)),               # out weight (permuted)
                pl.BlockSpec((1, DIM), lambda b: (0, 0)),                 # out bias
                pl.BlockSpec((3, DG, 3 * DG), lambda b: (0, 0, 0)),       # comp->group spread
                pl.BlockSpec((N_SEG * L, N_SEG * L), lambda b: (0, 0)),   # block-diag ones
            ],
            out_specs=pl.BlockSpec((None, L, DIM), lambda b: (b, 0, 0)),
            scratch_shapes=[
                pltpu.VMEM((L, N_SEG * L), jnp.float32),      # packed scores / probabilities
                pltpu.VMEM((N_SEG * L, DIM), jnp.float32),    # block-structured V
            ]),
        compiler_params=pltpu.CompilerParams(
            dimension_semantics=("parallel",)),
    )(x, mask_i, jnp.asarray(kinv_mat),
      pparams["w_qkv"], pparams["b_qkv"], pparams["w_out"], pparams["b_out"],
      pparams["spread"], jnp.asarray(ones_blk))


# ----------------------------- pure-JAX torch-faithful reference -----------------------------
def mhsa_reference(params, query, key, value, mask):
    """Faithful to the PyTorch module (masked_fill uses a large finite negative instead
    of -inf; this only differs for fully-masked query rows where torch would NaN)."""
    B, L, dim = query.shape
    dph = dim // N_HEADS

    def lin(x, w, b):
        return jnp.dot(x, w, precision=_HI) + b

    def shape(x):
        return x.reshape(B, L, N_HEADS, dph).transpose(0, 2, 1, 3)

    q = shape(lin(query, params["q_w"], params["q_b"]))
    k = shape(lin(key, params["k_w"], params["k_b"]))
    v = shape(lin(value, params["v_w"], params["v_b"]))

    q_t, k_t, v_t = q[:, HEADS_TRIPLET], k[:, HEADS_TRIPLET], v[:, HEADS_TRIPLET]
    q_n, k_n, v_n = q[:, HEADS_NORMAL], k[:, HEADS_NORMAL], v[:, HEADS_NORMAL]

    dg = dph * GROUP_SIZE

    def regroup(x):                # (B, 3g, L, dph) -> (B, dg, L, 3)
        return x.transpose(0, 2, 1, 3).reshape(B, L, dg, 3).transpose(0, 2, 1, 3)

    qt, kt, vt = regroup(q_t), regroup(k_t), regroup(v_t)

    # key2_flag==1 -> key_triplet2 = clone; random_flag==0 -> permutation grouping.
    permutes = len(PERMUTE_TYPE)
    hs = dg // permutes
    kt2_parts = []
    for p in range(permutes):
        p_end = (p + 1) * hs if p < permutes - 1 else dg
        idx = _perm_indices(L, PERMUTE_TYPE[p], LAYER)
        kt2_parts.append(kt[:, p * hs:p_end, idx, :])
    kt2 = jnp.concatenate(kt2_parts, axis=1)
    k_cross = jnp.cross(kt, kt2)                                      # (B, dg, L, 3)

    attn_t = jnp.einsum('bglc,bgmc->bglm', qt, k_cross, precision=_HI)
    # permute_back == 0 -> permutation_inverse along the key axis
    at_parts = []
    for p in range(permutes):
        p_end = (p + 1) * hs if p < permutes - 1 else dg
        idx = _perm_indices(L, PERMUTE_TYPE[p], LAYER)
        inv = np.zeros(L, dtype=np.int64)
        inv[idx] = np.arange(L)
        at_parts.append(attn_t[:, p * hs:p_end, :, :][..., inv])
    attn_t = jnp.concatenate(at_parts, axis=1)
    if ABSOLUTE_FLAG == 1:
        attn_t = jnp.abs(attn_t)

    scale = 1.0 / math.sqrt(dph)
    scores = jnp.einsum('bhld,bhmd->bhlm', q_n * scale, k_n, precision=_HI)
    keep = (mask != 0).reshape(B, 1, 1, L)
    scores = jnp.where(keep, scores, NEG_FILL)
    weights = jax.nn.softmax(scores, axis=-1)                         # dropout p=0

    attn_t = jax.nn.softmax(attn_t * scale, axis=-1)
    ctx_t = jnp.einsum('bglm,bgmc->bglc', attn_t, vt, precision=_HI)  # (B, dg, L, 3)
    ctx_t = ctx_t.transpose(0, 2, 1, 3).reshape(B, L, dg * 3)

    ctx_n = jnp.einsum('bhlm,bhmd->bhld', weights, v_n, precision=_HI)
    ctx_n = ctx_n.transpose(0, 2, 1, 3)                               # (B, L, Hn, dph)

    tri = jnp.swapaxes(ctx_t.reshape(B, L, -1, 3 * GROUP_SIZE), -1, -2)
    context = ctx_n
    for ih, h in enumerate(HEADS_TRIPLET):
        context = jnp.concatenate([context[:, :, :h, :],
                                   tri[:, :, ih:ih + 1, :],
                                   context[:, :, h:, :]], axis=-2)
    context = context.reshape(B, L, dim)
    return lin(context, params["o_w"], params["o_b"])


# ----------------------------- init & main -----------------------------
def _init_params(key):
    ks = jax.random.split(key, 8)

    def w(kk):
        return jax.random.normal(kk, (DIM, DIM), jnp.float32) * 0.05   # (in, out)

    def b(kk):
        return jax.random.normal(kk, (DIM,), jnp.float32) * 0.02

    return {"q_w": w(ks[0]), "q_b": b(ks[1]),
            "k_w": w(ks[2]), "k_b": b(ks[3]),
            "v_w": w(ks[4]), "v_b": b(ks[5]),
            "o_w": w(ks[6]), "o_b": b(ks[7])}


if __name__ == "__main__":
    root = jax.random.PRNGKey(0)
    kx, kp = jax.random.split(root, 2)
    B, L = 2, 8
    x = jax.random.normal(kx, (B, L, DIM), jnp.float32)
    mask = jnp.ones((B, L), jnp.float32).at[1, L - 2:].set(0.0)   # (bs, seq); 0 = padded

    params = _init_params(kp)
    pparams = prepare_pallas_params(params)          # host-side, once

    fwd = jax.jit(mhsa_forward_pallas)
    out = jax.block_until_ready(fwd(pparams, x, mask))

    ref = jax.block_until_ready(mhsa_reference(params, x, x, x, mask))
    assert out.shape == (B, L, DIM)
    max_err = float(jnp.max(jnp.abs(out - ref)))
    assert max_err < 2e-3, f"mismatch vs pure-JAX reference: {max_err}"
    print("KERNEL_OK")
</pallas_src>

<mosaic_0001>
module attributes {stable_mosaic.version = 11 : i64} {
  func.func @_fused_mhsa_kernel(%arg0: i32, %arg1: memref<1x8x64xf32, #tpu.memory_space<vmem>>, %arg2: memref<1x1x8xi32, #tpu.memory_space<vmem>>, %arg3: memref<8x8xf32, #tpu.memory_space<vmem>>, %arg4: memref<3x64x64xf32, #tpu.memory_space<vmem>>, %arg5: memref<3x1x64xf32, #tpu.memory_space<vmem>>, %arg6: memref<64x64xf32, #tpu.memory_space<vmem>>, %arg7: memref<1x64xf32, #tpu.memory_space<vmem>>, %arg8: memref<3x8x24xf32, #tpu.memory_space<vmem>>, %arg9: memref<104x104xf32, #tpu.memory_space<vmem>>, %arg10: memref<1x8x64xf32, #tpu.memory_space<vmem>>, %arg11: memref<8x104xf32, #tpu.memory_space<vmem>>, %arg12: memref<104x64xf32, #tpu.memory_space<vmem>>) attributes {dimension_semantics = [#tpu.dimension_semantics<parallel>], iteration_bounds = array<i64: 2>, scalar_prefetch = 0 : i64, scratch_operands = 2 : i64, tpu.core_type = #tpu.core_type<tc>, window_params = [{transform_indices = @transform_0, window_bounds = array<i64: 1, 8, 64>}, {transform_indices = @transform_1, window_bounds = array<i64: 1, 1, 8>}, {pipeline_mode = #tpu.pipeline_mode<synchronous>, transform_indices = @transform_2, window_bounds = array<i64: 8, 8>}, {pipeline_mode = #tpu.pipeline_mode<synchronous>, transform_indices = @transform_3, window_bounds = array<i64: 3, 64, 64>}, {pipeline_mode = #tpu.pipeline_mode<synchronous>, transform_indices = @transform_4, window_bounds = array<i64: 3, 1, 64>}, {pipeline_mode = #tpu.pipeline_mode<synchronous>, transform_indices = @transform_5, window_bounds = array<i64: 64, 64>}, {pipeline_mode = #tpu.pipeline_mode<synchronous>, transform_indices = @transform_6, window_bounds = array<i64: 1, 64>}, {pipeline_mode = #tpu.pipeline_mode<synchronous>, transform_indices = @transform_7, window_bounds = array<i64: 3, 8, 24>}, {pipeline_mode = #tpu.pipeline_mode<synchronous>, transform_indices = @transform_8, window_bounds = array<i64: 104, 104>}, {transform_indices = @transform_9, window_bounds = array<i64: 1, 8, 64>}]} {
    %c0 = arith.constant 0 : index
    %c0_0 = arith.constant 0 : index
    %c0_1 = arith.constant 0 : index
    %0 = vector.load %arg1[%c0, %c0_0, %c0_1] : memref<1x8x64xf32, #tpu.memory_space<vmem>>, vector<1x8x64xf32>
    %1 = vector.shape_cast %0 : vector<1x8x64xf32> to vector<8x64xf32>
    %c0_2 = arith.constant 0 : index
    %c0_3 = arith.constant 0 : index
    %c0_4 = arith.constant 0 : index
    %2 = vector.load %arg4[%c0_2, %c0_3, %c0_4] : memref<3x64x64xf32, #tpu.memory_space<vmem>>, vector<1x64x64xf32>
    %3 = vector.shape_cast %2 : vector<1x64x64xf32> to vector<64x64xf32>
    %cst = arith.constant dense<0.000000e+00> : vector<8x64xf32>
    %4 = tpu.matmul %1, %3, %cst {dimension_numbers = #tpu.dot_dimension_numbers<[1], [0], [0], [1], [0, 0, 1, 1], [], []>} : vector<8x64xf32>, vector<64x64xf32>, vector<8x64xf32> -> vector<8x64xf32>
    %c0_5 = arith.constant 0 : index
    %c0_6 = arith.constant 0 : index
    %c0_7 = arith.constant 0 : index
    %5 = vector.load %arg5[%c0_5, %c0_6, %c0_7] : memref<3x1x64xf32, #tpu.memory_space<vmem>>, vector<1x1x64xf32>
    %6 = vector.shape_cast %5 : vector<1x1x64xf32> to vector<1x64xf32>
    %7 = vector.broadcast %6 : vector<1x64xf32> to vector<8x64xf32>
    %8 = arith.addf %4, %7 : vector<8x64xf32>
    %c1 = arith.constant 1 : index
    %c0_8 = arith.constant 0 : index
    %c0_9 = arith.constant 0 : index
    %9 = vector.load %arg4[%c1, %c0_8, %c0_9] : memref<3x64x64xf32, #tpu.memory_space<vmem>>, vector<1x64x64xf32>
    %10 = vector.shape_cast %9 : vector<1x64x64xf32> to vector<64x64xf32>
    %cst_10 = arith.constant dense<0.000000e+00> : vector<8x64xf32>
    %11 = tpu.matmul %1, %10, %cst_10 {dimension_numbers = #tpu.dot_dimension_numbers<[1], [0], [0], [1], [0, 0, 1, 1], [], []>} : vector<8x64xf32>, vector<64x64xf32>, vector<8x64xf32> -> vector<8x64xf32>
    %c1_11 = arith.constant 1 : index
    %c0_12 = arith.constant 0 : index
    %c0_13 = arith.constant 0 : index
    %12 = vector.load %arg5[%c1_11, %c0_12, %c0_13] : memref<3x1x64xf32, #tpu.memory_space<vmem>>, vector<1x1x64xf32>
    %13 = vector.shape_cast %12 : vector<1x1x64xf32> to vector<1x64xf32>
    %14 = vector.broadcast %13 : vector<1x64xf32> to vector<8x64xf32>
    %15 = arith.addf %11, %14 : vector<8x64xf32>
    %c2 = arith.constant 2 : index
    %c0_14 = arith.constant 0 : index
    %c0_15 = arith.constant 0 : index
    %16 = vector.load %arg4[%c2, %c0_14, %c0_15] : memref<3x64x64xf32, #tpu.memory_space<vmem>>, vector<1x64x64xf32>
    %17 = vector.shape_cast %16 : vector<1x64x64xf32> to vector<64x64xf32>
    %cst_16 = arith.constant dense<0.000000e+00> : vector<8x64xf32>
    %18 = tpu.matmul %1, %17, %cst_16 {dimension_numbers = #tpu.dot_dimension_numbers<[1], [0], [0], [1], [0, 0, 1, 1], [], []>} : vector<8x64xf32>, vector<64x64xf32>, vector<8x64xf32> -> vector<8x64xf32>
    %c2_17 = arith.constant 2 : index
    %c0_18 = arith.constant 0 : index
    %c0_19 = arith.constant 0 : index
    %19 = vector.load %arg5[%c2_17, %c0_18, %c0_19] : memref<3x1x64xf32, #tpu.memory_space<vmem>>, vector<1x1x64xf32>
    %20 = vector.shape_cast %19 : vector<1x1x64xf32> to vector<1x64xf32>
    %21 = vector.broadcast %20 : vector<1x64xf32> to vector<8x64xf32>
    %22 = arith.addf %18, %21 : vector<8x64xf32>
    %c0_20 = arith.constant 0 : index
    %c0_21 = arith.constant 0 : index
    %c0_22 = arith.constant 0 : index
    %23 = vector.load %arg2[%c0_20, %c0_21, %c0_22] : memref<1x1x8xi32, #tpu.memory_space<vmem>>, vector<1x1x8xi32>
    %24 = vector.shape_cast %23 : vector<1x1x8xi32> to vector<1x8xi32>
    %c0_i32 = arith.constant 0 : i32
    %25 = vector.broadcast %c0_i32 : i32 to vector<1x8xi32>
    %26 = arith.cmpi sgt, %24, %25 : vector<1x8xi32>
    %cst_23 = arith.constant 0.000000e+00 : f32
    %cst_24 = arith.constant -1.000000e+30 : f32
    %27 = vector.broadcast %cst_23 : f32 to vector<1x8xf32>
    %28 = vector.broadcast %cst_24 : f32 to vector<1x8xf32>
    %29 = arith.select %26, %27, %28 : vector<1x8xi1>, vector<1x8xf32>
    %30 = vector.extract_strided_slice %8 {offsets = [0, 0], sizes = [8, 8], strides = [1, 1]} : vector<8x64xf32> to vector<8x8xf32>
    %31 = vector.extract_strided_slice %15 {offsets = [0, 0], sizes = [8, 8], strides = [1, 1]} : vector<8x64xf32> to vector<8x8xf32>
    %cst_25 = arith.constant dense<0.000000e+00> : vector<8x8xf32>
    %32 = tpu.matmul %30, %31, %cst_25 {dimension_numbers = #tpu.dot_dimension_numbers<[1], [1], [0], [0], [0, 0, 1, 0], [], []>} : vector<8x8xf32>, vector<8x8xf32>, vector<8x8xf32> -> vector<8x8xf32>
    %33 = vector.broadcast %29 : vector<1x8xf32> to vector<8x8xf32>
    %34 = arith.addf %32, %33 : vector<8x8xf32>
    %c0_26 = arith.constant 0 : index
    %c0_27 = arith.constant 0 : index
    %35 = vector.load %arg11[%c0_26, %c0_27] : memref<8x104xf32, #tpu.memory_space<vmem>>, vector<8x8xf32>
    tpu.vector_store %arg11[%c0_26, %c0_27], %34 {strides = array<i32>} : memref<8x104xf32, #tpu.memory_space<vmem>>, vector<8x8xf32>,
    %36 = vector.extract_strided_slice %8 {offsets = [0, 8], sizes = [8, 8], strides = [1, 1]} : vector<8x64xf32> to vector<8x8xf32>
    %37 = vector.extract_strided_slice %15 {offsets = [0, 8], sizes = [8, 8], strides = [1, 1]} : vector<8x64xf32> to vector<8x8xf32>
    %cst_28 = arith.constant dense<0.000000e+00> : vector<8x8xf32>
    %38 = tpu.matmul %36, %37, %cst_28 {dimension_numbers = #tpu.dot_dimension_numbers<[1], [1], [0], [0], [0, 0, 1, 0], [], []>} : vector<8x8xf32>, vector<8x8xf32>, vector<8x8xf32> -> vector<8x8xf32>
    %39 = vector.broadcast %29 : vector<1x8xf32> to vector<8x8xf32>
    %40 = arith.addf %38, %39 : vector<8x8xf32>
    %c0_29 = arith.constant 0 : index
    %c8 = arith.constant 8 : index
    %41 = vector.load %arg11[%c0_29, %c8] : memref<8x104xf32, #tpu.memory_space<vmem>>, vector<8x8xf32>
    tpu.vector_store %arg11[%c0_29, %c8], %40 {strides = array<i32>} : memref<8x104xf32, #tpu.memory_space<vmem>>, vector<8x8xf32>,
    %42 = vector.extract_strided_slice %8 {offsets = [0, 16], sizes = [8, 8], strides = [1, 1]} : vector<8x64xf32> to vector<8x8xf32>
    %43 = vector.extract_strided_slice %15 {offsets = [0, 16], sizes = [8, 8], strides = [1, 1]} : vector<8x64xf32> to vector<8x8xf32>
    %cst_30 = arith.constant dense<0.000000e+00> : vector<8x8xf32>
    %44 = tpu.matmul %42, %43, %cst_30 {dimension_numbers = #tpu.dot_dimension_numbers<[1], [1], [0], [0], [0, 0, 1, 0], [], []>} : vector<8x8xf32>, vector<8x8xf32>, vector<8x8xf32> -> vector<8x8xf32>
    %45 = vector.broadcast %29 : vector<1x8xf32> to vector<8x8xf32>
    %46 = arith.addf %44, %45 : vector<8x8xf32>
    %c0_31 = arith.constant 0 : index
    %c16 = arith.constant 16 : index
    %47 = vector.load %arg11[%c0_31, %c16] : memref<8x104xf32, #tpu.memory_space<vmem>>, vector<8x8xf32>
    tpu.vector_store %arg11[%c0_31, %c16], %46 {strides = array<i32>} : memref<8x104xf32, #tpu.memory_space<vmem>>, vector<8x8xf32>,
    %48 = vector.extract_strided_slice %8 {offsets = [0, 24], sizes = [8, 8], strides = [1, 1]} : vector<8x64xf32> to vector<8x8xf32>
    %49 = vector.extract_strided_slice %15 {offsets = [0, 24], sizes = [8, 8], strides = [1, 1]} : vector<8x64xf32> to vector<8x8xf32>
    %cst_32 = arith.constant dense<0.000000e+00> : vector<8x8xf32>
    %50 = tpu.matmul %48, %49, %cst_32 {dimension_numbers = #tpu.dot_dimension_numbers<[1], [1], [0], [0], [0, 0, 1, 0], [], []>} : vector<8x8xf32>, vector<8x8xf32>, vector<8x8xf32> -> vector<8x8xf32>
    %51 = vector.broadcast %29 : vector<1x8xf32> to vector<8x8xf32>
    %52 = arith.addf %50, %51 : vector<8x8xf32>
    %c0_33 = arith.constant 0 : index
    %c24 = arith.constant 24 : index
    %53 = vector.load %arg11[%c0_33, %c24] : memref<8x104xf32, #tpu.memory_space<vmem>>, vector<8x8xf32>
    tpu.vector_store %arg11[%c0_33, %c24], %52 {strides = array<i32>} : memref<8x104xf32, #tpu.memory_space<vmem>>, vector<8x8xf32>,
    %54 = vector.extract_strided_slice %8 {offsets = [0, 32], sizes = [8, 8], strides = [1, 1]} : vector<8x64xf32> to vector<8x8xf32>
    %55 = vector.extract_strided_slice %15 {offsets = [0, 32], sizes = [8, 8], strides = [1, 1]} : vector<8x64xf32> to vector<8x8xf32>
    %cst_34 = arith.constant dense<0.000000e+00> : vector<8x8xf32>
    %56 = tpu.matmul %54, %55, %cst_34 {dimension_numbers = #tpu.dot_dimension_numbers<[1], [1], [0], [0], [0, 0, 1, 0], [], []>} : vector<8x8xf32>, vector<8x8xf32>, vector<8x8xf32> -> vector<8x8xf32>
    %57 = vector.broadcast %29 : vector<1x8xf32> to vector<8x8xf32>
    %58 = arith.addf %56, %57 : vector<8x8xf32>
    %c0_35 = arith.constant 0 : index
    %c32 = arith.constant 32 : index
    %59 = vector.load %arg11[%c0_35, %c32] : memref<8x104xf32, #tpu.memory_space<vmem>>, vector<8x8xf32>
    tpu.vector_store %arg11[%c0_35, %c32], %58 {strides = array<i32>} : memref<8x104xf32, #tpu.memory_space<vmem>>, vector<8x8xf32>,
    %60 = vector.extract_strided_slice %15 {offsets = [0, 40], sizes = [8, 24], strides = [1, 1]} : vector<8x64xf32> to vector<8x24xf32>
    %c0_36 = arith.constant 0 : index
    %c0_37 = arith.constant 0 : index
    %61 = vector.load %arg3[%c0_36, %c0_37] : memref<8x8xf32, #tpu.memory_space<vmem>>, vector<8x8xf32>
    %cst_38 = arith.constant dense<0.000000e+00> : vector<8x24xf32>
    %62 = tpu.matmul %61, %60, %cst_38 {dimension_numbers = #tpu.dot_dimension_numbers<[1], [0], [0], [1], [0, 0, 1, 1], [], []>} : vector<8x8xf32>, vector<8x24xf32>, vector<8x24xf32> -> vector<8x24xf32>
    %63 = vector.extract_strided_slice %60 {offsets = [0, 0], sizes = [8, 8], strides = [1, 1]} : vector<8x24xf32> to vector<8x8xf32>
    %64 = vector.extract_strided_slice %60 {offsets = [0, 8], sizes = [8, 8], strides = [1, 1]} : vector<8x24xf32> to vector<8x8xf32>
    %65 = vector.extract_strided_slice %60 {offsets = [0, 16], sizes = [8, 8], strides = [1, 1]} : vector<8x24xf32> to vector<8x8xf32>
    %66 = vector.extract_strided_slice %62 {offsets = [0, 0], sizes = [8, 8], strides = [1, 1]} : vector<8x24xf32> to vector<8x8xf32>
    %67 = vector.extract_strided_slice %62 {offsets = [0, 8], sizes = [8, 8], strides = [1, 1]} : vector<8x24xf32> to vector<8x8xf32>
    %68 = vector.extract_strided_slice %62 {offsets = [0, 16], sizes = [8, 8], strides = [1, 1]} : vector<8x24xf32> to vector<8x8xf32>
    %69 = arith.mulf %67, %65 : vector<8x8xf32>
    %70 = arith.mulf %68, %64 : vector<8x8xf32>
    %71 = arith.subf %69, %70 : vector<8x8xf32>
    %72 = arith.mulf %68, %63 : vector<8x8xf32>
    %73 = arith.mulf %66, %65 : vector<8x8xf32>
    %74 = arith.subf %72, %73 : vector<8x8xf32>
    %75 = arith.mulf %66, %64 : vector<8x8xf32>
    %76 = arith.mulf %67, %63 : vector<8x8xf32>
    %77 = arith.subf %75, %76 : vector<8x8xf32>
    %c0_39 = arith.constant 0 : index
    %c0_40 = arith.constant 0 : index
    %c0_41 = arith.constant 0 : index
    %78 = vector.load %arg8[%c0_39, %c0_40, %c0_41] : memref<3x8x24xf32, #tpu.memory_space<vmem>>, vector<1x8x24xf32>
    %79 = vector.shape_cast %78 : vector<1x8x24xf32> to vector<8x24xf32>
    %cst_42 = arith.constant dense<0.000000e+00> : vector<8x24xf32>
    %80 = tpu.matmul %71, %79, %cst_42 {dimension_numbers = #tpu.dot_dimension_numbers<[1], [0], [0], [1], [0, 0, 1, 1], [], []>} : vector<8x8xf32>, vector<8x24xf32>, vector<8x24xf32> -> vector<8x24xf32>
    %c1_43 = arith.constant 1 : index
    %c0_44 = arith.constant 0 : index
    %c0_45 = arith.constant 0 : index
    %81 = vector.load %arg8[%c1_43, %c0_44, %c0_45] : memref<3x8x24xf32, #tpu.memory_space<vmem>>, vector<1x8x24xf32>
    %82 = vector.shape_cast %81 : vector<1x8x24xf32> to vector<8x24xf32>
    %cst_46 = arith.constant dense<0.000000e+00> : vector<8x24xf32>
    %83 = tpu.matmul %74, %82, %cst_46 {dimension_numbers = #tpu.dot_dimension_numbers<[1], [0], [0], [1], [0, 0, 1, 1], [], []>} : vector<8x8xf32>, vector<8x24xf32>, vector<8x24xf32> -> vector<8x24xf32>
    %84 = arith.addf %80, %83 : vector<8x24xf32>
    %c2_47 = arith.constant 2 : index
    %c0_48 = arith.constant 0 : index
    %c0_49 = arith.constant 0 : index
    %85 = vector.load %arg8[%c2_47, %c0_48, %c0_49] : memref<3x8x24xf32, #tpu.memory_space<vmem>>, vector<1x8x24xf32>
    %86 = vector.shape_cast %85 : vector<1x8x24xf32> to vector<8x24xf32>
    %cst_50 = arith.constant dense<0.000000e+00> : vector<8x24xf32>
    %87 = tpu.matmul %77, %86, %cst_50 {dimension_numbers = #tpu.dot_dimension_numbers<[1], [0], [0], [1], [0, 0, 1, 1], [], []>} : vector<8x8xf32>, vector<8x24xf32>, vector<8x24xf32> -> vector<8x24xf32>
    %88 = arith.addf %84, %87 : vector<8x24xf32>
    %89 = vector.extract_strided_slice %8 {offsets = [0, 40], sizes = [8, 3], strides = [1, 1]} : vector<8x64xf32> to vector<8x3xf32>
    %90 = vector.extract_strided_slice %88 {offsets = [0, 0], sizes = [8, 3], strides = [1, 1]} : vector<8x24xf32> to vector<8x3xf32>
    %cst_51 = arith.constant dense<0.000000e+00> : vector<8x8xf32>
    %91 = tpu.matmul %89, %90, %cst_51 {dimension_numbers = #tpu.dot_dimension_numbers<[1], [1], [0], [0], [0, 0, 1, 0], [], []>} : vector<8x3xf32>, vector<8x3xf32>, vector<8x8xf32> -> vector<8x8xf32>
    %92 = math.absf %91 : vector<8x8xf32>
    %c0_52 = arith.constant 0 : index
    %c40 = arith.constant 40 : index
    %93 = vector.load %arg11[%c0_52, %c40] : memref<8x104xf32, #tpu.memory_space<vmem>>, vector<8x8xf32>
    tpu.vector_store %arg11[%c0_52, %c40], %92 {strides = array<i32>} : memref<8x104xf32, #tpu.memory_space<vmem>>, vector<8x8xf32>,
    %94 = vector.extract_strided_slice %8 {offsets = [0, 43], sizes = [8, 3], strides = [1, 1]} : vector<8x64xf32> to vector<8x3xf32>
    %95 = vector.extract_strided_slice %88 {offsets = [0, 3], sizes = [8, 3], strides = [1, 1]} : vector<8x24xf32> to vector<8x3xf32>
    %cst_53 = arith.constant dense<0.000000e+00> : vector<8x8xf32>
    %96 = tpu.matmul %94, %95, %cst_53 {dimension_numbers = #tpu.dot_dimension_numbers<[1], [1], [0], [0], [0, 0, 1, 0], [], []>} : vector<8x3xf32>, vector<8x3xf32>, vector<8x8xf32> -> vector<8x8xf32>
    %97 = math.absf %96 : vector<8x8xf32>
    %c0_54 = arith.constant 0 : index
    %c48 = arith.constant 48 : index
    %98 = vector.load %arg11[%c0_54, %c48] : memref<8x104xf32, #tpu.memory_space<vmem>>, vector<8x8xf32>
    tpu.vector_store %arg11[%c0_54, %c48], %97 {strides = array<i32>} : memref<8x104xf32, #tpu.memory_space<vmem>>, vector<8x8xf32>,
    %99 = vector.extract_strided_slice %8 {offsets = [0, 46], sizes = [8, 3], strides = [1, 1]} : vector<8x64xf32> to vector<8x3xf32>
    %100 = vector.extract_strided_slice %88 {offsets = [0, 6], sizes = [8, 3], strides = [1, 1]} : vector<8x24xf32> to vector<8x3xf32>
    %cst_55 = arith.constant dense<0.000000e+00> : vector<8x8xf32>
    %101 = tpu.matmul %99, %100, %cst_55 {dimension_numbers = #tpu.dot_dimension_numbers<[1], [1], [0], [0], [0, 0, 1, 0], [], []>} : vector<8x3xf32>, vector<8x3xf32>, vector<8x8xf32> -> vector<8x8xf32>
    %102 = math.absf %101 : vector<8x8xf32>
    %c0_56 = arith.constant 0 : index
    %c56 = arith.constant 56 : index
    %103 = vector.load %arg11[%c0_56, %c56] : memref<8x104xf32, #tpu.memory_space<vmem>>, vector<8x8xf32>
    tpu.vector_store %arg11[%c0_56, %c56], %102 {strides = array<i32>} : memref<8x104xf32, #tpu.memory_space<vmem>>, vector<8x8xf32>,
    %104 = vector.extract_strided_slice %8 {offsets = [0, 49], sizes = [8, 3], strides = [1, 1]} : vector<8x64xf32> to vector<8x3xf32>
    %105 = vector.extract_strided_slice %88 {offsets = [0, 9], sizes = [8, 3], strides = [1, 1]} : vector<8x24xf32> to vector<8x3xf32>
    %cst_57 = arith.constant dense<0.000000e+00> : vector<8x8xf32>
    %106 = tpu.matmul %104, %105, %cst_57 {dimension_numbers = #tpu.dot_dimension_numbers<[1], [1], [0], [0], [0, 0, 1, 0], [], []>} : vector<8x3xf32>, vector<8x3xf32>, vector<8x8xf32> -> vector<8x8xf32>
    %107 = math.absf %106 : vector<8x8xf32>
    %c0_58 = arith.constant 0 : index
    %c64 = arith.constant 64 : index
    %108 = vector.load %arg11[%c0_58, %c64] : memref<8x104xf32, #tpu.memory_space<vmem>>, vector<8x8xf32>
    tpu.vector_store %arg11[%c0_58, %c64], %107 {strides = array<i32>} : memref<8x104xf32, #tpu.memory_space<vmem>>, vector<8x8xf32>,
    %109 = vector.extract_strided_slice %8 {offsets = [0, 52], sizes = [8, 3], strides = [1, 1]} : vector<8x64xf32> to vector<8x3xf32>
    %110 = vector.extract_strided_slice %88 {offsets = [0, 12], sizes = [8, 3], strides = [1, 1]} : vector<8x24xf32> to vector<8x3xf32>
    %cst_59 = arith.constant dense<0.000000e+00> : vector<8x8xf32>
    %111 = tpu.matmul %109, %110, %cst_59 {dimension_numbers = #tpu.dot_dimension_numbers<[1], [1], [0], [0], [0, 0, 1, 0], [], []>} : vector<8x3xf32>, vector<8x3xf32>, vector<8x8xf32> -> vector<8x8xf32>
    %112 = math.absf %111 : vector<8x8xf32>
    %c0_60 = arith.constant 0 : index
    %c72 = arith.constant 72 : index
    %113 = vector.load %arg11[%c0_60, %c72] : memref<8x104xf32, #tpu.memory_space<vmem>>, vector<8x8xf32>
    tpu.vector_store %arg11[%c0_60, %c72], %112 {strides = array<i32>} : memref<8x104xf32, #tpu.memory_space<vmem>>, vector<8x8xf32>,
    %114 = vector.extract_strided_slice %8 {offsets = [0, 55], sizes = [8, 3], strides = [1, 1]} : vector<8x64xf32> to vector<8x3xf32>
    %115 = vector.extract_strided_slice %88 {offsets = [0, 15], sizes = [8, 3], strides = [1, 1]} : vector<8x24xf32> to vector<8x3xf32>
    %cst_61 = arith.constant dense<0.000000e+00> : vector<8x8xf32>
    %116 = tpu.matmul %114, %115, %cst_61 {dimension_numbers = #tpu.dot_dimension_numbers<[1], [1], [0], [0], [0, 0, 1, 0], [], []>} : vector<8x3xf32>, vector<8x3xf32>, vector<8x8xf32> -> vector<8x8xf32>
    %117 = math.absf %116 : vector<8x8xf32>
    %c0_62 = arith.constant 0 : index
    %c80 = arith.constant 80 : index
    %118 = vector.load %arg11[%c0_62, %c80] : memref<8x104xf32, #tpu.memory_space<vmem>>, vector<8x8xf32>
    tpu.vector_store %arg11[%c0_62, %c80], %117 {strides = array<i32>} : memref<8x104xf32, #tpu.memory_space<vmem>>, vector<8x8xf32>,
    %119 = vector.extract_strided_slice %8 {offsets = [0, 58], sizes = [8, 3], strides = [1, 1]} : vector<8x64xf32> to vector<8x3xf32>
    %120 = vector.extract_strided_slice %88 {offsets = [0, 18], sizes = [8, 3], strides = [1, 1]} : vector<8x24xf32> to vector<8x3xf32>
    %cst_63 = arith.constant dense<0.000000e+00> : vector<8x8xf32>
    %121 = tpu.matmul %119, %120, %cst_63 {dimension_numbers = #tpu.dot_dimension_numbers<[1], [1], [0], [0], [0, 0, 1, 0], [], []>} : vector<8x3xf32>, vector<8x3xf32>, vector<8x8xf32> -> vector<8x8xf32>
    %122 = math.absf %121 : vector<8x8xf32>
    %c0_64 = arith.constant 0 : index
    %c88 = arith.constant 88 : index
    %123 = vector.load %arg11[%c0_64, %c88] : memref<8x104xf32, #tpu.memory_space<vmem>>, vector<8x8xf32>
    tpu.vector_store %arg11[%c0_64, %c88], %122 {strides = array<i32>} : memref<8x104xf32, #tpu.memory_space<vmem>>, vector<8x8xf32>,
    %124 = vector.extract_strided_slice %8 {offsets = [0, 61], sizes = [8, 3], strides = [1, 1]} : vector<8x64xf32> to vector<8x3xf32>
    %125 = vector.extract_strided_slice %88 {offsets = [0, 21], sizes = [8, 3], strides = [1, 1]} : vector<8x24xf32> to vector<8x3xf32>
    %cst_65 = arith.constant dense<0.000000e+00> : vector<8x8xf32>
    %126 = tpu.matmul %124, %125, %cst_65 {dimension_numbers = #tpu.dot_dimension_numbers<[1], [1], [0], [0], [0, 0, 1, 0], [], []>} : vector<8x3xf32>, vector<8x3xf32>, vector<8x8xf32> -> vector<8x8xf32>
    %127 = math.absf %126 : vector<8x8xf32>
    %c0_66 = arith.constant 0 : index
    %c96 = arith.constant 96 : index
    %128 = vector.load %arg11[%c0_66, %c96] : memref<8x104xf32, #tpu.memory_space<vmem>>, vector<8x8xf32>
    tpu.vector_store %arg11[%c0_66, %c96], %127 {strides = array<i32>} : memref<8x104xf32, #tpu.memory_space<vmem>>, vector<8x8xf32>,
    %c0_67 = arith.constant 0 : index
    %c0_68 = arith.constant 0 : index
    %129 = vector.load %arg11[%c0_67, %c0_68] : memref<8x104xf32, #tpu.memory_space<vmem>>, vector<8x104xf32>
    %cst_69 = arith.constant dense<0xFF800000> : vector<8xf32>
    %130 = vector.multi_reduction <maximumf>, %129, %cst_69 [1] : vector<8x104xf32> to vector<8xf32>
    %131 = vector.shape_cast %130 : vector<8xf32> to vector<8x1xf32>
    %132 = vector.broadcast %131 : vector<8x1xf32> to vector<8x104xf32>
    %133 = arith.subf %129, %132 : vector<8x104xf32>
    %134 = math.exp %133 : vector<8x104xf32>
    %c0_70 = arith.constant 0 : index
    %c0_71 = arith.constant 0 : index
    %135 = vector.load %arg9[%c0_70, %c0_71] : memref<104x104xf32, #tpu.memory_space<vmem>>, vector<104x104xf32>
    %cst_72 = arith.constant dense<0.000000e+00> : vector<8x104xf32>
    %136 = tpu.matmul %134, %135, %cst_72 {dimension_numbers = #tpu.dot_dimension_numbers<[1], [0], [0], [1], [0, 0, 1, 1], [], []>} : vector<8x104xf32>, vector<104x104xf32>, vector<8x104xf32> -> vector<8x104xf32>
    %137 = tpu.reciprocal %136 {approx = true} : vector<8x104xf32> -> vector<8x104xf32>
    %138 = arith.mulf %134, %137 : vector<8x104xf32>
    %cst_73 = arith.constant 0.000000e+00 : f32
    %139 = vector.broadcast %cst_73 : f32 to vector<104x64xf32>
    %c0_74 = arith.constant 0 : index
    %c0_75 = arith.constant 0 : index
    %140 = vector.load %arg12[%c0_74, %c0_75] : memref<104x64xf32, #tpu.memory_space<vmem>>, vector<104x64xf32>
    tpu.vector_store %arg12[%c0_74, %c0_75], %139 {strides = array<i32>} : memref<104x64xf32, #tpu.memory_space<vmem>>, vector<104x64xf32>,
    %141 = vector.extract_strided_slice %22 {offsets = [0, 0], sizes = [8, 8], strides = [1, 1]} : vector<8x64xf32> to vector<8x8xf32>
    %c0_76 = arith.constant 0 : index
    %c0_77 = arith.constant 0 : index
    %142 = vector.load %arg12[%c0_76, %c0_77] : memref<104x64xf32, #tpu.memory_space<vmem>>, vector<8x8xf32>
    tpu.vector_store %arg12[%c0_76, %c0_77], %141 {strides = array<i32>} : memref<104x64xf32, #tpu.memory_space<vmem>>, vector<8x8xf32>,
    %143 = vector.extract_strided_slice %22 {offsets = [0, 8], sizes = [8, 8], strides = [1, 1]} : vector<8x64xf32> to vector<8x8xf32>
    %c8_78 = arith.constant 8 : index
    %c8_79 = arith.constant 8 : index
    %144 = vector.load %arg12[%c8_78, %c8_79] : memref<104x64xf32, #tpu.memory_space<vmem>>, vector<8x8xf32>
    tpu.vector_store %arg12[%c8_78, %c8_79], %143 {strides = array<i32>} : memref<104x64xf32, #tpu.memory_space<vmem>>, vector<8x8xf32>,
    %145 = vector.extract_strided_slice %22 {offsets = [0, 16], sizes = [8, 8], strides = [1, 1]} : vector<8x64xf32> to vector<8x8xf32>
    %c16_80 = arith.constant 16 : index
    %c16_81 = arith.constant 16 : index
    %146 = vector.load %arg12[%c16_80, %c16_81] : memref<104x64xf32, #tpu.memory_space<vmem>>, vector<8x8xf32>
    tpu.vector_store %arg12[%c16_80, %c16_81], %145 {strides = array<i32>} : memref<104x64xf32, #tpu.memory_space<vmem>>, vector<8x8xf32>,
    %147 = vector.extract_strided_slice %22 {offsets = [0, 24], sizes = [8, 8], strides = [1, 1]} : vector<8x64xf32> to vector<8x8xf32>
    %c24_82 = arith.constant 24 : index
    %c24_83 = arith.constant 24 : index
    %148 = vector.load %arg12[%c24_82, %c24_83] : memref<104x64xf32, #tpu.memory_space<vmem>>, vector<8x8xf32>
    tpu.vector_store %arg12[%c24_82, %c24_83], %147 {strides = array<i32>} : memref<104x64xf32, #tpu.memory_space<vmem>>, vector<8x8xf32>,
    %149 = vector.extract_strided_slice %22 {offsets = [0, 32], sizes = [8, 8], strides = [1, 1]} : vector<8x64xf32> to vector<8x8xf32>
    %c32_84 = arith.constant 32 : index
    %c32_85 = arith.constant 32 : index
    %150 = vector.load %arg12[%c32_84, %c32_85] : memref<104x64xf32, #tpu.memory_space<vmem>>, vector<8x8xf32>
    tpu.vector_store %arg12[%c32_84, %c32_85], %149 {strides = array<i32>} : memref<104x64xf32, #tpu.memory_space<vmem>>, vector<8x8xf32>,
    %151 = vector.extract_strided_slice %22 {offsets = [0, 40], sizes = [8, 3], strides = [1, 1]} : vector<8x64xf32> to vector<8x3xf32>
    %c40_86 = arith.constant 40 : index
    %c40_87 = arith.constant 40 : index
    %152 = vector.load %arg12[%c40_86, %c40_87] : memref<104x64xf32, #tpu.memory_space<vmem>>, vector<8x3xf32>
    tpu.vector_store %arg12[%c40_86, %c40_87], %151 {strides = array<i32>} : memref<104x64xf32, #tpu.memory_space<vmem>>, vector<8x3xf32>,
    %153 = vector.extract_strided_slice %22 {offsets = [0, 43], sizes = [8, 3], strides = [1, 1]} : vector<8x64xf32> to vector<8x3xf32>
    %c48_88 = arith.constant 48 : index
    %c43 = arith.constant 43 : index
    %154 = vector.load %arg12[%c48_88, %c43] : memref<104x64xf32, #tpu.memory_space<vmem>>, vector<8x3xf32>
    tpu.vector_store %arg12[%c48_88, %c43], %153 {strides = array<i32>} : memref<104x64xf32, #tpu.memory_space<vmem>>, vector<8x3xf32>,
    %155 = vector.extract_strided_slice %22 {offsets = [0, 46], sizes = [8, 3], strides = [1, 1]} : vector<8x64xf32> to vector<8x3xf32>
    %c56_89 = arith.constant 56 : index
    %c46 = arith.constant 46 : index
    %156 = vector.load %arg12[%c56_89, %c46] : memref<104x64xf32, #tpu.memory_space<vmem>>, vector<8x3xf32>
    tpu.vector_store %arg12[%c56_89, %c46], %155 {strides = array<i32>} : memref<104x64xf32, #tpu.memory_space<vmem>>, vector<8x3xf32>,
    %157 = vector.extract_strided_slice %22 {offsets = [0, 49], sizes = [8, 3], strides = [1, 1]} : vector<8x64xf32> to vector<8x3xf32>
    %c64_90 = arith.constant 64 : index
    %c49 = arith.constant 49 : index
    %158 = vector.load %arg12[%c64_90, %c49] : memref<104x64xf32, #tpu.memory_space<vmem>>, vector<8x3xf32>
    tpu.vector_store %arg12[%c64_90, %c49], %157 {strides = array<i32>} : memref<104x64xf32, #tpu.memory_space<vmem>>, vector<8x3xf32>,
    %159 = vector.extract_strided_slice %22 {offsets = [0, 52], sizes = [8, 3], strides = [1, 1]} : vector<8x64xf32> to vector<8x3xf32>
    %c72_91 = arith.constant 72 : index
    %c52 = arith.constant 52 : index
    %160 = vector.load %arg12[%c72_91, %c52] : memref<104x64xf32, #tpu.memory_space<vmem>>, vector<8x3xf32>
    tpu.vector_store %arg12[%c72_91, %c52], %159 {strides = array<i32>} : memref<104x64xf32, #tpu.memory_space<vmem>>, vector<8x3xf32>,
    %161 = vector.extract_strided_slice %22 {offsets = [0, 55], sizes = [8, 3], strides = [1, 1]} : vector<8x64xf32> to vector<8x3xf32>
    %c80_92 = arith.constant 80 : index
    %c55 = arith.constant 55 : index
    %162 = vector.load %arg12[%c80_92, %c55] : memref<104x64xf32, #tpu.memory_space<vmem>>, vector<8x3xf32>
    tpu.vector_store %arg12[%c80_92, %c55], %161 {strides = array<i32>} : memref<104x64xf32, #tpu.memory_space<vmem>>, vector<8x3xf32>,
    %163 = vector.extract_strided_slice %22 {offsets = [0, 58], sizes = [8, 3], strides = [1, 1]} : vector<8x64xf32> to vector<8x3xf32>
    %c88_93 = arith.constant 88 : index
    %c58 = arith.constant 58 : index
    %164 = vector.load %arg12[%c88_93, %c58] : memref<104x64xf32, #tpu.memory_space<vmem>>, vector<8x3xf32>
    tpu.vector_store %arg12[%c88_93, %c58], %163 {strides = array<i32>} : memref<104x64xf32, #tpu.memory_space<vmem>>, vector<8x3xf32>,
    %165 = vector.extract_strided_slice %22 {offsets = [0, 61], sizes = [8, 3], strides = [1, 1]} : vector<8x64xf32> to vector<8x3xf32>
    %c96_94 = arith.constant 96 : index
    %c61 = arith.constant 61 : index
    %166 = vector.load %arg12[%c96_94, %c61] : memref<104x64xf32, #tpu.memory_space<vmem>>, vector<8x3xf32>
    tpu.vector_store %arg12[%c96_94, %c61], %165 {strides = array<i32>} : memref<104x64xf32, #tpu.memory_space<vmem>>, vector<8x3xf32>,
    %c0_95 = arith.constant 0 : index
    %c0_96 = arith.constant 0 : index
    %167 = vector.load %arg12[%c0_95, %c0_96] : memref<104x64xf32, #tpu.memory_space<vmem>>, vector<104x64xf32>
    %cst_97 = arith.constant dense<0.000000e+00> : vector<8x64xf32>
    %168 = tpu.matmul %138, %167, %cst_97 {dimension_numbers = #tpu.dot_dimension_numbers<[1], [0], [0], [1], [0, 0, 1, 1], [], []>} : vector<8x104xf32>, vector<104x64xf32>, vector<8x64xf32> -> vector<8x64xf32>
    %c0_98 = arith.constant 0 : index
    %c0_99 = arith.constant 0 : index
    %169 = vector.load %arg6[%c0_98, %c0_99] : memref<64x64xf32, #tpu.memory_space<vmem>>, vector<64x64xf32>
    %cst_100 = arith.constant dense<0.000000e+00> : vector<8x64xf32>
    %170 = tpu.matmul %168, %169, %cst_100 {dimension_numbers = #tpu.dot_dimension_numbers<[1], [0], [0], [1], [0, 0, 1, 1], [], []>} : vector<8x64xf32>, vector<64x64xf32>, vector<8x64xf32> -> vector<8x64xf32>
    %c0_101 = arith.constant 0 : index
    %c0_102 = arith.constant 0 : index
    %171 = vector.load %arg7[%c0_101, %c0_102] : memref<1x64xf32, #tpu.memory_space<vmem>>, vector<1x64xf32>
    %172 = vector.broadcast %171 : vector<1x64xf32> to vector<8x64xf32>
    %173 = arith.addf %170, %172 : vector<8x64xf32>
    %c0_103 = arith.constant 0 : index
    %c0_104 = arith.constant 0 : index
    %c0_105 = arith.constant 0 : index
    %174 = vector.load %arg10[%c0_103, %c0_104, %c0_105] : memref<1x8x64xf32, #tpu.memory_space<vmem>>, vector<1x8x64xf32>
    %175 = vector.shape_cast %174 : vector<1x8x64xf32> to vector<8x64xf32>
    %176 = vector.shape_cast %173 : vector<8x64xf32> to vector<1x8x64xf32>
    tpu.vector_store %arg10[%c0_103, %c0_104, %c0_105], %176 {strides = array<i32>} : memref<1x8x64xf32, #tpu.memory_space<vmem>>, vector<1x8x64xf32>,
    return
  }
  func.func @transform_0(%arg0: i32) -> (i32, i32, i32) {
    %c0_i32 = arith.constant 0 : i32
    %c0_i32_0 = arith.constant 0 : i32
    %c0_i32_1 = arith.constant 0 : i32
    return %arg0, %c0_i32, %c0_i32_0 : i32, i32, i32
  }
  func.func @transform_1(%arg0: i32) -> (i32, i32, i32) {
    %c0_i32 = arith.constant 0 : i32
    %c0_i32_0 = arith.constant 0 : i32
    %c0_i32_1 = arith.constant 0 : i32
    return %arg0, %c0_i32, %c0_i32_0 : i32, i32, i32
  }
  func.func @transform_2(%arg0: i32) -> (i32, i32) {
    %c0_i32 = arith.constant 0 : i32
    %c0_i32_0 = arith.constant 0 : i32
    %c0_i32_1 = arith.constant 0 : i32
    return %c0_i32, %c0_i32_0 : i32, i32
  }
  func.func @transform_3(%arg0: i32) -> (i32, i32, i32) {
    %c0_i32 = arith.constant 0 : i32
    %c0_i32_0 = arith.constant 0 : i32
    %c0_i32_1 = arith.constant 0 : i32
    %c0_i32_2 = arith.constant 0 : i32
    return %c0_i32, %c0_i32_0, %c0_i32_1 : i32, i32, i32
  }
  func.func @transform_4(%arg0: i32) -> (i32, i32, i32) {
    %c0_i32 = arith.constant 0 : i32
    %c0_i32_0 = arith.constant 0 : i32
    %c0_i32_1 = arith.constant 0 : i32
    %c0_i32_2 = arith.constant 0 : i32
    return %c0_i32, %c0_i32_0, %c0_i32_1 : i32, i32, i32
  }
  func.func @transform_5(%arg0: i32) -> (i32, i32) {
    %c0_i32 = arith.constant 0 : i32
    %c0_i32_0 = arith.constant 0 : i32
    %c0_i32_1 = arith.constant 0 : i32
    return %c0_i32, %c0_i32_0 : i32, i32
  }
  func.func @transform_6(%arg0: i32) -> (i32, i32) {
    %c0_i32 = arith.constant 0 : i32
    %c0_i32_0 = arith.constant 0 : i32
    %c0_i32_1 = arith.constant 0 : i32
    return %c0_i32, %c0_i32_0 : i32, i32
  }
  func.func @transform_7(%arg0: i32) -> (i32, i32, i32) {
    %c0_i32 = arith.constant 0 : i32
    %c0_i32_0 = arith.constant 0 : i32
    %c0_i32_1 = arith.constant 0 : i32
    %c0_i32_2 = arith.constant 0 : i32
    return %c0_i32, %c0_i32_0, %c0_i32_1 : i32, i32, i32
  }
  func.func @transform_8(%arg0: i32) -> (i32, i32) {
    %c0_i32 = arith.constant 0 : i32
    %c0_i32_0 = arith.constant 0 : i32
    %c0_i32_1 = arith.constant 0 : i32
    return %c0_i32, %c0_i32_0 : i32, i32
  }
  func.func @transform_9(%arg0: i32) -> (i32, i32, i32) {
    %c0_i32 = arith.constant 0 : i32
    %c0_i32_0 = arith.constant 0 : i32
    %c0_i32_1 = arith.constant 0 : i32
    return %arg0, %c0_i32, %c0_i32_0 : i32, i32, i32
  }
}

</mosaic_0001>

<llo_original>
// kernel: mhsa_forward_pallas.1
$region0: #{mhsa_forward_pallas.1}
  #allocation0 [shape = 'u32[]', space=smem, size = 0x4, offset = 0x4, fixed_abs, tag = 'smem constant byte address 0x4 - core index']
  #allocation1 [shape = 'u32[144,128]{1,0:T(1,128)}', space=vmem, size = 0x12000, scoped, tag = 'internal scratch']
  #allocation2 [shape = 'f32[8,104]{1,0:T(8,128)}', space=vmem, size = 0x1000, scoped, tag = 'scratch operand']
  #allocation3 [shape = 'f32[104,64]{1,0:T(8,128)}', space=vmem, size = 0xd000, scoped, tag = 'scratch operand']
  %s0 = inlined_call_operand.hbm [shape: f32[2,8,64], index: 0, kind: input, shape index: {}]
  %s1 = inlined_call_operand.vmem [shape: s32[2,1,8], index: 1, kind: input, shape index: {}]
  %s2 = inlined_call_operand.vmem [shape: f32[8,8], index: 2, kind: input, shape index: {}]
  %s3 = inlined_call_operand.hbm [shape: f32[3,64,64], index: 3, kind: input, shape index: {}]
  %s4 = inlined_call_operand.vmem [shape: f32[3,1,64], index: 4, kind: input, shape index: {}]
  %s5 = inlined_call_operand.hbm [shape: f32[64,64], index: 5, kind: input, shape index: {}]
  %s6 = inlined_call_operand.vmem [shape: f32[1,64], index: 6, kind: input, shape index: {}]
  %s7 = inlined_call_operand.hbm [shape: f32[3,8,24], index: 7, kind: input, shape index: {}]
  %s8 = inlined_call_operand.hbm [shape: f32[104,104], index: 8, kind: input, shape index: {}]
  %s9 = inlined_call_operand.hbm [shape: f32[2,8,64], index: 9, kind: output, shape index: {}]
  %s10 = sld [smem:[#allocation0]]
  $region89: #{mhsa_forward_pallas.1} parent=0
    _
  %s12 = ssub.s32 1, %s10
  %s13 = scalar_select 0, %s12, %s10
  $region1: #{mhsa_forward_pallas.1} parent=0
    #allocation4 [shape = 'u8[8192]{0}', space=vmem, size = 0x2000, scoped, tag = 'input window, operand 0']
    #allocation5 [shape = 's32[2]{0}', space=sflag, size = 0x8, scoped, tag = 'scoped memory for mhsa_forward_pallas.1']
    #allocation6 [shape = 's32[2]{0}', space=sflag, size = 0x8, scoped, tag = 'scoped memory for mhsa_forward_pallas.1']
    #allocation7 [shape = 'u8[98304]{0}', space=vmem, size = 0x18000, scoped, tag = 'input window, operand 3, single buffered']
    #allocation8 [shape = 's32[1]{0}', space=sflag, size = 0x4, scoped, tag = 'scoped memory for mhsa_forward_pallas.1']
    #allocation9 [shape = 'u8[32768]{0}', space=vmem, size = 0x8000, scoped, tag = 'input window, operand 5, single buffered']
    #allocation10 [shape = 'u8[12288]{0}', space=vmem, size = 0x3000, scoped, tag = 'input window, operand 7, single buffered']
    #allocation11 [shape = 's32[1]{0}', space=sflag, size = 0x4, scoped, tag = 'scoped memory for mhsa_forward_pallas.1']
    #allocation12 [shape = 'u8[53248]{0}', space=vmem, size = 0xd000, scoped, tag = 'input window, operand 8, single buffered']
    #allocation13 [shape = 'u8[8192]{0}', space=vmem, size = 0x2000, scoped, tag = 'output window, operand 0']
    %14 = vsyncpa [#allocation5], 0
    %s15 = scalar_lea.sflag [#allocation5], 1
    %16 = vsyncpa %s15, 0
    %17 = vsyncpa [#allocation8], 0
    %18 = vsyncpa [#allocation11], 0
    %19 = vsyncpa [#allocation6], 0
    %s20 = scalar_lea.sflag [#allocation6], 1
    %21 = vsyncpa %s20, 0
    loop: start=0, step=1, limit=4
    $region2: #{mhsa_forward_pallas.1} parent=1 // loop_pre_header
      _
    $region3: #{mhsa_forward_pallas.1} parent=1 // loop_header
      %s23 = sphi 0, %s27
      %p24 = scmp.ge.s32.totalorder %s23, 4
      %s33 = sphi 0, %s35
      %s36 = sphi 0, %s33
      %s37 = sphi 0, %s36
      %s53 = sphi 0, %s37
      %s59 = sphi 0, %s61
      %s62 = sphi 0, %s59
      %s63 = sphi 0, %s62
      %s79 = sphi 0, %s63
      %s83 = sphi 0, %s83
      %s85 = sphi 0, %s83
      %s86 = sphi 0, %s85
      %s100 = sphi 0, %s86
      %s104 = sphi 0, %s104
      %s106 = sphi 0, %s104
      %s107 = sphi 0, %s106
      %s121 = sphi 0, %s107
      %s125 = sphi 0, %s125
      %s127 = sphi 0, %s125
      %s128 = sphi 0, %s127
      %s142 = sphi 0, %s128
      %s146 = sphi 0, %s146
      %s148 = sphi 0, %s146
      %s149 = sphi 0, %s148
      %s163 = sphi 0, %s149
      %s167 = sphi 0, %s167
      %s169 = sphi 0, %s167
      %s170 = sphi 0, %s169
      %s184 = sphi 0, %s170
      %s188 = sphi 0, %s188
      %s190 = sphi 0, %s188
      %s191 = sphi 0, %s190
      %s205 = sphi 0, %s191
      %s209 = sphi 0, %s209
      %s211 = sphi 0, %s209
      %s212 = sphi 0, %s211
      %s226 = sphi 0, %s212
      %s232 = sphi 0, %s234
      %s235 = sphi 0, %s232
      %s236 = sphi 0, %s235
      %s252 = sphi 0, %s236
    $region4: #{mhsa_forward_pallas.1} parent=1 // loop_header_branch
      %26 = sbr.rel (%p24) target = $region8
    $region5: #{mhsa_forward_pallas.1} parent=1 // loop_body
      %s28 = ssub.s32 %s23, 1
      %s29 = ssub.s32 %s23, 2
      %s30 = sadd.s32 %s23, 1
      %s31 = ssub.s32 %s23, %s30
      %p32 = scmp.eq.s32.totalorder %s31, 0
      %s34 = sadd.s32 %s33, 1
      %s35 = scalar_select %p32, %s33, %s34
      %p38 = pneg %p32
      %p39 = scmp.eq.s32.totalorder %s23, 1
      %p40 = por %p38, %p39
      %p41 = scmp.ne.s32.totalorder %s33, %s36
      %p42 = scmp.eq.s32.totalorder %s23, 0
      %p43 = por %p41, %p42
      %p44 = scmp.ne.s32.totalorder %s33, %s36
      %p45 = scmp.eq.s32.totalorder %s28, 1
      %p46 = por %p44, %p45
      %p47 = scmp.ne.s32.totalorder %s36, %s37
      %p48 = scmp.eq.s32.totalorder %s28, 0
      %p49 = por %p47, %p48
      %p50 = scmp.ne.s32.totalorder %s36, %s37
      %p51 = scmp.eq.s32.totalorder %s29, 1
      %p52 = por %p50, %p51
      %p54 = scmp.ne.s32.totalorder %s37, %s53
      %p55 = scmp.eq.s32.totalorder %s29, 0
      %p56 = por %p54, %p55
      %s57 = ssub.s32 %s23, %s30
      %p58 = scmp.eq.s32.totalorder %s57, 0
      %s60 = sadd.s32 %s59, 1
      %s61 = scalar_select %p58, %s59, %s60
      %p64 = pneg %p58
      %p65 = scmp.eq.s32.totalorder %s23, 1
      %p66 = por %p64, %p65
      %p67 = scmp.ne.s32.totalorder %s59, %s62
      %p68 = scmp.eq.s32.totalorder %s23, 0
      %p69 = por %p67, %p68
      %p70 = scmp.ne.s32.totalorder %s59, %s62
      %p71 = scmp.eq.s32.totalorder %s28, 1
      %p72 = por %p70, %p71
      %p73 = scmp.ne.s32.totalorder %s62, %s63
      %p74 = scmp.eq.s32.totalorder %s28, 0
      %p75 = por %p73, %p74
      %p76 = scmp.ne.s32.totalorder %s62, %s63
      %p77 = scmp.eq.s32.totalorder %s29, 1
      %p78 = por %p76, %p77
      %p80 = scmp.ne.s32.totalorder %s63, %s79
      %p81 = scmp.eq.s32.totalorder %s29, 0
      %p82 = por %p80, %p81
      %s84 = sadd.s32 %s83, 1
      %p87 = scmp.eq.s32.totalorder %s23, 1
      %p88 = scmp.ne.s32.totalorder %s83, %s85
      %p89 = scmp.eq.s32.totalorder %s23, 0
      %p90 = por %p88, %p89
      %p91 = scmp.ne.s32.totalorder %s83, %s85
      %p92 = scmp.eq.s32.totalorder %s28, 1
      %p93 = por %p91, %p92
      %p94 = scmp.ne.s32.totalorder %s85, %s86
      %p95 = scmp.eq.s32.totalorder %s28, 0
      %p96 = por %p94, %p95
      %p97 = scmp.ne.s32.totalorder %s85, %s86
      %p98 = scmp.eq.s32.totalorder %s29, 1
      %p99 = por %p97, %p98
      %p101 = scmp.ne.s32.totalorder %s86, %s100
      %p102 = scmp.eq.s32.totalorder %s29, 0
      %p103 = por %p101, %p102
      %s105 = sadd.s32 %s104, 1
      %p108 = scmp.eq.s32.totalorder %s23, 1
      %p109 = scmp.ne.s32.totalorder %s104, %s106
      %p110 = scmp.eq.s32.totalorder %s23, 0
      %p111 = por %p109, %p110
      %p112 = scmp.ne.s32.totalorder %s104, %s106
      %p113 = scmp.eq.s32.totalorder %s28, 1
      %p114 = por %p112, %p113
      %p115 = scmp.ne.s32.totalorder %s106, %s107
      %p116 = scmp.eq.s32.totalorder %s28, 0
      %p117 = por %p115, %p116
      %p118 = scmp.ne.s32.totalorder %s106, %s107
      %p119 = scmp.eq.s32.totalorder %s29, 1
      %p120 = por %p118, %p119
      %p122 = scmp.ne.s32.totalorder %s107, %s121
      %p123 = scmp.eq.s32.totalorder %s29, 0
      %p124 = por %p122, %p123
      %s126 = sadd.s32 %s125, 1
      %p129 = scmp.eq.s32.totalorder %s23, 1
      %p130 = scmp.ne.s32.totalorder %s125, %s127
      %p131 = scmp.eq.s32.totalorder %s23, 0
      %p132 = por %p130, %p131
      %p133 = scmp.ne.s32.totalorder %s125, %s127
      %p134 = scmp.eq.s32.totalorder %s28, 1
      %p135 = por %p133, %p134
      %p136 = scmp.ne.s32.totalorder %s127, %s128
      %p137 = scmp.eq.s32.totalorder %s28, 0
      %p138 = por %p136, %p137
      %p139 = scmp.ne.s32.totalorder %s127, %s128
      %p140 = scmp.eq.s32.totalorder %s29, 1
      %p141 = por %p139, %p140
      %p143 = scmp.ne.s32.totalorder %s128, %s142
      %p144 = scmp.eq.s32.totalorder %s29, 0
      %p145 = por %p143, %p144
      %s147 = sadd.s32 %s146, 1
      %p150 = scmp.eq.s32.totalorder %s23, 1
      %p151 = scmp.ne.s32.totalorder %s146, %s148
      %p152 = scmp.eq.s32.totalorder %s23, 0
      %p153 = por %p151, %p152
      %p154 = scmp.ne.s32.totalorder %s146, %s148
      %p155 = scmp.eq.s32.totalorder %s28, 1
      %p156 = por %p154, %p155
      %p157 = scmp.ne.s32.totalorder %s148, %s149
      %p158 = scmp.eq.s32.totalorder %s28, 0
      %p159 = por %p157, %p158
      %p160 = scmp.ne.s32.totalorder %s148, %s149
      %p161 = scmp.eq.s32.totalorder %s29, 1
      %p162 = por %p160, %p161
      %p164 = scmp.ne.s32.totalorder %s149, %s163
      %p165 = scmp.eq.s32.totalorder %s29, 0
      %p166 = por %p164, %p165
      %s168 = sadd.s32 %s167, 1
      %p171 = scmp.eq.s32.totalorder %s23, 1
      %p172 = scmp.ne.s32.totalorder %s167, %s169
      %p173 = scmp.eq.s32.totalorder %s23, 0
      %p174 = por %p172, %p173
      %p175 = scmp.ne.s32.totalorder %s167, %s169
      %p176 = scmp.eq.s32.totalorder %s28, 1
      %p177 = por %p175, %p176
      %p178 = scmp.ne.s32.totalorder %s169, %s170
      %p179 = scmp.eq.s32.totalorder %s28, 0
      %p180 = por %p178, %p179
      %p181 = scmp.ne.s32.totalorder %s169, %s170
      %p182 = scmp.eq.s32.totalorder %s29, 1
      %p183 = por %p181, %p182
      %p185 = scmp.ne.s32.totalorder %s170, %s184
      %p186 = scmp.eq.s32.totalorder %s29, 0
      %p187 = por %p185, %p186
      %s189 = sadd.s32 %s188, 1
      %p192 = scmp.eq.s32.totalorder %s23, 1
      %p193 = scmp.ne.s32.totalorder %s188, %s190
      %p194 = scmp.eq.s32.totalorder %s23, 0
      %p195 = por %p193, %p194
      %p196 = scmp.ne.s32.totalorder %s188, %s190
      %p197 = scmp.eq.s32.totalorder %s28, 1
      %p198 = por %p196, %p197
      %p199 = scmp.ne.s32.totalorder %s190, %s191
      %p200 = scmp.eq.s32.totalorder %s28, 0
      %p201 = por %p199, %p200
      %p202 = scmp.ne.s32.totalorder %s190, %s191
      %p203 = scmp.eq.s32.totalorder %s29, 1
      %p204 = por %p202, %p203
      %p206 = scmp.ne.s32.totalorder %s191, %s205
      %p207 = scmp.eq.s32.totalorder %s29, 0
      %p208 = por %p206, %p207
      %s210 = sadd.s32 %s209, 1
      %p213 = scmp.eq.s32.totalorder %s23, 1
      %p214 = scmp.ne.s32.totalorder %s209, %s211
      %p215 = scmp.eq.s32.totalorder %s23, 0
      %p216 = por %p214, %p215
      %p217 = scmp.ne.s32.totalorder %s209, %s211
      %p218 = scmp.eq.s32.totalorder %s28, 1
      %p219 = por %p217, %p218
      %p220 = scmp.ne.s32.totalorder %s211, %s212
      %p221 = scmp.eq.s32.totalorder %s28, 0
      %p222 = por %p220, %p221
      %p223 = scmp.ne.s32.totalorder %s211, %s212
      %p224 = scmp.eq.s32.totalorder %s29, 1
      %p225 = por %p223, %p224
      %p227 = scmp.ne.s32.totalorder %s212, %s226
      %p228 = scmp.eq.s32.totalorder %s29, 0
      %p229 = por %p227, %p228
      %s230 = ssub.s32 %s23, %s30
      %p231 = scmp.eq.s32.totalorder %s230, 0
      %s233 = sadd.s32 %s232, 1
      %s234 = scalar_select %p231, %s232, %s233
      %p237 = pneg %p231
      %p238 = scmp.eq.s32.totalorder %s23, 1
      %p239 = por %p237, %p238
      %p240 = scmp.ne.s32.totalorder %s232, %s235
      %p241 = scmp.eq.s32.totalorder %s23, 0
      %p242 = por %p240, %p241
      %p243 = scmp.ne.s32.totalorder %s232, %s235
      %p244 = scmp.eq.s32.totalorder %s28, 1
      %p245 = por %p243, %p244
      %p246 = scmp.ne.s32.totalorder %s235, %s236
      %p247 = scmp.eq.s32.totalorder %s28, 0
      %p248 = por %p246, %p247
      %p249 = scmp.ne.s32.totalorder %s235, %s236
      %p250 = scmp.eq.s32.totalorder %s29, 1
      %p251 = por %p249, %p250
      %p253 = scmp.ne.s32.totalorder %s236, %s252
      %p254 = scmp.eq.s32.totalorder %s29, 0
      %p255 = por %p253, %p254
      %p256 = scmp.le.s32.totalorder 1, %s23
      %p257 = scmp.lt.s32.totalorder %s23, 3
      %p258 = pnand %p256, %p257
      %p259 = pneg %p258
      // Predicated region
      $region9: #{mhsa_forward_pallas.1} parent=5 // pred_check
        _
      $region10: #{mhsa_forward_pallas.1} parent=5 // pred_check_branch
        %261 = sbr.rel (%p258) target = $region12
      $region11: #{mhsa_forward_pallas.1} parent=5 // pred_region
        %s262 = ssub.s32 %s23, 1
        // Predicated region
        $region13: #{mhsa_forward_pallas.1} parent=11 // pred_check
          %p263 = pneg %p96
        $region14: #{mhsa_forward_pallas.1} parent=11 // pred_check_branch
          %265 = sbr.rel (%p263) target = $region16
        $region15: #{mhsa_forward_pallas.1} parent=11 // pred_region
          _
        $region16: #{mhsa_forward_pallas.1} parent=11 // pred_fallthru
          _
        // Predicated region
        $region17: #{mhsa_forward_pallas.1} parent=11 // pred_check
          %p266 = pneg %p117
        $region18: #{mhsa_forward_pallas.1} parent=11 // pred_check_branch
          %268 = sbr.rel (%p266) target = $region20
        $region19: #{mhsa_forward_pallas.1} parent=11 // pred_region
          %s270 = ssub.s32 3072, 3072
          %271 = vsyncadd [#allocation8], %s270
          %s272 = sshll.u32 [#allocation7], 4
          %s273 = int_to_ptr.vmem [resolvable:$true] %s272
          %278 = dma.hbm_to_vmem [thread:$0]  %s3, 3072, %s273, [#allocation8], 128, 128, 8
        $region20: #{mhsa_forward_pallas.1} parent=11 // pred_fallthru
          _
        // Predicated region
        $region21: #{mhsa_forward_pallas.1} parent=11 // pred_check
          %p279 = pneg %p138
        $region22: #{mhsa_forward_pallas.1} parent=11 // pred_check_branch
          %281 = sbr.rel (%p279) target = $region24
        $region23: #{mhsa_forward_pallas.1} parent=11 // pred_region
          _
        $region24: #{mhsa_forward_pallas.1} parent=11 // pred_fallthru
          _
        // Predicated region
        $region25: #{mhsa_forward_pallas.1} parent=11 // pred_check
          %p282 = pneg %p159
        $region26: #{mhsa_forward_pallas.1} parent=11 // pred_check_branch
          %284 = sbr.rel (%p282) target = $region28
        $region27: #{mhsa_forward_pallas.1} parent=11 // pred_region
          %s286 = ssub.s32 1024, 1024
          %287 = vsyncadd [#allocation8], %s286
          %s288 = sshll.u32 [#allocation9], 4
          %s289 = int_to_ptr.vmem [resolvable:$true] %s288
          %294 = dma.hbm_to_vmem [thread:$0]  %s5, 1024, %s289, [#allocation8], 128, 128, 8
        $region28: #{mhsa_forward_pallas.1} parent=11 // pred_fallthru
          _
        // Predicated region
        $region29: #{mhsa_forward_pallas.1} parent=11 // pred_check
          %p295 = pneg %p180
        $region30: #{mhsa_forward_pallas.1} parent=11 // pred_check_branch
          %297 = sbr.rel (%p295) target = $region32
        $region31: #{mhsa_forward_pallas.1} parent=11 // pred_region
          _
        $region32: #{mhsa_forward_pallas.1} parent=11 // pred_fallthru
          _
        // Predicated region
        $region33: #{mhsa_forward_pallas.1} parent=11 // pred_check
          %p298 = pneg %p201
        $region34: #{mhsa_forward_pallas.1} parent=11 // pred_check_branch
          %300 = sbr.rel (%p298) target = $region36
        $region35: #{mhsa_forward_pallas.1} parent=11 // pred_region
          %s302 = ssub.s32 384, 384
          %303 = vsyncadd [#allocation11], %s302
          %s304 = sshll.u32 [#allocation10], 4
          %s305 = int_to_ptr.vmem [resolvable:$true] %s304
          %310 = dma.hbm_to_vmem [thread:$0]  %s7, 384, %s305, [#allocation11], 128, 128, 8
        $region36: #{mhsa_forward_pallas.1} parent=11 // pred_fallthru
          _
        // Predicated region
        $region37: #{mhsa_forward_pallas.1} parent=11 // pred_check
          %p311 = pneg %p222
        $region38: #{mhsa_forward_pallas.1} parent=11 // pred_check_branch
          %313 = sbr.rel (%p311) target = $region40
        $region39: #{mhsa_forward_pallas.1} parent=11 // pred_region
          %s315 = ssub.s32 1664, 1664
          %316 = vsyncadd [#allocation11], %s315
          %s317 = sshll.u32 [#allocation12], 4
          %s318 = int_to_ptr.vmem [resolvable:$true] %s317
          %323 = dma.hbm_to_vmem [thread:$0]  %s8, 1664, %s318, [#allocation11], 128, 128, 8
        $region40: #{mhsa_forward_pallas.1} parent=11 // pred_fallthru
          _
      $region12: #{mhsa_forward_pallas.1} parent=5 // pred_fallthru
        _
      %p324 = scmp.lt.s32.totalorder %s23, 2
      // Predicated region
      $region41: #{mhsa_forward_pallas.1} parent=5 // pred_check
        %p325 = pneg %p324
      $region42: #{mhsa_forward_pallas.1} parent=5 // pred_check_branch
        %327 = sbr.rel (%p325) target = $region44
      $region43: #{mhsa_forward_pallas.1} parent=5 // pred_region
        // Predicated region
        $region45: #{mhsa_forward_pallas.1} parent=43 // pred_check
          %p328 = pneg %p43
        $region46: #{mhsa_forward_pallas.1} parent=43 // pred_check_branch
          %330 = sbr.rel (%p328) target = $region48
        $region47: #{mhsa_forward_pallas.1} parent=43 // pred_region
          %s331 = sand.u32 %s33, 1
          %s332 = scalar_lea.sflag [#allocation5], %s331
          %s333 = sand.u32 %s33, 1
          %s334 = smul.addr %s333, 8
          %s335 = scalar_lea.vmem [#allocation4], %s334
          %s337 = ssub.s32 128, 128
          %338 = vsyncadd %s332, %s337
          %s339 = smul.addr %s23, 128
          %s340 = scalar_lea.hbm %s0, %s339
          %s342 = sshll.u32 %s335, 4
          %s343 = int_to_ptr.vmem [resolvable:$true] %s342
          %345 = dma.hbm_to_vmem [thread:$0]  %s340, 128, %s343, %s332
        $region48: #{mhsa_forward_pallas.1} parent=43 // pred_fallthru
          _
        // Predicated region
        $region49: #{mhsa_forward_pallas.1} parent=43 // pred_check
          %p346 = pneg %p69
        $region50: #{mhsa_forward_pallas.1} parent=43 // pred_check_branch
          %348 = sbr.rel (%p346) target = $region52
        $region51: #{mhsa_forward_pallas.1} parent=43 // pred_region
          %p349 = scmp.lt.s32.totalorder %s23, 1
          %s350 = scalar_select %p349, %s23, 1
          %s351 = scalar_lea.vmem %s1, %s350
        $region52: #{mhsa_forward_pallas.1} parent=43 // pred_fallthru
          _
      $region44: #{mhsa_forward_pallas.1} parent=5 // pred_fallthru
        _
      %p352 = scmp.le.s32.totalorder 1, %s23
      %p353 = scmp.lt.s32.totalorder %s23, 3
      %p354 = pnand %p352, %p353
      %p355 = pneg %p354
      // Predicated region
      $region53: #{mhsa_forward_pallas.1} parent=5 // pred_check
        _
      $region54: #{mhsa_forward_pallas.1} parent=5 // pred_check_branch
        %357 = sbr.rel (%p354) target = $region56
      $region55: #{mhsa_forward_pallas.1} parent=5 // pred_region
        %s358 = ssub.s32 %s23, 1
        %s359 = sand.u32 %s36, 1
        %s360 = scalar_lea.sflag [#allocation5], %s359
        %s361 = sand.u32 %s36, 1
        %s362 = smul.addr %s361, 8
        %s363 = scalar_lea.vmem [#allocation4], %s362
        // Predicated region
        $region57: #{mhsa_forward_pallas.1} parent=55 // pred_check
          %p364 = pneg %p49
        $region58: #{mhsa_forward_pallas.1} parent=55 // pred_check_branch
          %366 = sbr.rel (%p364) target = $region60
        $region59: #{mhsa_forward_pallas.1} parent=55 // pred_region
          %367 = dma.done %s360, 128
        $region60: #{mhsa_forward_pallas.1} parent=55 // pred_fallthru
          _
        // Predicated region
        $region61: #{mhsa_forward_pallas.1} parent=55 // pred_check
          %p368 = pneg %p117
        $region62: #{mhsa_forward_pallas.1} parent=55 // pred_check_branch
          %370 = sbr.rel (%p368) target = $region64
        $region63: #{mhsa_forward_pallas.1} parent=55 // pred_region
          %371 = dma.done [#allocation8], 3072
        $region64: #{mhsa_forward_pallas.1} parent=55 // pred_fallthru
          _
        // Predicated region
        $region65: #{mhsa_forward_pallas.1} parent=55 // pred_check
          %p372 = pneg %p159
        $region66: #{mhsa_forward_pallas.1} parent=55 // pred_check_branch
          %374 = sbr.rel (%p372) target = $region68
        $region67: #{mhsa_forward_pallas.1} parent=55 // pred_region
          %375 = dma.done [#allocation8], 1024
        $region68: #{mhsa_forward_pallas.1} parent=55 // pred_fallthru
          _
        // Predicated region
        $region69: #{mhsa_forward_pallas.1} parent=55 // pred_check
          %p376 = pneg %p201
        $region70: #{mhsa_forward_pallas.1} parent=55 // pred_check_branch
          %378 = sbr.rel (%p376) target = $region72
        $region71: #{mhsa_forward_pallas.1} parent=55 // pred_region
          %379 = dma.done [#allocation11], 384
        $region72: #{mhsa_forward_pallas.1} parent=55 // pred_fallthru
          _
        // Predicated region
        $region73: #{mhsa_forward_pallas.1} parent=55 // pred_check
          %p380 = pneg %p222
        $region74: #{mhsa_forward_pallas.1} parent=55 // pred_check_branch
          %382 = sbr.rel (%p380) target = $region76
        $region75: #{mhsa_forward_pallas.1} parent=55 // pred_region
          %383 = dma.done [#allocation11], 1664
        $region76: #{mhsa_forward_pallas.1} parent=55 // pred_fallthru
          _
        %s384 = sand.u32 %s36, 1
        %s385 = scalar_lea.sflag [#allocation5], %s384
        %s386 = sand.u32 %s36, 1
        %s387 = smul.addr %s386, 8
        %s388 = scalar_lea.vmem [#allocation4], %s387
        %p389 = pneg %p49
        %p390 = pneg %p46
        %p391 = scmp.lt.s32.totalorder %s28, 1
        %s392 = scalar_select %p391, %s28, 1
        %s393 = scalar_lea.vmem %s1, %s392
        %p394 = pneg %p75
        %p395 = pneg %p72
        %p396 = pneg %p96
        %p397 = pneg %p93
        %p398 = pneg %p117
        %p399 = pneg %p114
        %p400 = pneg %p138
        %p401 = pneg %p135
        %p402 = pneg %p159
        %p403 = pneg %p156
        %p404 = pneg %p180
        %p405 = pneg %p177
        %p406 = pneg %p201
        %p407 = pneg %p198
        %p408 = pneg %p222
        %p409 = pneg %p219
        %p410 = pneg %p248
        %p411 = pneg %p245
        %s412 = sand.u32 %s235, 1
        %s413 = scalar_lea.sflag [#allocation6], %s412
        %s414 = sand.u32 %s235, 1
        %s415 = smul.addr %s414, 8
        %s416 = scalar_lea.vmem [#allocation13], %s415
        %p417 = scmp.lt.s32.totalorder %s28, 1
        %s418 = scalar_select %p417, %s28, 1
        %s419 = scalar_lea.vmem %s1, %s418
        %v420 = vld [vmem:[%s363] sm:$0xff]
        %v421 = vld [vmem:[#allocation7] sm:$0xff]
        %v422 = vld [vmem:[#allocation7 + $0x8] sm:$0xff]
        %v423 = vld [vmem:[#allocation7 + $0x10] sm:$0xff]
        %v424 = vld [vmem:[#allocation7 + $0x18] sm:$0xff]
        %v425 = vld [vmem:[#allocation7 + $0x20] sm:$0xff]
        %v426 = vld [vmem:[#allocation7 + $0x28] sm:$0xff]
        %v427 = vld [vmem:[#allocation7 + $0x30] sm:$0xff]
        %v428 = vld [vmem:[#allocation7 + $0x38] sm:$0xff]
        %v429 = vld [vmem:[%s4] sm:$0x1]
        %v431 = vlaneseq
        %v432 = vshrl.u32 %v431, 7
        %v433 = vsub.s32 0, %v432
        %v434 = vrot.slane %v429, %v433
        %vm436 = vcmask 523264
        %v438 = vsel %vm436, %v420, 0
        %440 = vmatprep.subr.mxu0 0.0
        %441 = vmatpush1.msra.mxu0 0.0
        %442 = vmatprep.subr.mxu0 0.0
        %443 = vmatpush1.msra.mxu0 0.0
        %444 = vmatprep.subr.mxu0 0.0
        %445 = vmatpush1.msra.mxu0 0.0
        %446 = vmatprep.subr.mxu0 0.0
        %447 = vmatpush1.msra.mxu0 0.0
        %448 = vmatprep.subr.mxu0 0.0
        %449 = vmatpush1.msra.mxu0 0.0
        %450 = vmatprep.subr.mxu0 0.0
        %451 = vmatpush1.msra.mxu0 0.0
        %452 = vmatprep.subr.mxu0 0.0
        %453 = vmatpush1.msra.mxu0 0.0
        %454 = vmatprep.subr.mxu0 0.0
        %455 = vmatpush1.msra.mxu0 0.0
        %456 = vmatprep.subr.mxu0 0.0
        %457 = vmatpush1.msra.mxu0 %v428
        %458 = vmatprep.subr.mxu0 0.0
        %459 = vmatpush1.msra.mxu0 %v427
        %460 = vmatprep.subr.mxu0 0.0
        %461 = vmatpush1.msra.mxu0 %v426
        %462 = vmatprep.subr.mxu0 0.0
        %463 = vmatpush1.msra.mxu0 %v425
        %464 = vmatprep.subr.mxu0 0.0
        %465 = vmatpush1.msra.mxu0 %v424
        %466 = vmatprep.subr.mxu0 0.0
        %467 = vmatpush1.msra.mxu0 %v423
        %468 = vmatprep.subr.mxu0 0.0
        %469 = vmatpush1.msra.mxu0 %v422
        %470 = vmatprep.subr.mxu0 0.0
        %471 = vmatpush1.msra.mxu0 %v421
        %472 = vmatprep.subr.mxu0 0.0
        %473 = vmatpush2.msra.mxu0 0.0
        %474 = vmatprep.subr.mxu0 0.0
        %475 = vmatpush2.msra.mxu0 0.0
        %476 = vmatprep.subr.mxu0 0.0
        %477 = vmatpush2.msra.mxu0 0.0
        %478 = vmatprep.subr.mxu0 0.0
        %479 = vmatpush2.msra.mxu0 0.0
        %480 = vmatprep.subr.mxu0 0.0
        %481 = vmatpush2.msra.mxu0 0.0
        %482 = vmatprep.subr.mxu0 0.0
        %483 = vmatpush2.msra.mxu0 0.0
        %484 = vmatprep.subr.mxu0 0.0
        %485 = vmatpush2.msra.mxu0 0.0
        %486 = vmatprep.subr.mxu0 0.0
        %487 = vmatpush2.msra.mxu0 0.0
        %488 = vmatprep.subr.mxu0 0.0
        %489 = vmatpush2.msra.mxu0 0.0
        %490 = vmatprep.subr.mxu0 0.0
        %491 = vmatpush2.msra.mxu0 0.0
        %492 = vmatprep.subr.mxu0 0.0
        %493 = vmatpush2.msra.mxu0 0.0
        %494 = vmatprep.subr.mxu0 0.0
        %495 = vmatpush2.msra.mxu0 0.0
        %496 = vmatprep.subr.mxu0 0.0
        %497 = vmatpush2.msra.mxu0 0.0
        %498 = vmatprep.subr.mxu0 0.0
        %499 = vmatpush2.msra.mxu0 0.0
        %500 = vmatprep.subr.mxu0 0.0
        %501 = vmatpush2.msra.mxu0 0.0
        %502 = vmatprep.subr.mxu0 0.0
        %503 = vmatpush2.msra.mxu0 0.0
        %504 = vmatprep.mubr.f32.mxu0 0.0
        %505 = vmatmul.mubr.f32.gmra.mxu0 %v438
        %v506 = vpop.f32.mrf.mxu0
        %v507 = vadd.f32 %v434, %v506
        %v508 = vpop.f32.mrf.mxu0
        %509 = vdwg.mxu0
        %s510 = scalar_lea.vmem [#allocation7], 64
        %v511 = vld [vmem:[%s510] sm:$0xff]
        %v512 = vld [vmem:[%s510 + $0x8] sm:$0xff]
        %v513 = vld [vmem:[%s510 + $0x10] sm:$0xff]
        %v514 = vld [vmem:[%s510 + $0x18] sm:$0xff]
        %v515 = vld [vmem:[%s510 + $0x20] sm:$0xff]
        %v516 = vld [vmem:[%s510 + $0x28] sm:$0xff]
        %v517 = vld [vmem:[%s510 + $0x30] sm:$0xff]
        %v518 = vld [vmem:[%s510 + $0x38] sm:$0xff]
        %s519 = scalar_lea.vmem %s4, 1
        %v520 = vld [vmem:[%s519] sm:$0x1]
        %v522 = vlaneseq
        %v523 = vshrl.u32 %v522, 7
        %v524 = vsub.s32 0, %v523
        %v525 = vrot.slane %v520, %v524
        %527 = vmatprep.subr.mxu0 0.0
        %528 = vmatpush1.msra.mxu0 0.0
        %529 = vmatprep.subr.mxu0 0.0
        %530 = vmatpush1.msra.mxu0 0.0
        %531 = vmatprep.subr.mxu0 0.0
        %532 = vmatpush1.msra.mxu0 0.0
        %533 = vmatprep.subr.mxu0 0.0
        %534 = vmatpush1.msra.mxu0 0.0
        %535 = vmatprep.subr.mxu0 0.0
        %536 = vmatpush1.msra.mxu0 0.0
        %537 = vmatprep.subr.mxu0 0.0
        %538 = vmatpush1.msra.mxu0 0.0
        %539 = vmatprep.subr.mxu0 0.0
        %540 = vmatpush1.msra.mxu0 0.0
        %541 = vmatprep.subr.mxu0 0.0
        %542 = vmatpush1.msra.mxu0 0.0
        %543 = vmatprep.subr.mxu0 0.0
        %544 = vmatpush1.msra.mxu0 %v518
        %545 = vmatprep.subr.mxu0 0.0
        %546 = vmatpush1.msra.mxu0 %v517
        %547 = vmatprep.subr.mxu0 0.0
        %548 = vmatpush1.msra.mxu0 %v516
        %549 = vmatprep.subr.mxu0 0.0
        %550 = vmatpush1.msra.mxu0 %v515
        %551 = vmatprep.subr.mxu0 0.0
        %552 = vmatpush1.msra.mxu0 %v514
        %553 = vmatprep.subr.mxu0 0.0
        %554 = vmatpush1.msra.mxu0 %v513
        %555 = vmatprep.subr.mxu0 0.0
        %556 = vmatpush1.msra.mxu0 %v512
        %557 = vmatprep.subr.mxu0 0.0
        %558 = vmatpush1.msra.mxu0 %v511
        %559 = vmatprep.subr.mxu0 0.0
        %560 = vmatpush2.msra.mxu0 0.0
        %561 = vmatprep.subr.mxu0 0.0
        %562 = vmatpush2.msra.mxu0 0.0
        %563 = vmatprep.subr.mxu0 0.0
        %564 = vmatpush2.msra.mxu0 0.0
        %565 = vmatprep.subr.mxu0 0.0
        %566 = vmatpush2.msra.mxu0 0.0
        %567 = vmatprep.subr.mxu0 0.0
        %568 = vmatpush2.msra.mxu0 0.0
        %569 = vmatprep.subr.mxu0 0.0
        %570 = vmatpush2.msra.mxu0 0.0
        %571 = vmatprep.subr.mxu0 0.0
        %572 = vmatpush2.msra.mxu0 0.0
        %573 = vmatprep.subr.mxu0 0.0
        %574 = vmatpush2.msra.mxu0 0.0
        %575 = vmatprep.subr.mxu0 0.0
        %576 = vmatpush2.msra.mxu0 0.0
        %577 = vmatprep.subr.mxu0 0.0
        %578 = vmatpush2.msra.mxu0 0.0
        %579 = vmatprep.subr.mxu0 0.0
        %580 = vmatpush2.msra.mxu0 0.0
        %581 = vmatprep.subr.mxu0 0.0
        %582 = vmatpush2.msra.mxu0 0.0
        %583 = vmatprep.subr.mxu0 0.0
        %584 = vmatpush2.msra.mxu0 0.0
        %585 = vmatprep.subr.mxu0 0.0
        %586 = vmatpush2.msra.mxu0 0.0
        %587 = vmatprep.subr.mxu0 0.0
        %588 = vmatpush2.msra.mxu0 0.0
        %589 = vmatprep.subr.mxu0 0.0
        %590 = vmatpush2.msra.mxu0 0.0
        %591 = vmatprep.mubr.f32.mxu0 0.0
        %592 = vmatmul.mubr.f32.gmra.mxu0 %v438
        %v593 = vpop.f32.mrf.mxu0
        %v594 = vadd.f32 %v525, %v593
        %v595 = vpop.f32.mrf.mxu0
        %596 = vdwg.mxu0
        %s597 = scalar_lea.vmem [#allocation7], 128
        %v598 = vld [vmem:[%s597] sm:$0xff]
        %v599 = vld [vmem:[%s597 + $0x8] sm:$0xff]
        %v600 = vld [vmem:[%s597 + $0x10] sm:$0xff]
        %v601 = vld [vmem:[%s597 + $0x18] sm:$0xff]
        %v602 = vld [vmem:[%s597 + $0x20] sm:$0xff]
        %v603 = vld [vmem:[%s597 + $0x28] sm:$0xff]
        %v604 = vld [vmem:[%s597 + $0x30] sm:$0xff]
        %v605 = vld [vmem:[%s597 + $0x38] sm:$0xff]
        %s606 = scalar_lea.vmem %s4, 2
        %v607 = vld [vmem:[%s606] sm:$0x1]
        %v609 = vlaneseq
        %v610 = vshrl.u32 %v609, 7
        %v611 = vsub.s32 0, %v610
        %v612 = vrot.slane %v607, %v611
        %614 = vmatprep.subr.mxu0 0.0
        %615 = vmatpush1.msra.mxu0 0.0
        %616 = vmatprep.subr.mxu0 0.0
        %617 = vmatpush1.msra.mxu0 0.0
        %618 = vmatprep.subr.mxu0 0.0
        %619 = vmatpush1.msra.mxu0 0.0
        %620 = vmatprep.subr.mxu0 0.0
        %621 = vmatpush1.msra.mxu0 0.0
        %622 = vmatprep.subr.mxu0 0.0
        %623 = vmatpush1.msra.mxu0 0.0
        %624 = vmatprep.subr.mxu0 0.0
        %625 = vmatpush1.msra.mxu0 0.0
        %626 = vmatprep.subr.mxu0 0.0
        %627 = vmatpush1.msra.mxu0 0.0
        %628 = vmatprep.subr.mxu0 0.0
        %629 = vmatpush1.msra.mxu0 0.0
        %630 = vmatprep.subr.mxu0 0.0
        %631 = vmatpush1.msra.mxu0 %v605
        %632 = vmatprep.subr.mxu0 0.0
        %633 = vmatpush1.msra.mxu0 %v604
        %634 = vmatprep.subr.mxu0 0.0
        %635 = vmatpush1.msra.mxu0 %v603
        %636 = vmatprep.subr.mxu0 0.0
        %637 = vmatpush1.msra.mxu0 %v602
        %638 = vmatprep.subr.mxu0 0.0
        %639 = vmatpush1.msra.mxu0 %v601
        %640 = vmatprep.subr.mxu0 0.0
        %641 = vmatpush1.msra.mxu0 %v600
        %642 = vmatprep.subr.mxu0 0.0
        %643 = vmatpush1.msra.mxu0 %v599
        %644 = vmatprep.subr.mxu0 0.0
        %645 = vmatpush1.msra.mxu0 %v598
        %646 = vmatprep.subr.mxu0 0.0
        %647 = vmatpush2.msra.mxu0 0.0
        %648 = vmatprep.subr.mxu0 0.0
        %649 = vmatpush2.msra.mxu0 0.0
        %650 = vmatprep.subr.mxu0 0.0
        %651 = vmatpush2.msra.mxu0 0.0
        %652 = vmatprep.subr.mxu0 0.0
        %653 = vmatpush2.msra.mxu0 0.0
        %654 = vmatprep.subr.mxu0 0.0
        %655 = vmatpush2.msra.mxu0 0.0
        %656 = vmatprep.subr.mxu0 0.0
        %657 = vmatpush2.msra.mxu0 0.0
        %658 = vmatprep.subr.mxu0 0.0
        %659 = vmatpush2.msra.mxu0 0.0
        %660 = vmatprep.subr.mxu0 0.0
        %661 = vmatpush2.msra.mxu0 0.0
        %662 = vmatprep.subr.mxu0 0.0
        %663 = vmatpush2.msra.mxu0 0.0
        %664 = vmatprep.subr.mxu0 0.0
        %665 = vmatpush2.msra.mxu0 0.0
        %666 = vmatprep.subr.mxu0 0.0
        %667 = vmatpush2.msra.mxu0 0.0
        %668 = vmatprep.subr.mxu0 0.0
        %669 = vmatpush2.msra.mxu0 0.0
        %670 = vmatprep.subr.mxu0 0.0
        %671 = vmatpush2.msra.mxu0 0.0
        %672 = vmatprep.subr.mxu0 0.0
        %673 = vmatpush2.msra.mxu0 0.0
        %674 = vmatprep.subr.mxu0 0.0
        %675 = vmatpush2.msra.mxu0 0.0
        %676 = vmatprep.subr.mxu0 0.0
        %677 = vmatpush2.msra.mxu0 0.0
        %678 = vmatprep.mubr.f32.mxu0 0.0
        %679 = vmatmul.mubr.f32.gmra.mxu0 %v438
        %v680 = vpop.f32.mrf.mxu0
        %v681 = vadd.f32 %v612, %v680
        %v682 = vpop.f32.mrf.mxu0
        %683 = vdwg.mxu0
        %v684 = vld [vmem:[%s419] sm:$0x1]
        %vm685 = vcmp.gt.s32.totalorder %v684, 0
        %v686 = vsel %vm685, 0.0, -1e+30
        %v688 = vlaneseq
        %v689 = vshrl.u32 %v688, 7
        %v690 = vsub.s32 0, %v689
        %v691 = vrot.slane %v686, %v690
        %vm693 = vcmask 64512
        %v695 = vsel %vm693, %v507, 0
        %v698 = vsel %vm693, %v594, 0
        %700 = vmatprep.subr.mxu0 0.0
        %701 = vmatpush1.xpose.msra.mxu0 0.0
        %702 = vmatprep.subr.mxu0 0.0
        %703 = vmatpush1.xpose.msra.mxu0 0.0
        %704 = vmatprep.subr.mxu0 0.0
        %705 = vmatpush1.xpose.msra.mxu0 0.0
        %706 = vmatprep.subr.mxu0 0.0
        %707 = vmatpush1.xpose.msra.mxu0 0.0
        %708 = vmatprep.subr.mxu0 0.0
        %709 = vmatpush1.xpose.msra.mxu0 0.0
        %710 = vmatprep.subr.mxu0 0.0
        %711 = vmatpush1.xpose.msra.mxu0 0.0
        %712 = vmatprep.subr.mxu0 0.0
        %713 = vmatpush1.xpose.msra.mxu0 0.0
        %714 = vmatprep.subr.mxu0 0.0
        %715 = vmatpush1.xpose.msra.mxu0 0.0
        %716 = vmatprep.subr.mxu0 0.0
        %717 = vmatpush1.xpose.msra.mxu0 0.0
        %718 = vmatprep.subr.mxu0 0.0
        %719 = vmatpush1.xpose.msra.mxu0 0.0
        %720 = vmatprep.subr.mxu0 0.0
        %721 = vmatpush1.xpose.msra.mxu0 0.0
        %722 = vmatprep.subr.mxu0 0.0
        %723 = vmatpush1.xpose.msra.mxu0 0.0
        %724 = vmatprep.subr.mxu0 0.0
        %725 = vmatpush1.xpose.msra.mxu0 0.0
        %726 = vmatprep.subr.mxu0 0.0
        %727 = vmatpush1.xpose.msra.mxu0 0.0
        %728 = vmatprep.subr.mxu0 0.0
        %729 = vmatpush1.xpose.msra.mxu0 0.0
        %730 = vmatprep.subr.mxu0 0.0
        %731 = vmatpush1.xpose.msra.mxu0 %v698
        %732 = vmatprep.subr.mxu0 0.0
        %733 = vmatpush2.xpose.msra.mxu0 0.0
        %734 = vmatprep.subr.mxu0 0.0
        %735 = vmatpush2.xpose.msra.mxu0 0.0
        %736 = vmatprep.subr.mxu0 0.0
        %737 = vmatpush2.xpose.msra.mxu0 0.0
        %738 = vmatprep.subr.mxu0 0.0
        %739 = vmatpush2.xpose.msra.mxu0 0.0
        %740 = vmatprep.subr.mxu0 0.0
        %741 = vmatpush2.xpose.msra.mxu0 0.0
        %742 = vmatprep.subr.mxu0 0.0
        %743 = vmatpush2.xpose.msra.mxu0 0.0
        %744 = vmatprep.subr.mxu0 0.0
        %745 = vmatpush2.xpose.msra.mxu0 0.0
        %746 = vmatprep.subr.mxu0 0.0
        %747 = vmatpush2.xpose.msra.mxu0 0.0
        %748 = vmatprep.subr.mxu0 0.0
        %749 = vmatpush2.xpose.msra.mxu0 0.0
        %750 = vmatprep.subr.mxu0 0.0
        %751 = vmatpush2.xpose.msra.mxu0 0.0
        %752 = vmatprep.subr.mxu0 0.0
        %753 = vmatpush2.xpose.msra.mxu0 0.0
        %754 = vmatprep.subr.mxu0 0.0
        %755 = vmatpush2.xpose.msra.mxu0 0.0
        %756 = vmatprep.subr.mxu0 0.0
        %757 = vmatpush2.xpose.msra.mxu0 0.0
        %758 = vmatprep.subr.mxu0 0.0
        %759 = vmatpush2.xpose.msra.mxu0 0.0
        %760 = vmatprep.subr.mxu0 0.0
        %761 = vmatpush2.xpose.msra.mxu0 0.0
        %762 = vmatprep.subr.mxu0 0.0
        %763 = vmatpush2.xpose.msra.mxu0 0.0
        %764 = vmatprep.mubr.f32.mxu0 0.0
        %765 = vmatmul.mubr.f32.gmra.mxu0 %v695
        %v766 = vpop.f32.mrf.mxu0
        %v767 = vadd.f32 %v691, %v766
        %v768 = vpop.f32.mrf.mxu0
        %769 = vdwg.mxu0
        %770 = vst.msk [vmem:[#allocation2] sm:$0xff] %vm693, %v767
        %771 = vrot.lane.b32.xlu0 %v507, 120
        %v772 = vpop.permute.xlu0 %771
        %773 = vrot.lane.b32.xlu0 %v594, 120
        %v774 = vpop.permute.xlu0 %773
        %v775 = vsel %vm693, %v772, 0
        %v777 = vsel %vm693, %v774, 0
        %779 = vmatprep.subr.mxu0 0.0
        %780 = vmatpush1.xpose.msra.mxu0 0.0
        %781 = vmatprep.subr.mxu0 0.0
        %782 = vmatpush1.xpose.msra.mxu0 0.0
        %783 = vmatprep.subr.mxu0 0.0
        %784 = vmatpush1.xpose.msra.mxu0 0.0
        %785 = vmatprep.subr.mxu0 0.0
        %786 = vmatpush1.xpose.msra.mxu0 0.0
        %787 = vmatprep.subr.mxu0 0.0
        %788 = vmatpush1.xpose.msra.mxu0 0.0
        %789 = vmatprep.subr.mxu0 0.0
        %790 = vmatpush1.xpose.msra.mxu0 0.0
        %791 = vmatprep.subr.mxu0 0.0
        %792 = vmatpush1.xpose.msra.mxu0 0.0
        %793 = vmatprep.subr.mxu0 0.0
        %794 = vmatpush1.xpose.msra.mxu0 0.0
        %795 = vmatprep.subr.mxu0 0.0
        %796 = vmatpush1.xpose.msra.mxu0 0.0
        %797 = vmatprep.subr.mxu0 0.0
        %798 = vmatpush1.xpose.msra.mxu0 0.0
        %799 = vmatprep.subr.mxu0 0.0
        %800 = vmatpush1.xpose.msra.mxu0 0.0
        %801 = vmatprep.subr.mxu0 0.0
        %802 = vmatpush1.xpose.msra.mxu0 0.0
        %803 = vmatprep.subr.mxu0 0.0
        %804 = vmatpush1.xpose.msra.mxu0 0.0
        %805 = vmatprep.subr.mxu0 0.0
        %806 = vmatpush1.xpose.msra.mxu0 0.0
        %807 = vmatprep.subr.mxu0 0.0
        %808 = vmatpush1.xpose.msra.mxu0 0.0
        %809 = vmatprep.subr.mxu0 0.0
        %810 = vmatpush1.xpose.msra.mxu0 %v777
        %811 = vmatprep.subr.mxu0 0.0
        %812 = vmatpush2.xpose.msra.mxu0 0.0
        %813 = vmatprep.subr.mxu0 0.0
        %814 = vmatpush2.xpose.msra.mxu0 0.0
        %815 = vmatprep.subr.mxu0 0.0
        %816 = vmatpush2.xpose.msra.mxu0 0.0
        %817 = vmatprep.subr.mxu0 0.0
        %818 = vmatpush2.xpose.msra.mxu0 0.0
        %819 = vmatprep.subr.mxu0 0.0
        %820 = vmatpush2.xpose.msra.mxu0 0.0
        %821 = vmatprep.subr.mxu0 0.0
        %822 = vmatpush2.xpose.msra.mxu0 0.0
        %823 = vmatprep.subr.mxu0 0.0
        %824 = vmatpush2.xpose.msra.mxu0 0.0
        %825 = vmatprep.subr.mxu0 0.0
        %826 = vmatpush2.xpose.msra.mxu0 0.0
        %827 = vmatprep.subr.mxu0 0.0
        %828 = vmatpush2.xpose.msra.mxu0 0.0
        %829 = vmatprep.subr.mxu0 0.0
        %830 = vmatpush2.xpose.msra.mxu0 0.0
        %831 = vmatprep.subr.mxu0 0.0
        %832 = vmatpush2.xpose.msra.mxu0 0.0
        %833 = vmatprep.subr.mxu0 0.0
        %834 = vmatpush2.xpose.msra.mxu0 0.0
        %835 = vmatprep.subr.mxu0 0.0
        %836 = vmatpush2.xpose.msra.mxu0 0.0
        %837 = vmatprep.subr.mxu0 0.0
        %838 = vmatpush2.xpose.msra.mxu0 0.0
        %839 = vmatprep.subr.mxu0 0.0
        %840 = vmatpush2.xpose.msra.mxu0 0.0
        %841 = vmatprep.subr.mxu0 0.0
        %842 = vmatpush2.xpose.msra.mxu0 0.0
        %843 = vmatprep.mubr.f32.mxu0 0.0
        %844 = vmatmul.mubr.f32.gmra.mxu0 %v775
        %v845 = vpop.f32.mrf.mxu0
        %v846 = vadd.f32 %v691, %v845
        %v847 = vpop.f32.mrf.mxu0
        %848 = vdwg.mxu0
        %850 = vrot.lane.b32.xlu0 %v846, 8
        %v851 = vpop.permute.xlu0 %850
        %vm853 = vcmask 130112
        %854 = vst.msk [vmem:[#allocation2] sm:$0xff] %vm853, %v851
        %855 = vrot.lane.b32.xlu0 %v507, 112
        %v856 = vpop.permute.xlu0 %855
        %857 = vrot.lane.b32.xlu0 %v594, 112
        %v858 = vpop.permute.xlu0 %857
        %v859 = vsel %vm693, %v856, 0
        %v861 = vsel %vm693, %v858, 0
        %863 = vmatprep.subr.mxu0 0.0
        %864 = vmatpush1.xpose.msra.mxu0 0.0
        %865 = vmatprep.subr.mxu0 0.0
        %866 = vmatpush1.xpose.msra.mxu0 0.0
        %867 = vmatprep.subr.mxu0 0.0
        %868 = vmatpush1.xpose.msra.mxu0 0.0
        %869 = vmatprep.subr.mxu0 0.0
        %870 = vmatpush1.xpose.msra.mxu0 0.0
        %871 = vmatprep.subr.mxu0 0.0
        %872 = vmatpush1.xpose.msra.mxu0 0.0
        %873 = vmatprep.subr.mxu0 0.0
        %874 = vmatpush1.xpose.msra.mxu0 0.0
        %875 = vmatprep.subr.mxu0 0.0
        %876 = vmatpush1.xpose.msra.mxu0 0.0
        %877 = vmatprep.subr.mxu0 0.0
        %878 = vmatpush1.xpose.msra.mxu0 0.0
        %879 = vmatprep.subr.mxu0 0.0
        %880 = vmatpush1.xpose.msra.mxu0 0.0
        %881 = vmatprep.subr.mxu0 0.0
        %882 = vmatpush1.xpose.msra.mxu0 0.0
        %883 = vmatprep.subr.mxu0 0.0
        %884 = vmatpush1.xpose.msra.mxu0 0.0
        %885 = vmatprep.subr.mxu0 0.0
        %886 = vmatpush1.xpose.msra.mxu0 0.0
        %887 = vmatprep.subr.mxu0 0.0
        %888 = vmatpush1.xpose.msra.mxu0 0.0
        %889 = vmatprep.subr.mxu0 0.0
        %890 = vmatpush1.xpose.msra.mxu0 0.0
        %891 = vmatprep.subr.mxu0 0.0
        %892 = vmatpush1.xpose.msra.mxu0 0.0
        %893 = vmatprep.subr.mxu0 0.0
        %894 = vmatpush1.xpose.msra.mxu0 %v861
        %895 = vmatprep.subr.mxu0 0.0
        %896 = vmatpush2.xpose.msra.mxu0 0.0
        %897 = vmatprep.subr.mxu0 0.0
        %898 = vmatpush2.xpose.msra.mxu0 0.0
        %899 = vmatprep.subr.mxu0 0.0
        %900 = vmatpush2.xpose.msra.mxu0 0.0
        %901 = vmatprep.subr.mxu0 0.0
        %902 = vmatpush2.xpose.msra.mxu0 0.0
        %903 = vmatprep.subr.mxu0 0.0
        %904 = vmatpush2.xpose.msra.mxu0 0.0
        %905 = vmatprep.subr.mxu0 0.0
        %906 = vmatpush2.xpose.msra.mxu0 0.0
        %907 = vmatprep.subr.mxu0 0.0
        %908 = vmatpush2.xpose.msra.mxu0 0.0
        %909 = vmatprep.subr.mxu0 0.0
        %910 = vmatpush2.xpose.msra.mxu0 0.0
        %911 = vmatprep.subr.mxu0 0.0
        %912 = vmatpush2.xpose.msra.mxu0 0.0
        %913 = vmatprep.subr.mxu0 0.0
        %914 = vmatpush2.xpose.msra.mxu0 0.0
        %915 = vmatprep.subr.mxu0 0.0
        %916 = vmatpush2.xpose.msra.mxu0 0.0
        %917 = vmatprep.subr.mxu0 0.0
        %918 = vmatpush2.xpose.msra.mxu0 0.0
        %919 = vmatprep.subr.mxu0 0.0
        %920 = vmatpush2.xpose.msra.mxu0 0.0
        %921 = vmatprep.subr.mxu0 0.0
        %922 = vmatpush2.xpose.msra.mxu0 0.0
        %923 = vmatprep.subr.mxu0 0.0
        %924 = vmatpush2.xpose.msra.mxu0 0.0
        %925 = vmatprep.subr.mxu0 0.0
        %926 = vmatpush2.xpose.msra.mxu0 0.0
        %927 = vmatprep.mubr.f32.mxu0 0.0
        %928 = vmatmul.mubr.f32.gmra.mxu0 %v859
        %v929 = vpop.f32.mrf.mxu0
        %v930 = vadd.f32 %v691, %v929
        %v931 = vpop.f32.mrf.mxu0
        %932 = vdwg.mxu0
        %934 = vrot.lane.b32.xlu0 %v930, 16
        %v935 = vpop.permute.xlu0 %934
        %vm937 = vcmask 195712
        %938 = vst.msk [vmem:[#allocation2] sm:$0xff] %vm937, %v935
        %939 = vrot.lane.b32.xlu0 %v507, 104
        %v940 = vpop.permute.xlu0 %939
        %941 = vrot.lane.b32.xlu0 %v594, 104
        %v942 = vpop.permute.xlu0 %941
        %v943 = vsel %vm693, %v940, 0
        %v945 = vsel %vm693, %v942, 0
        %947 = vmatprep.subr.mxu0 0.0
        %948 = vmatpush1.xpose.msra.mxu0 0.0
        %949 = vmatprep.subr.mxu0 0.0
        %950 = vmatpush1.xpose.msra.mxu0 0.0
        %951 = vmatprep.subr.mxu0 0.0
        %952 = vmatpush1.xpose.msra.mxu0 0.0
        %953 = vmatprep.subr.mxu0 0.0
        %954 = vmatpush1.xpose.msra.mxu0 0.0
        %955 = vmatprep.subr.mxu0 0.0
        %956 = vmatpush1.xpose.msra.mxu0 0.0
        %957 = vmatprep.subr.mxu0 0.0
        %958 = vmatpush1.xpose.msra.mxu0 0.0
        %959 = vmatprep.subr.mxu0 0.0
        %960 = vmatpush1.xpose.msra.mxu0 0.0
        %961 = vmatprep.subr.mxu0 0.0
        %962 = vmatpush1.xpose.msra.mxu0 0.0
        %963 = vmatprep.subr.mxu0 0.0
        %964 = vmatpush1.xpose.msra.mxu0 0.0
        %965 = vmatprep.subr.mxu0 0.0
        %966 = vmatpush1.xpose.msra.mxu0 0.0
        %967 = vmatprep.subr.mxu0 0.0
        %968 = vmatpush1.xpose.msra.mxu0 0.0
        %969 = vmatprep.subr.mxu0 0.0
        %970 = vmatpush1.xpose.msra.mxu0 0.0
        %971 = vmatprep.subr.mxu0 0.0
        %972 = vmatpush1.xpose.msra.mxu0 0.0
        %973 = vmatprep.subr.mxu0 0.0
        %974 = vmatpush1.xpose.msra.mxu0 0.0
        %975 = vmatprep.subr.mxu0 0.0
        %976 = vmatpush1.xpose.msra.mxu0 0.0
        %977 = vmatprep.subr.mxu0 0.0
        %978 = vmatpush1.xpose.msra.mxu0 %v945
        %979 = vmatprep.subr.mxu0 0.0
        %980 = vmatpush2.xpose.msra.mxu0 0.0
        %981 = vmatprep.subr.mxu0 0.0
        %982 = vmatpush2.xpose.msra.mxu0 0.0
        %983 = vmatprep.subr.mxu0 0.0
        %984 = vmatpush2.xpose.msra.mxu0 0.0
        %985 = vmatprep.subr.mxu0 0.0
        %986 = vmatpush2.xpose.msra.mxu0 0.0
        %987 = vmatprep.subr.mxu0 0.0
        %988 = vmatpush2.xpose.msra.mxu0 0.0
        %989 = vmatprep.subr.mxu0 0.0
        %990 = vmatpush2.xpose.msra.mxu0 0.0
        %991 = vmatprep.subr.mxu0 0.0
        %992 = vmatpush2.xpose.msra.mxu0 0.0
        %993 = vmatprep.subr.mxu0 0.0
        %994 = vmatpush2.xpose.msra.mxu0 0.0
        %995 = vmatprep.subr.mxu0 0.0
        %996 = vmatpush2.xpose.msra.mxu0 0.0
        %997 = vmatprep.subr.mxu0 0.0
        %998 = vmatpush2.xpose.msra.mxu0 0.0
        %999 = vmatprep.subr.mxu0 0.0
        %1000 = vmatpush2.xpose.msra.mxu0 0.0
        %1001 = vmatprep.subr.mxu0 0.0
        %1002 = vmatpush2.xpose.msra.mxu0 0.0
        %1003 = vmatprep.subr.mxu0 0.0
        %1004 = vmatpush2.xpose.msra.mxu0 0.0
        %1005 = vmatprep.subr.mxu0 0.0
        %1006 = vmatpush2.xpose.msra.mxu0 0.0
        %1007 = vmatprep.subr.mxu0 0.0
        %1008 = vmatpush2.xpose.msra.mxu0 0.0
        %1009 = vmatprep.subr.mxu0 0.0
        %1010 = vmatpush2.xpose.msra.mxu0 0.0
        %1011 = vmatprep.mubr.f32.mxu0 0.0
        %1012 = vmatmul.mubr.f32.gmra.mxu0 %v943
        %v1013 = vpop.f32.mrf.mxu0
        %v1014 = vadd.f32 %v691, %v1013
        %v1015 = vpop.f32.mrf.mxu0
        %1016 = vdwg.mxu0
        %1018 = vrot.lane.b32.xlu0 %v1014, 24
        %v1019 = vpop.permute.xlu0 %1018
        %vm1021 = vcmask 261312
        %1022 = vst.msk [vmem:[#allocation2] sm:$0xff] %vm1021, %v1019
        %1023 = vrot.lane.b32.xlu0 %v507, 96
        %v1024 = vpop.permute.xlu0 %1023
        %1025 = vrot.lane.b32.xlu0 %v594, 96
        %v1026 = vpop.permute.xlu0 %1025
        %v1027 = vsel %vm693, %v1024, 0
        %v1029 = vsel %vm693, %v1026, 0
        %1031 = vmatprep.subr.mxu0 0.0
        %1032 = vmatpush1.xpose.msra.mxu0 0.0
        %1033 = vmatprep.subr.mxu0 0.0
        %1034 = vmatpush1.xpose.msra.mxu0 0.0
        %1035 = vmatprep.subr.mxu0 0.0
        %1036 = vmatpush1.xpose.msra.mxu0 0.0
        %1037 = vmatprep.subr.mxu0 0.0
        %1038 = vmatpush1.xpose.msra.mxu0 0.0
        %1039 = vmatprep.subr.mxu0 0.0
        %1040 = vmatpush1.xpose.msra.mxu0 0.0
        %1041 = vmatprep.subr.mxu0 0.0
        %1042 = vmatpush1.xpose.msra.mxu0 0.0
        %1043 = vmatprep.subr.mxu0 0.0
        %1044 = vmatpush1.xpose.msra.mxu0 0.0
        %1045 = vmatprep.subr.mxu0 0.0
        %1046 = vmatpush1.xpose.msra.mxu0 0.0
        %1047 = vmatprep.subr.mxu0 0.0
        %1048 = vmatpush1.xpose.msra.mxu0 0.0
        %1049 = vmatprep.subr.mxu0 0.0
        %1050 = vmatpush1.xpose.msra.mxu0 0.0
        %1051 = vmatprep.subr.mxu0 0.0
        %1052 = vmatpush1.xpose.msra.mxu0 0.0
        %1053 = vmatprep.subr.mxu0 0.0
        %1054 = vmatpush1.xpose.msra.mxu0 0.0
        %1055 = vmatprep.subr.mxu0 0.0
        %1056 = vmatpush1.xpose.msra.mxu0 0.0
        %1057 = vmatprep.subr.mxu0 0.0
        %1058 = vmatpush1.xpose.msra.mxu0 0.0
        %1059 = vmatprep.subr.mxu0 0.0
        %1060 = vmatpush1.xpose.msra.mxu0 0.0
        %1061 = vmatprep.subr.mxu0 0.0
        %1062 = vmatpush1.xpose.msra.mxu0 %v1029
        %1063 = vmatprep.subr.mxu0 0.0
        %1064 = vmatpush2.xpose.msra.mxu0 0.0
        %1065 = vmatprep.subr.mxu0 0.0
        %1066 = vmatpush2.xpose.msra.mxu0 0.0
        %1067 = vmatprep.subr.mxu0 0.0
        %1068 = vmatpush2.xpose.msra.mxu0 0.0
        %1069 = vmatprep.subr.mxu0 0.0
        %1070 = vmatpush2.xpose.msra.mxu0 0.0
        %1071 = vmatprep.subr.mxu0 0.0
        %1072 = vmatpush2.xpose.msra.mxu0 0.0
        %1073 = vmatprep.subr.mxu0 0.0
        %1074 = vmatpush2.xpose.msra.mxu0 0.0
        %1075 = vmatprep.subr.mxu0 0.0
        %1076 = vmatpush2.xpose.msra.mxu0 0.0
        %1077 = vmatprep.subr.mxu0 0.0
        %1078 = vmatpush2.xpose.msra.mxu0 0.0
        %1079 = vmatprep.subr.mxu0 0.0
        %1080 = vmatpush2.xpose.msra.mxu0 0.0
        %1081 = vmatprep.subr.mxu0 0.0
        %1082 = vmatpush2.xpose.msra.mxu0 0.0
        %1083 = vmatprep.subr.mxu0 0.0
        %1084 = vmatpush2.xpose.msra.mxu0 0.0
        %1085 = vmatprep.subr.mxu0 0.0
        %1086 = vmatpush2.xpose.msra.mxu0 0.0
        %1087 = vmatprep.subr.mxu0 0.0
        %1088 = vmatpush2.xpose.msra.mxu0 0.0
        %1089 = vmatprep.subr.mxu0 0.0
        %1090 = vmatpush2.xpose.msra.mxu0 0.0
        %1091 = vmatprep.subr.mxu0 0.0
        %1092 = vmatpush2.xpose.msra.mxu0 0.0
        %1093 = vmatprep.subr.mxu0 0.0
        %1094 = vmatpush2.xpose.msra.mxu0 0.0
        %1095 = vmatprep.mubr.f32.mxu0 0.0
        %1096 = vmatmul.mubr.f32.gmra.mxu0 %v1027
        %v1097 = vpop.f32.mrf.mxu0
        %v1098 = vadd.f32 %v691, %v1097
        %v1099 = vpop.f32.mrf.mxu0
        %1100 = vdwg.mxu0
        %1102 = vrot.lane.b32.xlu0 %v1098, 32
        %v1103 = vpop.permute.xlu0 %1102
        %vm1105 = vcmask 326912
        %1106 = vst.msk [vmem:[#allocation2] sm:$0xff] %vm1105, %v1103
        %v1107 = vld [vmem:[%s2] sm:$0xff]
        %1108 = vrot.lane.b32.xlu0 %v594, 88
        %v1109 = vpop.permute.xlu0 %1108
        %v1112 = vsel %vm693, %v1107, 0
        %1114 = vmatprep.subr.mxu0 0.0
        %1115 = vmatpush1.msra.mxu0 0.0
        %1116 = vmatprep.subr.mxu0 0.0
        %1117 = vmatpush1.msra.mxu0 0.0
        %1118 = vmatprep.subr.mxu0 0.0
        %1119 = vmatpush1.msra.mxu0 0.0
        %1120 = vmatprep.subr.mxu0 0.0
        %1121 = vmatpush1.msra.mxu0 0.0
        %1122 = vmatprep.subr.mxu0 0.0
        %1123 = vmatpush1.msra.mxu0 0.0
        %1124 = vmatprep.subr.mxu0 0.0
        %1125 = vmatpush1.msra.mxu0 0.0
        %1126 = vmatprep.subr.mxu0 0.0
        %1127 = vmatpush1.msra.mxu0 0.0
        %1128 = vmatprep.subr.mxu0 0.0
        %1129 = vmatpush1.msra.mxu0 0.0
        %1130 = vmatprep.subr.mxu0 0.0
        %1131 = vmatpush1.msra.mxu0 0.0
        %1132 = vmatprep.subr.mxu0 0.0
        %1133 = vmatpush1.msra.mxu0 0.0
        %1134 = vmatprep.subr.mxu0 0.0
        %1135 = vmatpush1.msra.mxu0 0.0
        %1136 = vmatprep.subr.mxu0 0.0
        %1137 = vmatpush1.msra.mxu0 0.0
        %1138 = vmatprep.subr.mxu0 0.0
        %1139 = vmatpush1.msra.mxu0 0.0
        %1140 = vmatprep.subr.mxu0 0.0
        %1141 = vmatpush1.msra.mxu0 0.0
        %1142 = vmatprep.subr.mxu0 0.0
        %1143 = vmatpush1.msra.mxu0 0.0
        %1144 = vmatprep.subr.mxu0 0.0
        %1145 = vmatpush1.msra.mxu0 %v1109
        %1146 = vmatprep.subr.mxu0 0.0
        %1147 = vmatpush2.msra.mxu0 0.0
        %1148 = vmatprep.subr.mxu0 0.0
        %1149 = vmatpush2.msra.mxu0 0.0
        %1150 = vmatprep.subr.mxu0 0.0
        %1151 = vmatpush2.msra.mxu0 0.0
        %1152 = vmatprep.subr.mxu0 0.0
        %1153 = vmatpush2.msra.mxu0 0.0
        %1154 = vmatprep.subr.mxu0 0.0
        %1155 = vmatpush2.msra.mxu0 0.0
        %1156 = vmatprep.subr.mxu0 0.0
        %1157 = vmatpush2.msra.mxu0 0.0
        %1158 = vmatprep.subr.mxu0 0.0
        %1159 = vmatpush2.msra.mxu0 0.0
        %1160 = vmatprep.subr.mxu0 0.0
        %1161 = vmatpush2.msra.mxu0 0.0
        %1162 = vmatprep.subr.mxu0 0.0
        %1163 = vmatpush2.msra.mxu0 0.0
        %1164 = vmatprep.subr.mxu0 0.0
        %1165 = vmatpush2.msra.mxu0 0.0
        %1166 = vmatprep.subr.mxu0 0.0
        %1167 = vmatpush2.msra.mxu0 0.0
        %1168 = vmatprep.subr.mxu0 0.0
        %1169 = vmatpush2.msra.mxu0 0.0
        %1170 = vmatprep.subr.mxu0 0.0
        %1171 = vmatpush2.msra.mxu0 0.0
        %1172 = vmatprep.subr.mxu0 0.0
        %1173 = vmatpush2.msra.mxu0 0.0
        %1174 = vmatprep.subr.mxu0 0.0
        %1175 = vmatpush2.msra.mxu0 0.0
        %1176 = vmatprep.subr.mxu0 0.0
        %1177 = vmatpush2.msra.mxu0 0.0
        %1178 = vmatprep.mubr.f32.mxu0 0.0
        %1179 = vmatmul.mubr.f32.gmra.mxu0 %v1112
        %v1180 = vpop.f32.mrf.mxu0
        %v1181 = vadd.f32 0.0, %v1180
        %v1182 = vpop.f32.mrf.mxu0
        %1183 = vdwg.mxu0
        %1184 = vrot.lane.b32.xlu0 %v594, 80
        %v1185 = vpop.permute.xlu0 %1184
        %v1187 = vmul.f32 %v1181, %v1185
        %v1189 = vmul.f32 %v1181, %v1026
        %1191 = vrot.lane.b32.xlu0 %v1189, 120
        %v1192 = vpop.permute.xlu0 %1191
        %v1194 = vsub.f32 %v1187, %v1192
        %v1196 = vmul.f32 %v1181, %v942
        %1197 = vrot.lane.b32.xlu0 %v594, 72
        %v1198 = vpop.permute.xlu0 %1197
        %v1200 = vmul.f32 %v1181, %v1198
        %1202 = vrot.lane.b32.xlu0 %v1200, 16
        %v1203 = vpop.permute.xlu0 %1202
        %v1205 = vsub.f32 %v1196, %v1203
        %v1206 = vld [vmem:[#allocation10] sm:$0xff]
        %s1207 = scalar_lea.vmem [#allocation10], 8
        %v1208 = vld [vmem:[%s1207] sm:$0xff]
        %1210 = vrot.lane.b32.xlu0 %v1205, 112
        %v1211 = vpop.permute.xlu0 %1210
        %v1212 = vsel %vm693, %v1211, 0
        %1214 = vmatprep.subr.mxu0 0.0
        %1215 = vmatpush1.msra.mxu0 0.0
        %1216 = vmatprep.subr.mxu0 0.0
        %1217 = vmatpush1.msra.mxu0 0.0
        %1218 = vmatprep.subr.mxu0 0.0
        %1219 = vmatpush1.msra.mxu0 0.0
        %1220 = vmatprep.subr.mxu0 0.0
        %1221 = vmatpush1.msra.mxu0 0.0
        %1222 = vmatprep.subr.mxu0 0.0
        %1223 = vmatpush1.msra.mxu0 0.0
        %1224 = vmatprep.subr.mxu0 0.0
        %1225 = vmatpush1.msra.mxu0 0.0
        %1226 = vmatprep.subr.mxu0 0.0
        %1227 = vmatpush1.msra.mxu0 0.0
        %1228 = vmatprep.subr.mxu0 0.0
        %1229 = vmatpush1.msra.mxu0 0.0
        %1230 = vmatprep.subr.mxu0 0.0
        %1231 = vmatpush1.msra.mxu0 0.0
        %1232 = vmatprep.subr.mxu0 0.0
        %1233 = vmatpush1.msra.mxu0 0.0
        %1234 = vmatprep.subr.mxu0 0.0
        %1235 = vmatpush1.msra.mxu0 0.0
        %1236 = vmatprep.subr.mxu0 0.0
        %1237 = vmatpush1.msra.mxu0 0.0
        %1238 = vmatprep.subr.mxu0 0.0
        %1239 = vmatpush1.msra.mxu0 0.0
        %1240 = vmatprep.subr.mxu0 0.0
        %1241 = vmatpush1.msra.mxu0 0.0
        %1242 = vmatprep.subr.mxu0 0.0
        %1243 = vmatpush1.msra.mxu0 0.0
        %1244 = vmatprep.subr.mxu0 0.0
        %1245 = vmatpush1.msra.mxu0 %v1208
        %1246 = vmatprep.subr.mxu0 0.0
        %1247 = vmatpush2.msra.mxu0 0.0
        %1248 = vmatprep.subr.mxu0 0.0
        %1249 = vmatpush2.msra.mxu0 0.0
        %1250 = vmatprep.subr.mxu0 0.0
        %1251 = vmatpush2.msra.mxu0 0.0
        %1252 = vmatprep.subr.mxu0 0.0
        %1253 = vmatpush2.msra.mxu0 0.0
        %1254 = vmatprep.subr.mxu0 0.0
        %1255 = vmatpush2.msra.mxu0 0.0
        %1256 = vmatprep.subr.mxu0 0.0
        %1257 = vmatpush2.msra.mxu0 0.0
        %1258 = vmatprep.subr.mxu0 0.0
        %1259 = vmatpush2.msra.mxu0 0.0
        %1260 = vmatprep.subr.mxu0 0.0
        %1261 = vmatpush2.msra.mxu0 0.0
        %1262 = vmatprep.subr.mxu0 0.0
        %1263 = vmatpush2.msra.mxu0 0.0
        %1264 = vmatprep.subr.mxu0 0.0
        %1265 = vmatpush2.msra.mxu0 0.0
        %1266 = vmatprep.subr.mxu0 0.0
        %1267 = vmatpush2.msra.mxu0 0.0
        %1268 = vmatprep.subr.mxu0 0.0
        %1269 = vmatpush2.msra.mxu0 0.0
        %1270 = vmatprep.subr.mxu0 0.0
        %1271 = vmatpush2.msra.mxu0 0.0
        %1272 = vmatprep.subr.mxu0 0.0
        %1273 = vmatpush2.msra.mxu0 0.0
        %1274 = vmatprep.subr.mxu0 0.0
        %1275 = vmatpush2.msra.mxu0 0.0
        %1276 = vmatprep.subr.mxu0 0.0
        %1277 = vmatpush2.msra.mxu0 0.0
        %1278 = vmatprep.mubr.f32.mxu0 0.0
        %1279 = vmatmul.mubr.f32.gmra.mxu0 %v1212
        %v1280 = vpop.f32.mrf.mxu0
        %v1281 = vadd.f32 0.0, %v1280
        %v1282 = vpop.f32.mrf.mxu0
        %1283 = vdwg.mxu0
        %1285 = vrot.lane.b32.xlu0 %v1194, 120
        %v1286 = vpop.permute.xlu0 %1285
        %v1287 = vsel %vm693, %v1286, 0
        %1289 = vmatprep.subr.mxu0 0.0
        %1290 = vmatpush1.msra.mxu0 0.0
        %1291 = vmatprep.subr.mxu0 0.0
        %1292 = vmatpush1.msra.mxu0 0.0
        %1293 = vmatprep.subr.mxu0 0.0
        %1294 = vmatpush1.msra.mxu0 0.0
        %1295 = vmatprep.subr.mxu0 0.0
        %1296 = vmatpush1.msra.mxu0 0.0
        %1297 = vmatprep.subr.mxu0 0.0
        %1298 = vmatpush1.msra.mxu0 0.0
        %1299 = vmatprep.subr.mxu0 0.0
        %1300 = vmatpush1.msra.mxu0 0.0
        %1301 = vmatprep.subr.mxu0 0.0
        %1302 = vmatpush1.msra.mxu0 0.0
        %1303 = vmatprep.subr.mxu0 0.0
        %1304 = vmatpush1.msra.mxu0 0.0
        %1305 = vmatprep.subr.mxu0 0.0
        %1306 = vmatpush1.msra.mxu0 0.0
        %1307 = vmatprep.subr.mxu0 0.0
        %1308 = vmatpush1.msra.mxu0 0.0
        %1309 = vmatprep.subr.mxu0 0.0
        %1310 = vmatpush1.msra.mxu0 0.0
        %1311 = vmatprep.subr.mxu0 0.0
        %1312 = vmatpush1.msra.mxu0 0.0
        %1313 = vmatprep.subr.mxu0 0.0
        %1314 = vmatpush1.msra.mxu0 0.0
        %1315 = vmatprep.subr.mxu0 0.0
        %1316 = vmatpush1.msra.mxu0 0.0
        %1317 = vmatprep.subr.mxu0 0.0
        %1318 = vmatpush1.msra.mxu0 0.0
        %1319 = vmatprep.subr.mxu0 0.0
        %1320 = vmatpush1.msra.mxu0 %v1206
        %1321 = vmatprep.subr.mxu0 0.0
        %1322 = vmatpush2.msra.mxu0 0.0
        %1323 = vmatprep.subr.mxu0 0.0
        %1324 = vmatpush2.msra.mxu0 0.0
        %1325 = vmatprep.subr.mxu0 0.0
        %1326 = vmatpush2.msra.mxu0 0.0
        %1327 = vmatprep.subr.mxu0 0.0
        %1328 = vmatpush2.msra.mxu0 0.0
        %1329 = vmatprep.subr.mxu0 0.0
        %1330 = vmatpush2.msra.mxu0 0.0
        %1331 = vmatprep.subr.mxu0 0.0
        %1332 = vmatpush2.msra.mxu0 0.0
        %1333 = vmatprep.subr.mxu0 0.0
        %1334 = vmatpush2.msra.mxu0 0.0
        %1335 = vmatprep.subr.mxu0 0.0
        %1336 = vmatpush2.msra.mxu0 0.0
        %1337 = vmatprep.subr.mxu0 0.0
        %1338 = vmatpush2.msra.mxu0 0.0
        %1339 = vmatprep.subr.mxu0 0.0
        %1340 = vmatpush2.msra.mxu0 0.0
        %1341 = vmatprep.subr.mxu0 0.0
        %1342 = vmatpush2.msra.mxu0 0.0
        %1343 = vmatprep.subr.mxu0 0.0
        %1344 = vmatpush2.msra.mxu0 0.0
        %1345 = vmatprep.subr.mxu0 0.0
        %1346 = vmatpush2.msra.mxu0 0.0
        %1347 = vmatprep.subr.mxu0 0.0
        %1348 = vmatpush2.msra.mxu0 0.0
        %1349 = vmatprep.subr.mxu0 0.0
        %1350 = vmatpush2.msra.mxu0 0.0
        %1351 = vmatprep.subr.mxu0 0.0
        %1352 = vmatpush2.msra.mxu0 0.0
        %1353 = vmatprep.mubr.f32.mxu0 0.0
        %1354 = vmatmul.mubr.f32.gmra.mxu0 %v1287
        %v1355 = vpop.f32.mrf.mxu0
        %v1356 = vadd.f32 %v1281, %v1355
        %v1357 = vpop.f32.mrf.mxu0
        %1358 = vdwg.mxu0
        %s1359 = scalar_lea.vmem [#allocation10], 16
        %v1360 = vld [vmem:[%s1359] sm:$0xff]
        %v1361 = vsel %vm693, %v1194, 0
        %1363 = vmatprep.subr.mxu0 0.0
        %1364 = vmatpush1.msra.mxu0 0.0
        %1365 = vmatprep.subr.mxu0 0.0
        %1366 = vmatpush1.msra.mxu0 0.0
        %1367 = vmatprep.subr.mxu0 0.0
        %1368 = vmatpush1.msra.mxu0 0.0
        %1369 = vmatprep.subr.mxu0 0.0
        %1370 = vmatpush1.msra.mxu0 0.0
        %1371 = vmatprep.subr.mxu0 0.0
        %1372 = vmatpush1.msra.mxu0 0.0
        %1373 = vmatprep.subr.mxu0 0.0
        %1374 = vmatpush1.msra.mxu0 0.0
        %1375 = vmatprep.subr.mxu0 0.0
        %1376 = vmatpush1.msra.mxu0 0.0
        %1377 = vmatprep.subr.mxu0 0.0
        %1378 = vmatpush1.msra.mxu0 0.0
        %1379 = vmatprep.subr.mxu0 0.0
        %1380 = vmatpush1.msra.mxu0 0.0
        %1381 = vmatprep.subr.mxu0 0.0
        %1382 = vmatpush1.msra.mxu0 0.0
        %1383 = vmatprep.subr.mxu0 0.0
        %1384 = vmatpush1.msra.mxu0 0.0
        %1385 = vmatprep.subr.mxu0 0.0
        %1386 = vmatpush1.msra.mxu0 0.0
        %1387 = vmatprep.subr.mxu0 0.0
        %1388 = vmatpush1.msra.mxu0 0.0
        %1389 = vmatprep.subr.mxu0 0.0
        %1390 = vmatpush1.msra.mxu0 0.0
        %1391 = vmatprep.subr.mxu0 0.0
        %1392 = vmatpush1.msra.mxu0 0.0
        %1393 = vmatprep.subr.mxu0 0.0
        %1394 = vmatpush1.msra.mxu0 %v1360
        %1395 = vmatprep.subr.mxu0 0.0
        %1396 = vmatpush2.msra.mxu0 0.0
        %1397 = vmatprep.subr.mxu0 0.0
        %1398 = vmatpush2.msra.mxu0 0.0
        %1399 = vmatprep.subr.mxu0 0.0
        %1400 = vmatpush2.msra.mxu0 0.0
        %1401 = vmatprep.subr.mxu0 0.0
        %1402 = vmatpush2.msra.mxu0 0.0
        %1403 = vmatprep.subr.mxu0 0.0
        %1404 = vmatpush2.msra.mxu0 0.0
        %1405 = vmatprep.subr.mxu0 0.0
        %1406 = vmatpush2.msra.mxu0 0.0
        %1407 = vmatprep.subr.mxu0 0.0
        %1408 = vmatpush2.msra.mxu0 0.0
        %1409 = vmatprep.subr.mxu0 0.0
        %1410 = vmatpush2.msra.mxu0 0.0
        %1411 = vmatprep.subr.mxu0 0.0
        %1412 = vmatpush2.msra.mxu0 0.0
        %1413 = vmatprep.subr.mxu0 0.0
        %1414 = vmatpush2.msra.mxu0 0.0
        %1415 = vmatprep.subr.mxu0 0.0
        %1416 = vmatpush2.msra.mxu0 0.0
        %1417 = vmatprep.subr.mxu0 0.0
        %1418 = vmatpush2.msra.mxu0 0.0
        %1419 = vmatprep.subr.mxu0 0.0
        %1420 = vmatpush2.msra.mxu0 0.0
        %1421 = vmatprep.subr.mxu0 0.0
        %1422 = vmatpush2.msra.mxu0 0.0
        %1423 = vmatprep.subr.mxu0 0.0
        %1424 = vmatpush2.msra.mxu0 0.0
        %1425 = vmatprep.subr.mxu0 0.0
        %1426 = vmatpush2.msra.mxu0 0.0
        %1427 = vmatprep.mubr.f32.mxu0 0.0
        %1428 = vmatmul.mubr.f32.gmra.mxu0 %v1361
        %v1429 = vpop.f32.mrf.mxu0
        %v1430 = vadd.f32 0.0, %v1429
        %v1431 = vpop.f32.mrf.mxu0
        %1432 = vdwg.mxu0
        %v1433 = vadd.f32 %v1356, %v1430
        %1434 = vrot.lane.b32.xlu0 %v507, 88
        %v1435 = vpop.permute.xlu0 %1434
        %vm1436 = vcmask 23552
        %v1437 = vsel %vm1436, %v1435, 0
        %v1440 = vsel %vm1436, %v1433, 0
        %1442 = vmatprep.subr.mxu0 0.0
        %1443 = vmatpush1.xpose.msra.mxu0 0.0
        %1444 = vmatprep.subr.mxu0 0.0
        %1445 = vmatpush1.xpose.msra.mxu0 0.0
        %1446 = vmatprep.subr.mxu0 0.0
        %1447 = vmatpush1.xpose.msra.mxu0 0.0
        %1448 = vmatprep.subr.mxu0 0.0
        %1449 = vmatpush1.xpose.msra.mxu0 0.0
        %1450 = vmatprep.subr.mxu0 0.0
        %1451 = vmatpush1.xpose.msra.mxu0 0.0
        %1452 = vmatprep.subr.mxu0 0.0
        %1453 = vmatpush1.xpose.msra.mxu0 0.0
        %1454 = vmatprep.subr.mxu0 0.0
        %1455 = vmatpush1.xpose.msra.mxu0 0.0
        %1456 = vmatprep.subr.mxu0 0.0
        %1457 = vmatpush1.xpose.msra.mxu0 0.0
        %1458 = vmatprep.subr.mxu0 0.0
        %1459 = vmatpush1.xpose.msra.mxu0 0.0
        %1460 = vmatprep.subr.mxu0 0.0
        %1461 = vmatpush1.xpose.msra.mxu0 0.0
        %1462 = vmatprep.subr.mxu0 0.0
        %1463 = vmatpush1.xpose.msra.mxu0 0.0
        %1464 = vmatprep.subr.mxu0 0.0
        %1465 = vmatpush1.xpose.msra.mxu0 0.0
        %1466 = vmatprep.subr.mxu0 0.0
        %1467 = vmatpush1.xpose.msra.mxu0 0.0
        %1468 = vmatprep.subr.mxu0 0.0
        %1469 = vmatpush1.xpose.msra.mxu0 0.0
        %1470 = vmatprep.subr.mxu0 0.0
        %1471 = vmatpush1.xpose.msra.mxu0 0.0
        %1472 = vmatprep.subr.mxu0 0.0
        %1473 = vmatpush1.xpose.msra.mxu0 %v1440
        %1474 = vmatprep.subr.mxu0 0.0
        %1475 = vmatpush2.xpose.msra.mxu0 0.0
        %1476 = vmatprep.subr.mxu0 0.0
        %1477 = vmatpush2.xpose.msra.mxu0 0.0
        %1478 = vmatprep.subr.mxu0 0.0
        %1479 = vmatpush2.xpose.msra.mxu0 0.0
        %1480 = vmatprep.subr.mxu0 0.0
        %1481 = vmatpush2.xpose.msra.mxu0 0.0
        %1482 = vmatprep.subr.mxu0 0.0
        %1483 = vmatpush2.xpose.msra.mxu0 0.0
        %1484 = vmatprep.subr.mxu0 0.0
        %1485 = vmatpush2.xpose.msra.mxu0 0.0
        %1486 = vmatprep.subr.mxu0 0.0
        %1487 = vmatpush2.xpose.msra.mxu0 0.0
        %1488 = vmatprep.subr.mxu0 0.0
        %1489 = vmatpush2.xpose.msra.mxu0 0.0
        %1490 = vmatprep.subr.mxu0 0.0
        %1491 = vmatpush2.xpose.msra.mxu0 0.0
        %1492 = vmatprep.subr.mxu0 0.0
        %1493 = vmatpush2.xpose.msra.mxu0 0.0
        %1494 = vmatprep.subr.mxu0 0.0
        %1495 = vmatpush2.xpose.msra.mxu0 0.0
        %1496 = vmatprep.subr.mxu0 0.0
        %1497 = vmatpush2.xpose.msra.mxu0 0.0
        %1498 = vmatprep.subr.mxu0 0.0
        %1499 = vmatpush2.xpose.msra.mxu0 0.0
        %1500 = vmatprep.subr.mxu0 0.0
        %1501 = vmatpush2.xpose.msra.mxu0 0.0
        %1502 = vmatprep.subr.mxu0 0.0
        %1503 = vmatpush2.xpose.msra.mxu0 0.0
        %1504 = vmatprep.subr.mxu0 0.0
        %1505 = vmatpush2.xpose.msra.mxu0 0.0
        %1506 = vmatprep.mubr.f32.mxu0 0.0
        %1507 = vmatmul.mubr.f32.gmra.mxu0 %v1437
        %v1508 = vpop.f32.mrf.mxu0
        %v1509 = vadd.f32 0.0, %v1508
        %v1510 = vpop.f32.mrf.mxu0
        %1511 = vdwg.mxu0
        %v1512 = vand.u32 2147483647, %v1509
        %1514 = vrot.lane.b32.xlu0 %v1512, 40
        %v1515 = vpop.permute.xlu0 %1514
        %vm1517 = vcmask 392512
        %1518 = vst.msk [vmem:[#allocation2] sm:$0xff] %vm1517, %v1515
        %1519 = vrot.lane.b32.xlu0 %v507, 85
        %v1520 = vpop.permute.xlu0 %1519
        %1521 = vrot.lane.b32.xlu0 %v1433, 125
        %v1522 = vpop.permute.xlu0 %1521
        %v1523 = vsel %vm1436, %v1520, 0
        %v1525 = vsel %vm1436, %v1522, 0
        %1527 = vmatprep.subr.mxu0 0.0
        %1528 = vmatpush1.xpose.msra.mxu0 0.0
        %1529 = vmatprep.subr.mxu0 0.0
        %1530 = vmatpush1.xpose.msra.mxu0 0.0
        %1531 = vmatprep.subr.mxu0 0.0
        %1532 = vmatpush1.xpose.msra.mxu0 0.0
        %1533 = vmatprep.subr.mxu0 0.0
        %1534 = vmatpush1.xpose.msra.mxu0 0.0
        %1535 = vmatprep.subr.mxu0 0.0
        %1536 = vmatpush1.xpose.msra.mxu0 0.0
        %1537 = vmatprep.subr.mxu0 0.0
        %1538 = vmatpush1.xpose.msra.mxu0 0.0
        %1539 = vmatprep.subr.mxu0 0.0
        %1540 = vmatpush1.xpose.msra.mxu0 0.0
        %1541 = vmatprep.subr.mxu0 0.0
        %1542 = vmatpush1.xpose.msra.mxu0 0.0
        %1543 = vmatprep.subr.mxu0 0.0
        %1544 = vmatpush1.xpose.msra.mxu0 0.0
        %1545 = vmatprep.subr.mxu0 0.0
        %1546 = vmatpush1.xpose.msra.mxu0 0.0
        %1547 = vmatprep.subr.mxu0 0.0
        %1548 = vmatpush1.xpose.msra.mxu0 0.0
        %1549 = vmatprep.subr.mxu0 0.0
        %1550 = vmatpush1.xpose.msra.mxu0 0.0
        %1551 = vmatprep.subr.mxu0 0.0
        %1552 = vmatpush1.xpose.msra.mxu0 0.0
        %1553 = vmatprep.subr.mxu0 0.0
        %1554 = vmatpush1.xpose.msra.mxu0 0.0
        %1555 = vmatprep.subr.mxu0 0.0
        %1556 = vmatpush1.xpose.msra.mxu0 0.0
        %1557 = vmatprep.subr.mxu0 0.0
        %1558 = vmatpush1.xpose.msra.mxu0 %v1525
        %1559 = vmatprep.subr.mxu0 0.0
        %1560 = vmatpush2.xpose.msra.mxu0 0.0
        %1561 = vmatprep.subr.mxu0 0.0
        %1562 = vmatpush2.xpose.msra.mxu0 0.0
        %1563 = vmatprep.subr.mxu0 0.0
        %1564 = vmatpush2.xpose.msra.mxu0 0.0
        %1565 = vmatprep.subr.mxu0 0.0
        %1566 = vmatpush2.xpose.msra.mxu0 0.0
        %1567 = vmatprep.subr.mxu0 0.0
        %1568 = vmatpush2.xpose.msra.mxu0 0.0
        %1569 = vmatprep.subr.mxu0 0.0
        %1570 = vmatpush2.xpose.msra.mxu0 0.0
        %1571 = vmatprep.subr.mxu0 0.0
        %1572 = vmatpush2.xpose.msra.mxu0 0.0
        %1573 = vmatprep.subr.mxu0 0.0
        %1574 = vmatpush2.xpose.msra.mxu0 0.0
        %1575 = vmatprep.subr.mxu0 0.0
        %1576 = vmatpush2.xpose.msra.mxu0 0.0
        %1577 = vmatprep.subr.mxu0 0.0
        %1578 = vmatpush2.xpose.msra.mxu0 0.0
        %1579 = vmatprep.subr.mxu0 0.0
        %1580 = vmatpush2.xpose.msra.mxu0 0.0
        %1581 = vmatprep.subr.mxu0 0.0
        %1582 = vmatpush2.xpose.msra.mxu0 0.0
        %1583 = vmatprep.subr.mxu0 0.0
        %1584 = vmatpush2.xpose.msra.mxu0 0.0
        %1585 = vmatprep.subr.mxu0 0.0
        %1586 = vmatpush2.xpose.msra.mxu0 0.0
        %1587 = vmatprep.subr.mxu0 0.0
        %1588 = vmatpush2.xpose.msra.mxu0 0.0
        %1589 = vmatprep.subr.mxu0 0.0
        %1590 = vmatpush2.xpose.msra.mxu0 0.0
        %1591 = vmatprep.mubr.f32.mxu0 0.0
        %1592 = vmatmul.mubr.f32.gmra.mxu0 %v1523
        %v1593 = vpop.f32.mrf.mxu0
        %v1594 = vadd.f32 0.0, %v1593
        %v1595 = vpop.f32.mrf.mxu0
        %1596 = vdwg.mxu0
        %v1597 = vand.u32 2147483647, %v1594
        %1599 = vrot.lane.b32.xlu0 %v1597, 48
        %v1600 = vpop.permute.xlu0 %1599
        %vm1602 = vcmask 458112
        %1603 = vst.msk [vmem:[#allocation2] sm:$0xff] %vm1602, %v1600
        %1604 = vrot.lane.b32.xlu0 %v507, 82
        %v1605 = vpop.permute.xlu0 %1604
        %1606 = vrot.lane.b32.xlu0 %v1433, 122
        %v1607 = vpop.permute.xlu0 %1606
        %v1608 = vsel %vm1436, %v1605, 0
        %v1610 = vsel %vm1436, %v1607, 0
        %1612 = vmatprep.subr.mxu0 0.0
        %1613 = vmatpush1.xpose.msra.mxu0 0.0
        %1614 = vmatprep.subr.mxu0 0.0
        %1615 = vmatpush1.xpose.msra.mxu0 0.0
        %1616 = vmatprep.subr.mxu0 0.0
        %1617 = vmatpush1.xpose.msra.mxu0 0.0
        %1618 = vmatprep.subr.mxu0 0.0
        %1619 = vmatpush1.xpose.msra.mxu0 0.0
        %1620 = vmatprep.subr.mxu0 0.0
        %1621 = vmatpush1.xpose.msra.mxu0 0.0
        %1622 = vmatprep.subr.mxu0 0.0
        %1623 = vmatpush1.xpose.msra.mxu0 0.0
        %1624 = vmatprep.subr.mxu0 0.0
        %1625 = vmatpush1.xpose.msra.mxu0 0.0
        %1626 = vmatprep.subr.mxu0 0.0
        %1627 = vmatpush1.xpose.msra.mxu0 0.0
        %1628 = vmatprep.subr.mxu0 0.0
        %1629 = vmatpush1.xpose.msra.mxu0 0.0
        %1630 = vmatprep.subr.mxu0 0.0
        %1631 = vmatpush1.xpose.msra.mxu0 0.0
        %1632 = vmatprep.subr.mxu0 0.0
        %1633 = vmatpush1.xpose.msra.mxu0 0.0
        %1634 = vmatprep.subr.mxu0 0.0
        %1635 = vmatpush1.xpose.msra.mxu0 0.0
        %1636 = vmatprep.subr.mxu0 0.0
        %1637 = vmatpush1.xpose.msra.mxu0 0.0
        %1638 = vmatprep.subr.mxu0 0.0
        %1639 = vmatpush1.xpose.msra.mxu0 0.0
        %1640 = vmatprep.subr.mxu0 0.0
        %1641 = vmatpush1.xpose.msra.mxu0 0.0
        %1642 = vmatprep.subr.mxu0 0.0
        %1643 = vmatpush1.xpose.msra.mxu0 %v1610
        %1644 = vmatprep.subr.mxu0 0.0
        %1645 = vmatpush2.xpose.msra.mxu0 0.0
        %1646 = vmatprep.subr.mxu0 0.0
        %1647 = vmatpush2.xpose.msra.mxu0 0.0
        %1648 = vmatprep.subr.mxu0 0.0
        %1649 = vmatpush2.xpose.msra.mxu0 0.0
        %1650 = vmatprep.subr.mxu0 0.0
        %1651 = vmatpush2.xpose.msra.mxu0 0.0
        %1652 = vmatprep.subr.mxu0 0.0
        %1653 = vmatpush2.xpose.msra.mxu0 0.0
        %1654 = vmatprep.subr.mxu0 0.0
        %1655 = vmatpush2.xpose.msra.mxu0 0.0
        %1656 = vmatprep.subr.mxu0 0.0
        %1657 = vmatpush2.xpose.msra.mxu0 0.0
        %1658 = vmatprep.subr.mxu0 0.0
        %1659 = vmatpush2.xpose.msra.mxu0 0.0
        %1660 = vmatprep.subr.mxu0 0.0
        %1661 = vmatpush2.xpose.msra.mxu0 0.0
        %1662 = vmatprep.subr.mxu0 0.0
        %1663 = vmatpush2.xpose.msra.mxu0 0.0
        %1664 = vmatprep.subr.mxu0 0.0
        %1665 = vmatpush2.xpose.msra.mxu0 0.0
        %1666 = vmatprep.subr.mxu0 0.0
        %1667 = vmatpush2.xpose.msra.mxu0 0.0
        %1668 = vmatprep.subr.mxu0 0.0
        %1669 = vmatpush2.xpose.msra.mxu0 0.0
        %1670 = vmatprep.subr.mxu0 0.0
        %1671 = vmatpush2.xpose.msra.mxu0 0.0
        %1672 = vmatprep.subr.mxu0 0.0
        %1673 = vmatpush2.xpose.msra.mxu0 0.0
        %1674 = vmatprep.subr.mxu0 0.0
        %1675 = vmatpush2.xpose.msra.mxu0 0.0
        %1676 = vmatprep.mubr.f32.mxu0 0.0
        %1677 = vmatmul.mubr.f32.gmra.mxu0 %v1608
        %v1678 = vpop.f32.mrf.mxu0
        %v1679 = vadd.f32 0.0, %v1678
        %v1680 = vpop.f32.mrf.mxu0
        %1681 = vdwg.mxu0
        %v1682 = vand.u32 2147483647, %v1679
        %1684 = vrot.lane.b32.xlu0 %v1682, 56
        %v1685 = vpop.permute.xlu0 %1684
        %vm1687 = vcmask 523712
        %1688 = vst.msk [vmem:[#allocation2] sm:$0xff] %vm1687, %v1685
        %1689 = vrot.lane.b32.xlu0 %v507, 79
        %v1690 = vpop.permute.xlu0 %1689
        %1691 = vrot.lane.b32.xlu0 %v1433, 119
        %v1692 = vpop.permute.xlu0 %1691
        %v1693 = vsel %vm1436, %v1690, 0
        %v1695 = vsel %vm1436, %v1692, 0
        %1697 = vmatprep.subr.mxu0 0.0
        %1698 = vmatpush1.xpose.msra.mxu0 0.0
        %1699 = vmatprep.subr.mxu0 0.0
        %1700 = vmatpush1.xpose.msra.mxu0 0.0
        %1701 = vmatprep.subr.mxu0 0.0
        %1702 = vmatpush1.xpose.msra.mxu0 0.0
        %1703 = vmatprep.subr.mxu0 0.0
        %1704 = vmatpush1.xpose.msra.mxu0 0.0
        %1705 = vmatprep.subr.mxu0 0.0
        %1706 = vmatpush1.xpose.msra.mxu0 0.0
        %1707 = vmatprep.subr.mxu0 0.0
        %1708 = vmatpush1.xpose.msra.mxu0 0.0
        %1709 = vmatprep.subr.mxu0 0.0
        %1710 = vmatpush1.xpose.msra.mxu0 0.0
        %1711 = vmatprep.subr.mxu0 0.0
        %1712 = vmatpush1.xpose.msra.mxu0 0.0
        %1713 = vmatprep.subr.mxu0 0.0
        %1714 = vmatpush1.xpose.msra.mxu0 0.0
        %1715 = vmatprep.subr.mxu0 0.0
        %1716 = vmatpush1.xpose.msra.mxu0 0.0
        %1717 = vmatprep.subr.mxu0 0.0
        %1718 = vmatpush1.xpose.msra.mxu0 0.0
        %1719 = vmatprep.subr.mxu0 0.0
        %1720 = vmatpush1.xpose.msra.mxu0 0.0
        %1721 = vmatprep.subr.mxu0 0.0
        %1722 = vmatpush1.xpose.msra.mxu0 0.0
        %1723 = vmatprep.subr.mxu0 0.0
        %1724 = vmatpush1.xpose.msra.mxu0 0.0
        %1725 = vmatprep.subr.mxu0 0.0
        %1726 = vmatpush1.xpose.msra.mxu0 0.0
        %1727 = vmatprep.subr.mxu0 0.0
        %1728 = vmatpush1.xpose.msra.mxu0 %v1695
        %1729 = vmatprep.subr.mxu0 0.0
        %1730 = vmatpush2.xpose.msra.mxu0 0.0
        %1731 = vmatprep.subr.mxu0 0.0
        %1732 = vmatpush2.xpose.msra.mxu0 0.0
        %1733 = vmatprep.subr.mxu0 0.0
        %1734 = vmatpush2.xpose.msra.mxu0 0.0
        %1735 = vmatprep.subr.mxu0 0.0
        %1736 = vmatpush2.xpose.msra.mxu0 0.0
        %1737 = vmatprep.subr.mxu0 0.0
        %1738 = vmatpush2.xpose.msra.mxu0 0.0
        %1739 = vmatprep.subr.mxu0 0.0
        %1740 = vmatpush2.xpose.msra.mxu0 0.0
        %1741 = vmatprep.subr.mxu0 0.0
        %1742 = vmatpush2.xpose.msra.mxu0 0.0
        %1743 = vmatprep.subr.mxu0 0.0
        %1744 = vmatpush2.xpose.msra.mxu0 0.0
        %1745 = vmatprep.subr.mxu0 0.0
        %1746 = vmatpush2.xpose.msra.mxu0 0.0
        %1747 = vmatprep.subr.mxu0 0.0
        %1748 = vmatpush2.xpose.msra.mxu0 0.0
        %1749 = vmatprep.subr.mxu0 0.0
        %1750 = vmatpush2.xpose.msra.mxu0 0.0
        %1751 = vmatprep.subr.mxu0 0.0
        %1752 = vmatpush2.xpose.msra.mxu0 0.0
        %1753 = vmatprep.subr.mxu0 0.0
        %1754 = vmatpush2.xpose.msra.mxu0 0.0
        %1755 = vmatprep.subr.mxu0 0.0
        %1756 = vmatpush2.xpose.msra.mxu0 0.0
        %1757 = vmatprep.subr.mxu0 0.0
        %1758 = vmatpush2.xpose.msra.mxu0 0.0
        %1759 = vmatprep.subr.mxu0 0.0
        %1760 = vmatpush2.xpose.msra.mxu0 0.0
        %1761 = vmatprep.mubr.f32.mxu0 0.0
        %1762 = vmatmul.mubr.f32.gmra.mxu0 %v1693
        %v1763 = vpop.f32.mrf.mxu0
        %v1764 = vadd.f32 0.0, %v1763
        %v1765 = vpop.f32.mrf.mxu0
        %1766 = vdwg.mxu0
        %v1767 = vand.u32 2147483647, %v1764
        %1769 = vrot.lane.b32.xlu0 %v1767, 64
        %v1770 = vpop.permute.xlu0 %1769
        %vm1772 = vcmask 589312
        %1773 = vst.msk [vmem:[#allocation2] sm:$0xff] %vm1772, %v1770
        %1774 = vrot.lane.b32.xlu0 %v507, 76
        %v1775 = vpop.permute.xlu0 %1774
        %1776 = vrot.lane.b32.xlu0 %v1433, 116
        %v1777 = vpop.permute.xlu0 %1776
        %v1778 = vsel %vm1436, %v1775, 0
        %v1780 = vsel %vm1436, %v1777, 0
        %1782 = vmatprep.subr.mxu0 0.0
        %1783 = vmatpush1.xpose.msra.mxu0 0.0
        %1784 = vmatprep.subr.mxu0 0.0
        %1785 = vmatpush1.xpose.msra.mxu0 0.0
        %1786 = vmatprep.subr.mxu0 0.0
        %1787 = vmatpush1.xpose.msra.mxu0 0.0
        %1788 = vmatprep.subr.mxu0 0.0
        %1789 = vmatpush1.xpose.msra.mxu0 0.0
        %1790 = vmatprep.subr.mxu0 0.0
        %1791 = vmatpush1.xpose.msra.mxu0 0.0
        %1792 = vmatprep.subr.mxu0 0.0
        %1793 = vmatpush1.xpose.msra.mxu0 0.0
        %1794 = vmatprep.subr.mxu0 0.0
        %1795 = vmatpush1.xpose.msra.mxu0 0.0
        %1796 = vmatprep.subr.mxu0 0.0
        %1797 = vmatpush1.xpose.msra.mxu0 0.0
        %1798 = vmatprep.subr.mxu0 0.0
        %1799 = vmatpush1.xpose.msra.mxu0 0.0
        %1800 = vmatprep.subr.mxu0 0.0
        %1801 = vmatpush1.xpose.msra.mxu0 0.0
        %1802 = vmatprep.subr.mxu0 0.0
        %1803 = vmatpush1.xpose.msra.mxu0 0.0
        %1804 = vmatprep.subr.mxu0 0.0
        %1805 = vmatpush1.xpose.msra.mxu0 0.0
        %1806 = vmatprep.subr.mxu0 0.0
        %1807 = vmatpush1.xpose.msra.mxu0 0.0
        %1808 = vmatprep.subr.mxu0 0.0
        %1809 = vmatpush1.xpose.msra.mxu0 0.0
        %1810 = vmatprep.subr.mxu0 0.0
        %1811 = vmatpush1.xpose.msra.mxu0 0.0
        %1812 = vmatprep.subr.mxu0 0.0
        %1813 = vmatpush1.xpose.msra.mxu0 %v1780
        %1814 = vmatprep.subr.mxu0 0.0
        %1815 = vmatpush2.xpose.msra.mxu0 0.0
        %1816 = vmatprep.subr.mxu0 0.0
        %1817 = vmatpush2.xpose.msra.mxu0 0.0
        %1818 = vmatprep.subr.mxu0 0.0
        %1819 = vmatpush2.xpose.msra.mxu0 0.0
        %1820 = vmatprep.subr.mxu0 0.0
        %1821 = vmatpush2.xpose.msra.mxu0 0.0
        %1822 = vmatprep.subr.mxu0 0.0
        %1823 = vmatpush2.xpose.msra.mxu0 0.0
        %1824 = vmatprep.subr.mxu0 0.0
        %1825 = vmatpush2.xpose.msra.mxu0 0.0
        %1826 = vmatprep.subr.mxu0 0.0
        %1827 = vmatpush2.xpose.msra.mxu0 0.0
        %1828 = vmatprep.subr.mxu0 0.0
        %1829 = vmatpush2.xpose.msra.mxu0 0.0
        %1830 = vmatprep.subr.mxu0 0.0
        %1831 = vmatpush2.xpose.msra.mxu0 0.0
        %1832 = vmatprep.subr.mxu0 0.0
        %1833 = vmatpush2.xpose.msra.mxu0 0.0
        %1834 = vmatprep.subr.mxu0 0.0
        %1835 = vmatpush2.xpose.msra.mxu0 0.0
        %1836 = vmatprep.subr.mxu0 0.0
        %1837 = vmatpush2.xpose.msra.mxu0 0.0
        %1838 = vmatprep.subr.mxu0 0.0
        %1839 = vmatpush2.xpose.msra.mxu0 0.0
        %1840 = vmatprep.subr.mxu0 0.0
        %1841 = vmatpush2.xpose.msra.mxu0 0.0
        %1842 = vmatprep.subr.mxu0 0.0
        %1843 = vmatpush2.xpose.msra.mxu0 0.0
        %1844 = vmatprep.subr.mxu0 0.0
        %1845 = vmatpush2.xpose.msra.mxu0 0.0
        %1846 = vmatprep.mubr.f32.mxu0 0.0
        %1847 = vmatmul.mubr.f32.gmra.mxu0 %v1778
        %v1848 = vpop.f32.mrf.mxu0
        %v1849 = vadd.f32 0.0, %v1848
        %v1850 = vpop.f32.mrf.mxu0
        %1851 = vdwg.mxu0
        %v1852 = vand.u32 2147483647, %v1849
        %1854 = vrot.lane.b32.xlu0 %v1852, 72
        %v1855 = vpop.permute.xlu0 %1854
        %vm1857 = vcmask 654912
        %1858 = vst.msk [vmem:[#allocation2] sm:$0xff] %vm1857, %v1855
        %1859 = vrot.lane.b32.xlu0 %v507, 73
        %v1860 = vpop.permute.xlu0 %1859
        %1861 = vrot.lane.b32.xlu0 %v1433, 113
        %v1862 = vpop.permute.xlu0 %1861
        %v1863 = vsel %vm1436, %v1860, 0
        %v1865 = vsel %vm1436, %v1862, 0
        %1867 = vmatprep.subr.mxu0 0.0
        %1868 = vmatpush1.xpose.msra.mxu0 0.0
        %1869 = vmatprep.subr.mxu0 0.0
        %1870 = vmatpush1.xpose.msra.mxu0 0.0
        %1871 = vmatprep.subr.mxu0 0.0
        %1872 = vmatpush1.xpose.msra.mxu0 0.0
        %1873 = vmatprep.subr.mxu0 0.0
        %1874 = vmatpush1.xpose.msra.mxu0 0.0
        %1875 = vmatprep.subr.mxu0 0.0
        %1876 = vmatpush1.xpose.msra.mxu0 0.0
        %1877 = vmatprep.subr.mxu0 0.0
        %1878 = vmatpush1.xpose.msra.mxu0 0.0
        %1879 = vmatprep.subr.mxu0 0.0
        %1880 = vmatpush1.xpose.msra.mxu0 0.0
        %1881 = vmatprep.subr.mxu0 0.0
        %1882 = vmatpush1.xpose.msra.mxu0 0.0
        %1883 = vmatprep.subr.mxu0 0.0
        %1884 = vmatpush1.xpose.msra.mxu0 0.0
        %1885 = vmatprep.subr.mxu0 0.0
        %1886 = vmatpush1.xpose.msra.mxu0 0.0
        %1887 = vmatprep.subr.mxu0 0.0
        %1888 = vmatpush1.xpose.msra.mxu0 0.0
        %1889 = vmatprep.subr.mxu0 0.0
        %1890 = vmatpush1.xpose.msra.mxu0 0.0
        %1891 = vmatprep.subr.mxu0 0.0
        %1892 = vmatpush1.xpose.msra.mxu0 0.0
        %1893 = vmatprep.subr.mxu0 0.0
        %1894 = vmatpush1.xpose.msra.mxu0 0.0
        %1895 = vmatprep.subr.mxu0 0.0
        %1896 = vmatpush1.xpose.msra.mxu0 0.0
        %1897 = vmatprep.subr.mxu0 0.0
        %1898 = vmatpush1.xpose.msra.mxu0 %v1865
        %1899 = vmatprep.subr.mxu0 0.0
        %1900 = vmatpush2.xpose.msra.mxu0 0.0
        %1901 = vmatprep.subr.mxu0 0.0
        %1902 = vmatpush2.xpose.msra.mxu0 0.0
        %1903 = vmatprep.subr.mxu0 0.0
        %1904 = vmatpush2.xpose.msra.mxu0 0.0
        %1905 = vmatprep.subr.mxu0 0.0
        %1906 = vmatpush2.xpose.msra.mxu0 0.0
        %1907 = vmatprep.subr.mxu0 0.0
        %1908 = vmatpush2.xpose.msra.mxu0 0.0
        %1909 = vmatprep.subr.mxu0 0.0
        %1910 = vmatpush2.xpose.msra.mxu0 0.0
        %1911 = vmatprep.subr.mxu0 0.0
        %1912 = vmatpush2.xpose.msra.mxu0 0.0
        %1913 = vmatprep.subr.mxu0 0.0
        %1914 = vmatpush2.xpose.msra.mxu0 0.0
        %1915 = vmatprep.subr.mxu0 0.0
        %1916 = vmatpush2.xpose.msra.mxu0 0.0
        %1917 = vmatprep.subr.mxu0 0.0
        %1918 = vmatpush2.xpose.msra.mxu0 0.0
        %1919 = vmatprep.subr.mxu0 0.0
        %1920 = vmatpush2.xpose.msra.mxu0 0.0
        %1921 = vmatprep.subr.mxu0 0.0
        %1922 = vmatpush2.xpose.msra.mxu0 0.0
        %1923 = vmatprep.subr.mxu0 0.0
        %1924 = vmatpush2.xpose.msra.mxu0 0.0
        %1925 = vmatprep.subr.mxu0 0.0
        %1926 = vmatpush2.xpose.msra.mxu0 0.0
        %1927 = vmatprep.subr.mxu0 0.0
        %1928 = vmatpush2.xpose.msra.mxu0 0.0
        %1929 = vmatprep.subr.mxu0 0.0
        %1930 = vmatpush2.xpose.msra.mxu0 0.0
        %1931 = vmatprep.mubr.f32.mxu0 0.0
        %1932 = vmatmul.mubr.f32.gmra.mxu0 %v1863
        %v1933 = vpop.f32.mrf.mxu0
        %v1934 = vadd.f32 0.0, %v1933
        %v1935 = vpop.f32.mrf.mxu0
        %1936 = vdwg.mxu0
        %v1937 = vand.u32 2147483647, %v1934
        %1939 = vrot.lane.b32.xlu0 %v1937, 80
        %v1940 = vpop.permute.xlu0 %1939
        %vm1942 = vcmask 720512
        %1943 = vst.msk [vmem:[#allocation2] sm:$0xff] %vm1942, %v1940
        %1944 = vrot.lane.b32.xlu0 %v507, 70
        %v1945 = vpop.permute.xlu0 %1944
        %1946 = vrot.lane.b32.xlu0 %v1433, 110
        %v1947 = vpop.permute.xlu0 %1946
        %v1948 = vsel %vm1436, %v1945, 0
        %v1950 = vsel %vm1436, %v1947, 0
        %1952 = vmatprep.subr.mxu0 0.0
        %1953 = vmatpush1.xpose.msra.mxu0 0.0
        %1954 = vmatprep.subr.mxu0 0.0
        %1955 = vmatpush1.xpose.msra.mxu0 0.0
        %1956 = vmatprep.subr.mxu0 0.0
        %1957 = vmatpush1.xpose.msra.mxu0 0.0
        %1958 = vmatprep.subr.mxu0 0.0
        %1959 = vmatpush1.xpose.msra.mxu0 0.0
        %1960 = vmatprep.subr.mxu0 0.0
        %1961 = vmatpush1.xpose.msra.mxu0 0.0
        %1962 = vmatprep.subr.mxu0 0.0
        %1963 = vmatpush1.xpose.msra.mxu0 0.0
        %1964 = vmatprep.subr.mxu0 0.0
        %1965 = vmatpush1.xpose.msra.mxu0 0.0
        %1966 = vmatprep.subr.mxu0 0.0
        %1967 = vmatpush1.xpose.msra.mxu0 0.0
        %1968 = vmatprep.subr.mxu0 0.0
        %1969 = vmatpush1.xpose.msra.mxu0 0.0
        %1970 = vmatprep.subr.mxu0 0.0
        %1971 = vmatpush1.xpose.msra.mxu0 0.0
        %1972 = vmatprep.subr.mxu0 0.0
        %1973 = vmatpush1.xpose.msra.mxu0 0.0
        %1974 = vmatprep.subr.mxu0 0.0
        %1975 = vmatpush1.xpose.msra.mxu0 0.0
        %1976 = vmatprep.subr.mxu0 0.0
        %1977 = vmatpush1.xpose.msra.mxu0 0.0
        %1978 = vmatprep.subr.mxu0 0.0
        %1979 = vmatpush1.xpose.msra.mxu0 0.0
        %1980 = vmatprep.subr.mxu0 0.0
        %1981 = vmatpush1.xpose.msra.mxu0 0.0
        %1982 = vmatprep.subr.mxu0 0.0
        %1983 = vmatpush1.xpose.msra.mxu0 %v1950
        %1984 = vmatprep.subr.mxu0 0.0
        %1985 = vmatpush2.xpose.msra.mxu0 0.0
        %1986 = vmatprep.subr.mxu0 0.0
        %1987 = vmatpush2.xpose.msra.mxu0 0.0
        %1988 = vmatprep.subr.mxu0 0.0
        %1989 = vmatpush2.xpose.msra.mxu0 0.0
        %1990 = vmatprep.subr.mxu0 0.0
        %1991 = vmatpush2.xpose.msra.mxu0 0.0
        %1992 = vmatprep.subr.mxu0 0.0
        %1993 = vmatpush2.xpose.msra.mxu0 0.0
        %1994 = vmatprep.subr.mxu0 0.0
        %1995 = vmatpush2.xpose.msra.mxu0 0.0
        %1996 = vmatprep.subr.mxu0 0.0
        %1997 = vmatpush2.xpose.msra.mxu0 0.0
        %1998 = vmatprep.subr.mxu0 0.0
        %1999 = vmatpush2.xpose.msra.mxu0 0.0
        %2000 = vmatprep.subr.mxu0 0.0
        %2001 = vmatpush2.xpose.msra.mxu0 0.0
        %2002 = vmatprep.subr.mxu0 0.0
        %2003 = vmatpush2.xpose.msra.mxu0 0.0
        %2004 = vmatprep.subr.mxu0 0.0
        %2005 = vmatpush2.xpose.msra.mxu0 0.0
        %2006 = vmatprep.subr.mxu0 0.0
        %2007 = vmatpush2.xpose.msra.mxu0 0.0
        %2008 = vmatprep.subr.mxu0 0.0
        %2009 = vmatpush2.xpose.msra.mxu0 0.0
        %2010 = vmatprep.subr.mxu0 0.0
        %2011 = vmatpush2.xpose.msra.mxu0 0.0
        %2012 = vmatprep.subr.mxu0 0.0
        %2013 = vmatpush2.xpose.msra.mxu0 0.0
        %2014 = vmatprep.subr.mxu0 0.0
        %2015 = vmatpush2.xpose.msra.mxu0 0.0
        %2016 = vmatprep.mubr.f32.mxu0 0.0
        %2017 = vmatmul.mubr.f32.gmra.mxu0 %v1948
        %v2018 = vpop.f32.mrf.mxu0
        %v2019 = vadd.f32 0.0, %v2018
        %v2020 = vpop.f32.mrf.mxu0
        %2021 = vdwg.mxu0
        %v2022 = vand.u32 2147483647, %v2019
        %2024 = vrot.lane.b32.xlu0 %v2022, 88
        %v2025 = vpop.permute.xlu0 %2024
        %vm2027 = vcmask 786112
        %2028 = vst.msk [vmem:[#allocation2] sm:$0xff] %vm2027, %v2025
        %2029 = vrot.lane.b32.xlu0 %v507, 67
        %v2030 = vpop.permute.xlu0 %2029
        %2031 = vrot.lane.b32.xlu0 %v1433, 107
        %v2032 = vpop.permute.xlu0 %2031
        %v2033 = vsel %vm1436, %v2030, 0
        %v2035 = vsel %vm1436, %v2032, 0
        %2037 = vmatprep.subr.mxu0 0.0
        %2038 = vmatpush1.xpose.msra.mxu0 0.0
        %2039 = vmatprep.subr.mxu0 0.0
        %2040 = vmatpush1.xpose.msra.mxu0 0.0
        %2041 = vmatprep.subr.mxu0 0.0
        %2042 = vmatpush1.xpose.msra.mxu0 0.0
        %2043 = vmatprep.subr.mxu0 0.0
        %2044 = vmatpush1.xpose.msra.mxu0 0.0
        %2045 = vmatprep.subr.mxu0 0.0
        %2046 = vmatpush1.xpose.msra.mxu0 0.0
        %2047 = vmatprep.subr.mxu0 0.0
        %2048 = vmatpush1.xpose.msra.mxu0 0.0
        %2049 = vmatprep.subr.mxu0 0.0
        %2050 = vmatpush1.xpose.msra.mxu0 0.0
        %2051 = vmatprep.subr.mxu0 0.0
        %2052 = vmatpush1.xpose.msra.mxu0 0.0
        %2053 = vmatprep.subr.mxu0 0.0
        %2054 = vmatpush1.xpose.msra.mxu0 0.0
        %2055 = vmatprep.subr.mxu0 0.0
        %2056 = vmatpush1.xpose.msra.mxu0 0.0
        %2057 = vmatprep.subr.mxu0 0.0
        %2058 = vmatpush1.xpose.msra.mxu0 0.0
        %2059 = vmatprep.subr.mxu0 0.0
        %2060 = vmatpush1.xpose.msra.mxu0 0.0
        %2061 = vmatprep.subr.mxu0 0.0
        %2062 = vmatpush1.xpose.msra.mxu0 0.0
        %2063 = vmatprep.subr.mxu0 0.0
        %2064 = vmatpush1.xpose.msra.mxu0 0.0
        %2065 = vmatprep.subr.mxu0 0.0
        %2066 = vmatpush1.xpose.msra.mxu0 0.0
        %2067 = vmatprep.subr.mxu0 0.0
        %2068 = vmatpush1.xpose.msra.mxu0 %v2035
        %2069 = vmatprep.subr.mxu0 0.0
        %2070 = vmatpush2.xpose.msra.mxu0 0.0
        %2071 = vmatprep.subr.mxu0 0.0
        %2072 = vmatpush2.xpose.msra.mxu0 0.0
        %2073 = vmatprep.subr.mxu0 0.0
        %2074 = vmatpush2.xpose.msra.mxu0 0.0
        %2075 = vmatprep.subr.mxu0 0.0
        %2076 = vmatpush2.xpose.msra.mxu0 0.0
        %2077 = vmatprep.subr.mxu0 0.0
        %2078 = vmatpush2.xpose.msra.mxu0 0.0
        %2079 = vmatprep.subr.mxu0 0.0
        %2080 = vmatpush2.xpose.msra.mxu0 0.0
        %2081 = vmatprep.subr.mxu0 0.0
        %2082 = vmatpush2.xpose.msra.mxu0 0.0
        %2083 = vmatprep.subr.mxu0 0.0
        %2084 = vmatpush2.xpose.msra.mxu0 0.0
        %2085 = vmatprep.subr.mxu0 0.0
        %2086 = vmatpush2.xpose.msra.mxu0 0.0
        %2087 = vmatprep.subr.mxu0 0.0
        %2088 = vmatpush2.xpose.msra.mxu0 0.0
        %2089 = vmatprep.subr.mxu0 0.0
        %2090 = vmatpush2.xpose.msra.mxu0 0.0
        %2091 = vmatprep.subr.mxu0 0.0
        %2092 = vmatpush2.xpose.msra.mxu0 0.0
        %2093 = vmatprep.subr.mxu0 0.0
        %2094 = vmatpush2.xpose.msra.mxu0 0.0
        %2095 = vmatprep.subr.mxu0 0.0
        %2096 = vmatpush2.xpose.msra.mxu0 0.0
        %2097 = vmatprep.subr.mxu0 0.0
        %2098 = vmatpush2.xpose.msra.mxu0 0.0
        %2099 = vmatprep.subr.mxu0 0.0
        %2100 = vmatpush2.xpose.msra.mxu0 0.0
        %2101 = vmatprep.mubr.f32.mxu0 0.0
        %2102 = vmatmul.mubr.f32.gmra.mxu0 %v2033
        %v2103 = vpop.f32.mrf.mxu0
        %v2104 = vadd.f32 0.0, %v2103
        %v2105 = vpop.f32.mrf.mxu0
        %2106 = vdwg.mxu0
        %v2107 = vand.u32 2147483647, %v2104
        %2109 = vrot.lane.b32.xlu0 %v2107, 96
        %v2110 = vpop.permute.xlu0 %2109
        %vm2112 = vcmask 851712
        %2113 = vst.msk [vmem:[#allocation2] sm:$0xff] %vm2112, %v2110
        %v2114 = vld [vmem:[#allocation2] sm:$0xff]
        %vm2115 = vcmask 850944
        %v2116 = vsel %vm2115, %v2114, -inf
        %2117 = vmax.xlane.f32.xlu0 %v2116
        %v2118 = vpop.xlane.xlu0 %2117
        %v2119 = vsub.f32 %v2114, %v2118
        %v2120 = vmul.f32 %v2119, 1.442695
        %v2121 = vpow.pop %v2120
        %v2122 = vld [vmem:[#allocation12] sm:$0xff]
        %v2123 = vld [vmem:[#allocation12 + $0x8] sm:$0xff]
        %v2124 = vld [vmem:[#allocation12 + $0x10] sm:$0xff]
        %v2125 = vld [vmem:[#allocation12 + $0x18] sm:$0xff]
        %v2126 = vld [vmem:[#allocation12 + $0x20] sm:$0xff]
        %v2127 = vld [vmem:[#allocation12 + $0x28] sm:$0xff]
        %v2128 = vld [vmem:[#allocation12 + $0x30] sm:$0xff]
        %v2129 = vld [vmem:[#allocation12 + $0x38] sm:$0xff]
        %v2130 = vld [vmem:[#allocation12 + $0x40] sm:$0xff]
        %v2131 = vld [vmem:[#allocation12 + $0x48] sm:$0xff]
        %v2132 = vld [vmem:[#allocation12 + $0x50] sm:$0xff]
        %v2133 = vld [vmem:[#allocation12 + $0x58] sm:$0xff]
        %v2134 = vld [vmem:[#allocation12 + $0x60] sm:$0xff]
        %v2136 = vsel %vm2115, %v2121, 0
        %2138 = vmatprep.subr.mxu0 0.0
        %2139 = vmatpush1.msra.mxu0 0.0
        %2140 = vmatprep.subr.mxu0 0.0
        %2141 = vmatpush1.msra.mxu0 0.0
        %2142 = vmatprep.subr.mxu0 0.0
        %2143 = vmatpush1.msra.mxu0 0.0
        %2144 = vmatprep.subr.mxu0 0.0
        %2145 = vmatpush1.msra.mxu0 %v2134
        %2146 = vmatprep.subr.mxu0 0.0
        %2147 = vmatpush1.msra.mxu0 %v2133
        %2148 = vmatprep.subr.mxu0 0.0
        %2149 = vmatpush1.msra.mxu0 %v2132
        %2150 = vmatprep.subr.mxu0 0.0
        %2151 = vmatpush1.msra.mxu0 %v2131
        %2152 = vmatprep.subr.mxu0 0.0
        %2153 = vmatpush1.msra.mxu0 %v2130
        %2154 = vmatprep.subr.mxu0 0.0
        %2155 = vmatpush1.msra.mxu0 %v2129
        %2156 = vmatprep.subr.mxu0 0.0
        %2157 = vmatpush1.msra.mxu0 %v2128
        %2158 = vmatprep.subr.mxu0 0.0
        %2159 = vmatpush1.msra.mxu0 %v2127
        %2160 = vmatprep.subr.mxu0 0.0
        %2161 = vmatpush1.msra.mxu0 %v2126
        %2162 = vmatprep.subr.mxu0 0.0
        %2163 = vmatpush1.msra.mxu0 %v2125
        %2164 = vmatprep.subr.mxu0 0.0
        %2165 = vmatpush1.msra.mxu0 %v2124
        %2166 = vmatprep.subr.mxu0 0.0
        %2167 = vmatpush1.msra.mxu0 %v2123
        %2168 = vmatprep.subr.mxu0 0.0
        %2169 = vmatpush1.msra.mxu0 %v2122
        %2170 = vmatprep.subr.mxu0 0.0
        %2171 = vmatpush2.msra.mxu0 0.0
        %2172 = vmatprep.subr.mxu0 0.0
        %2173 = vmatpush2.msra.mxu0 0.0
        %2174 = vmatprep.subr.mxu0 0.0
        %2175 = vmatpush2.msra.mxu0 0.0
        %2176 = vmatprep.subr.mxu0 0.0
        %2177 = vmatpush2.msra.mxu0 0.0
        %2178 = vmatprep.subr.mxu0 0.0
        %2179 = vmatpush2.msra.mxu0 0.0
        %2180 = vmatprep.subr.mxu0 0.0
        %2181 = vmatpush2.msra.mxu0 0.0
        %2182 = vmatprep.subr.mxu0 0.0
        %2183 = vmatpush2.msra.mxu0 0.0
        %2184 = vmatprep.subr.mxu0 0.0
        %2185 = vmatpush2.msra.mxu0 0.0
        %2186 = vmatprep.subr.mxu0 0.0
        %2187 = vmatpush2.msra.mxu0 0.0
        %2188 = vmatprep.subr.mxu0 0.0
        %2189 = vmatpush2.msra.mxu0 0.0
        %2190 = vmatprep.subr.mxu0 0.0
        %2191 = vmatpush2.msra.mxu0 0.0
        %2192 = vmatprep.subr.mxu0 0.0
        %2193 = vmatpush2.msra.mxu0 0.0
        %2194 = vmatprep.subr.mxu0 0.0
        %2195 = vmatpush2.msra.mxu0 0.0
        %2196 = vmatprep.subr.mxu0 0.0
        %2197 = vmatpush2.msra.mxu0 0.0
        %2198 = vmatprep.subr.mxu0 0.0
        %2199 = vmatpush2.msra.mxu0 0.0
        %2200 = vmatprep.subr.mxu0 0.0
        %2201 = vmatpush2.msra.mxu0 0.0
        %2202 = vmatprep.mubr.f32.mxu0 0.0
        %2203 = vmatmul.mubr.f32.gmra.mxu0 %v2136
        %v2204 = vpop.f32.mrf.mxu0
        %v2205 = vadd.f32 0.0, %v2204
        %v2206 = vpop.f32.mrf.mxu0
        %2207 = vdwg.mxu0
        %v2208 = vrcp.pop %v2205
        %v2209 = vmul.f32 %v2121, %v2208
        %2210 = vst.msk [vmem:[#allocation3] sm:$0xff] %vm436, 0.0
        %2211 = vst.msk [vmem:[#allocation3 + $0x8] sm:$0xff] %vm436, 0.0
        %2212 = vst.msk [vmem:[#allocation3 + $0x10] sm:$0xff] %vm436, 0.0
        %2213 = vst.msk [vmem:[#allocation3 + $0x18] sm:$0xff] %vm436, 0.0
        %2214 = vst.msk [vmem:[#allocation3 + $0x20] sm:$0xff] %vm436, 0.0
        %2215 = vst.msk [vmem:[#allocation3 + $0x28] sm:$0xff] %vm436, 0.0
        %2216 = vst.msk [vmem:[#allocation3 + $0x30] sm:$0xff] %vm436, 0.0
        %2217 = vst.msk [vmem:[#allocation3 + $0x38] sm:$0xff] %vm436, 0.0
        %2218 = vst.msk [vmem:[#allocation3 + $0x40] sm:$0xff] %vm436, 0.0
        %2219 = vst.msk [vmem:[#allocation3 + $0x48] sm:$0xff] %vm436, 0.0
        %2220 = vst.msk [vmem:[#allocation3 + $0x50] sm:$0xff] %vm436, 0.0
        %2221 = vst.msk [vmem:[#allocation3 + $0x58] sm:$0xff] %vm436, 0.0
        %2222 = vst.msk [vmem:[#allocation3 + $0x60] sm:$0xff] %vm436, 0.0
        %2223 = vst.msk [vmem:[#allocation3] sm:$0xff] %vm693, %v681
        %2224 = vst.msk [vmem:[#allocation3 + $0x8] sm:$0xff] %vm853, %v681
        %2225 = vst.msk [vmem:[#allocation3 + $0x10] sm:$0xff] %vm937, %v681
        %2226 = vst.msk [vmem:[#allocation3 + $0x18] sm:$0xff] %vm1021, %v681
        %2227 = vst.msk [vmem:[#allocation3 + $0x20] sm:$0xff] %vm1105, %v681
        %vm2228 = vcmask 351552
        %2229 = vst.msk [vmem:[#allocation3 + $0x28] sm:$0xff] %vm2228, %v681
        %vm2230 = vcmask 376152
        %2231 = vst.msk [vmem:[#allocation3 + $0x30] sm:$0xff] %vm2230, %v681
        %vm2232 = vcmask 400752
        %2233 = vst.msk [vmem:[#allocation3 + $0x38] sm:$0xff] %vm2232, %v681
        %vm2234 = vcmask 425352
        %2235 = vst.msk [vmem:[#allocation3 + $0x40] sm:$0xff] %vm2234, %v681
        %vm2236 = vcmask 449952
        %2237 = vst.msk [vmem:[#allocation3 + $0x48] sm:$0xff] %vm2236, %v681
        %vm2238 = vcmask 474552
        %2239 = vst.msk [vmem:[#allocation3 + $0x50] sm:$0xff] %vm2238, %v681
        %vm2240 = vcmask 499152
        %2241 = vst.msk [vmem:[#allocation3 + $0x58] sm:$0xff] %vm2240, %v681
        %vm2242 = vcmask 523752
        %2243 = vst.msk [vmem:[#allocation3 + $0x60] sm:$0xff] %vm2242, %v681
        %v2244 = vld [vmem:[#allocation3] sm:$0xff]
        %v2245 = vld [vmem:[#allocation3 + $0x8] sm:$0xff]
        %v2246 = vld [vmem:[#allocation3 + $0x10] sm:$0xff]
        %v2247 = vld [vmem:[#allocation3 + $0x18] sm:$0xff]
        %v2248 = vld [vmem:[#allocation3 + $0x20] sm:$0xff]
        %v2249 = vld [vmem:[#allocation3 + $0x28] sm:$0xff]
        %v2250 = vld [vmem:[#allocation3 + $0x30] sm:$0xff]
        %v2251 = vld [vmem:[#allocation3 + $0x38] sm:$0xff]
        %v2252 = vld [vmem:[#allocation3 + $0x40] sm:$0xff]
        %v2253 = vld [vmem:[#allocation3 + $0x48] sm:$0xff]
        %v2254 = vld [vmem:[#allocation3 + $0x50] sm:$0xff]
        %v2255 = vld [vmem:[#allocation3 + $0x58] sm:$0xff]
        %v2256 = vld [vmem:[#allocation3 + $0x60] sm:$0xff]
        %v2258 = vsel %vm2115, %v2209, 0
        %2260 = vmatprep.subr.mxu0 0.0
        %2261 = vmatpush1.msra.mxu0 0.0
        %2262 = vmatprep.subr.mxu0 0.0
        %2263 = vmatpush1.msra.mxu0 0.0
        %2264 = vmatprep.subr.mxu0 0.0
        %2265 = vmatpush1.msra.mxu0 0.0
        %2266 = vmatprep.subr.mxu0 0.0
        %2267 = vmatpush1.msra.mxu0 %v2256
        %2268 = vmatprep.subr.mxu0 0.0
        %2269 = vmatpush1.msra.mxu0 %v2255
        %2270 = vmatprep.subr.mxu0 0.0
        %2271 = vmatpush1.msra.mxu0 %v2254
        %2272 = vmatprep.subr.mxu0 0.0
        %2273 = vmatpush1.msra.mxu0 %v2253
        %2274 = vmatprep.subr.mxu0 0.0
        %2275 = vmatpush1.msra.mxu0 %v2252
        %2276 = vmatprep.subr.mxu0 0.0
        %2277 = vmatpush1.msra.mxu0 %v2251
        %2278 = vmatprep.subr.mxu0 0.0
        %2279 = vmatpush1.msra.mxu0 %v2250
        %2280 = vmatprep.subr.mxu0 0.0
        %2281 = vmatpush1.msra.mxu0 %v2249
        %2282 = vmatprep.subr.mxu0 0.0
        %2283 = vmatpush1.msra.mxu0 %v2248
        %2284 = vmatprep.subr.mxu0 0.0
        %2285 = vmatpush1.msra.mxu0 %v2247
        %2286 = vmatprep.subr.mxu0 0.0
        %2287 = vmatpush1.msra.mxu0 %v2246
        %2288 = vmatprep.subr.mxu0 0.0
        %2289 = vmatpush1.msra.mxu0 %v2245
        %2290 = vmatprep.subr.mxu0 0.0
        %2291 = vmatpush1.msra.mxu0 %v2244
        %2292 = vmatprep.subr.mxu0 0.0
        %2293 = vmatpush2.msra.mxu0 0.0
        %2294 = vmatprep.subr.mxu0 0.0
        %2295 = vmatpush2.msra.mxu0 0.0
        %2296 = vmatprep.subr.mxu0 0.0
        %2297 = vmatpush2.msra.mxu0 0.0
        %2298 = vmatprep.subr.mxu0 0.0
        %2299 = vmatpush2.msra.mxu0 0.0
        %2300 = vmatprep.subr.mxu0 0.0
        %2301 = vmatpush2.msra.mxu0 0.0
        %2302 = vmatprep.subr.mxu0 0.0
        %2303 = vmatpush2.msra.mxu0 0.0
        %2304 = vmatprep.subr.mxu0 0.0
        %2305 = vmatpush2.msra.mxu0 0.0
        %2306 = vmatprep.subr.mxu0 0.0
        %2307 = vmatpush2.msra.mxu0 0.0
        %2308 = vmatprep.subr.mxu0 0.0
        %2309 = vmatpush2.msra.mxu0 0.0
        %2310 = vmatprep.subr.mxu0 0.0
        %2311 = vmatpush2.msra.mxu0 0.0
        %2312 = vmatprep.subr.mxu0 0.0
        %2313 = vmatpush2.msra.mxu0 0.0
        %2314 = vmatprep.subr.mxu0 0.0
        %2315 = vmatpush2.msra.mxu0 0.0
        %2316 = vmatprep.subr.mxu0 0.0
        %2317 = vmatpush2.msra.mxu0 0.0
        %2318 = vmatprep.subr.mxu0 0.0
        %2319 = vmatpush2.msra.mxu0 0.0
        %2320 = vmatprep.subr.mxu0 0.0
        %2321 = vmatpush2.msra.mxu0 0.0
        %2322 = vmatprep.subr.mxu0 0.0
        %2323 = vmatpush2.msra.mxu0 0.0
        %2324 = vmatprep.mubr.f32.mxu0 0.0
        %2325 = vmatmul.mubr.f32.gmra.mxu0 %v2258
        %v2326 = vpop.f32.mrf.mxu0
        %v2327 = vadd.f32 0.0, %v2326
        %v2328 = vpop.f32.mrf.mxu0
        %2329 = vdwg.mxu0
        %v2330 = vld [vmem:[#allocation9] sm:$0xff]
        %v2331 = vld [vmem:[#allocation9 + $0x8] sm:$0xff]
        %v2332 = vld [vmem:[#allocation9 + $0x10] sm:$0xff]
        %v2333 = vld [vmem:[#allocation9 + $0x18] sm:$0xff]
        %v2334 = vld [vmem:[#allocation9 + $0x20] sm:$0xff]
        %v2335 = vld [vmem:[#allocation9 + $0x28] sm:$0xff]
        %v2336 = vld [vmem:[#allocation9 + $0x30] sm:$0xff]
        %v2337 = vld [vmem:[#allocation9 + $0x38] sm:$0xff]
        %v2338 = vld [vmem:[%s6] sm:$0x1]
        %v2340 = vlaneseq
        %v2341 = vshrl.u32 %v2340, 7
        %v2342 = vsub.s32 0, %v2341
        %v2343 = vrot.slane %v2338, %v2342
        %v2346 = vsel %vm436, %v2327, 0
        %2348 = vmatprep.subr.mxu0 0.0
        %2349 = vmatpush1.msra.mxu0 0.0
        %2350 = vmatprep.subr.mxu0 0.0
        %2351 = vmatpush1.msra.mxu0 0.0
        %2352 = vmatprep.subr.mxu0 0.0
        %2353 = vmatpush1.msra.mxu0 0.0
        %2354 = vmatprep.subr.mxu0 0.0
        %2355 = vmatpush1.msra.mxu0 0.0
        %2356 = vmatprep.subr.mxu0 0.0
        %2357 = vmatpush1.msra.mxu0 0.0
        %2358 = vmatprep.subr.mxu0 0.0
        %2359 = vmatpush1.msra.mxu0 0.0
        %2360 = vmatprep.subr.mxu0 0.0
        %2361 = vmatpush1.msra.mxu0 0.0
        %2362 = vmatprep.subr.mxu0 0.0
        %2363 = vmatpush1.msra.mxu0 0.0
        %2364 = vmatprep.subr.mxu0 0.0
        %2365 = vmatpush1.msra.mxu0 %v2337
        %2366 = vmatprep.subr.mxu0 0.0
        %2367 = vmatpush1.msra.mxu0 %v2336
        %2368 = vmatprep.subr.mxu0 0.0
        %2369 = vmatpush1.msra.mxu0 %v2335
        %2370 = vmatprep.subr.mxu0 0.0
        %2371 = vmatpush1.msra.mxu0 %v2334
        %2372 = vmatprep.subr.mxu0 0.0
        %2373 = vmatpush1.msra.mxu0 %v2333
        %2374 = vmatprep.subr.mxu0 0.0
        %2375 = vmatpush1.msra.mxu0 %v2332
        %2376 = vmatprep.subr.mxu0 0.0
        %2377 = vmatpush1.msra.mxu0 %v2331
        %2378 = vmatprep.subr.mxu0 0.0
        %2379 = vmatpush1.msra.mxu0 %v2330
        %2380 = vmatprep.subr.mxu0 0.0
        %2381 = vmatpush2.msra.mxu0 0.0
        %2382 = vmatprep.subr.mxu0 0.0
        %2383 = vmatpush2.msra.mxu0 0.0
        %2384 = vmatprep.subr.mxu0 0.0
        %2385 = vmatpush2.msra.mxu0 0.0
        %2386 = vmatprep.subr.mxu0 0.0
        %2387 = vmatpush2.msra.mxu0 0.0
        %2388 = vmatprep.subr.mxu0 0.0
        %2389 = vmatpush2.msra.mxu0 0.0
        %2390 = vmatprep.subr.mxu0 0.0
        %2391 = vmatpush2.msra.mxu0 0.0
        %2392 = vmatprep.subr.mxu0 0.0
        %2393 = vmatpush2.msra.mxu0 0.0
        %2394 = vmatprep.subr.mxu0 0.0
        %2395 = vmatpush2.msra.mxu0 0.0
        %2396 = vmatprep.subr.mxu0 0.0
        %2397 = vmatpush2.msra.mxu0 0.0
        %2398 = vmatprep.subr.mxu0 0.0
        %2399 = vmatpush2.msra.mxu0 0.0
        %2400 = vmatprep.subr.mxu0 0.0
        %2401 = vmatpush2.msra.mxu0 0.0
        %2402 = vmatprep.subr.mxu0 0.0
        %2403 = vmatpush2.msra.mxu0 0.0
        %2404 = vmatprep.subr.mxu0 0.0
        %2405 = vmatpush2.msra.mxu0 0.0
        %2406 = vmatprep.subr.mxu0 0.0
        %2407 = vmatpush2.msra.mxu0 0.0
        %2408 = vmatprep.subr.mxu0 0.0
        %2409 = vmatpush2.msra.mxu0 0.0
        %2410 = vmatprep.subr.mxu0 0.0
        %2411 = vmatpush2.msra.mxu0 0.0
        %2412 = vmatprep.mubr.f32.mxu0 0.0
        %2413 = vmatmul.mubr.f32.gmra.mxu0 %v2346
        %v2414 = vpop.f32.mrf.mxu0
        %v2415 = vadd.f32 %v2343, %v2414
        %v2416 = vpop.f32.mrf.mxu0
        %2417 = vdwg.mxu0
        %2418 = vst.msk [vmem:[%s416] sm:$0xff] %vm436, %v2415
        %s2419 = sand.u32 %s235, 1
        %s2420 = scalar_lea.sflag [#allocation6], %s2419
        %s2421 = sand.u32 %s235, 1
        %s2422 = smul.addr %s2421, 8
        %s2423 = scalar_lea.vmem [#allocation13], %s2422
        // Predicated region
        $region77: #{mhsa_forward_pallas.1} parent=55 // pred_check
          %p2424 = pneg %p245
        $region78: #{mhsa_forward_pallas.1} parent=55 // pred_check_branch
          %2426 = sbr.rel (%p2424) target = $region80
        $region79: #{mhsa_forward_pallas.1} parent=55 // pred_region
          %s2428 = ssub.s32 128, 128
          %2429 = vsyncadd %s2420, %s2428
          %s2430 = smul.addr %s28, 128
          %s2431 = scalar_lea.hbm %s9, %s2430
          %s2433 = sshll.u32 %s2423, 4
          %s2434 = int_to_ptr.vmem [resolvable:$true] %s2433
          %2436 = dma.vmem_to_hbm [thread:$0]  %s2434, 128, %s2431, %s2420
        $region80: #{mhsa_forward_pallas.1} parent=55 // pred_fallthru
          _
      $region56: #{mhsa_forward_pallas.1} parent=5 // pred_fallthru
        _
      %p2437 = scmp.le.s32.totalorder 2, %s23
      // Predicated region
      $region81: #{mhsa_forward_pallas.1} parent=5 // pred_check
        %p2438 = pneg %p2437
      $region82: #{mhsa_forward_pallas.1} parent=5 // pred_check_branch
        %2440 = sbr.rel (%p2438) target = $region84
      $region83: #{mhsa_forward_pallas.1} parent=5 // pred_region
        %s2441 = ssub.s32 %s23, 2
        // Predicated region
        $region85: #{mhsa_forward_pallas.1} parent=83 // pred_check
          %p2442 = pneg %p251
        $region86: #{mhsa_forward_pallas.1} parent=83 // pred_check_branch
          %2444 = sbr.rel (%p2442) target = $region88
        $region87: #{mhsa_forward_pallas.1} parent=83 // pred_region
          %s2445 = sand.u32 %s236, 1
          %s2446 = scalar_lea.sflag [#allocation6], %s2445
          %s2447 = sand.u32 %s236, 1
          %s2448 = smul.addr %s2447, 8
          %s2449 = scalar_lea.vmem [#allocation13], %s2448
          %2450 = dma.done %s2446, 128
        $region88: #{mhsa_forward_pallas.1} parent=83 // pred_fallthru
          _
      $region84: #{mhsa_forward_pallas.1} parent=5 // pred_fallthru
        _
    $region6: #{mhsa_forward_pallas.1} parent=1 // loop_footer
      %s27 = sadd.s32 1, %s23
    $region7: #{mhsa_forward_pallas.1} parent=1 // loop_footer_branch
      %22 = sbr.rel target = $region3
    $region8: #{mhsa_forward_pallas.1} parent=1 // loop_exit
      _
    %2451 = vsyncpa [#allocation5], 1
    %s2452 = scalar_lea.sflag [#allocation5], 1
    %2453 = vsyncpa %s2452, 1
    %2454 = vsyncpa [#allocation8], 1
    %2455 = vsyncpa [#allocation11], 1
    %2456 = vsyncpa [#allocation6], 1
    %s2457 = scalar_lea.sflag [#allocation6], 1
    %2458 = vsyncpa %s2457, 1

</llo_original>
